<compile_context>
chip_gen: v7x
topology: tpu7x:2x2x1
jax: 0.10.0
libtpu: 0.0.40
codegen_flags: <defaults>
</compile_context>

<pallas_src>
import functools

import jax
import jax.numpy as jnp
from jax.experimental import pallas as pl
from jax.experimental.pallas import tpu as pltpu


def _round_up(x, m):
    return ((x + m - 1) // m) * m


def _sublane_multiple(dtype):
    return {4: 8, 2: 16, 1: 32}.get(jnp.dtype(dtype).itemsize, 8)


def _padded_block_bytes(shape, dtype):
    """VMEM bytes of one buffer of a block, including lane/sublane padding."""
    itemsize = jnp.dtype(dtype).itemsize
    sub = _sublane_multiple(dtype)
    if len(shape) == 0:
        return itemsize
    if len(shape) == 1:
        return _round_up(shape[0], 128) * itemsize
    lead = 1
    for d in shape[:-2]:
        lead *= int(d)
    return lead * _round_up(shape[-2], sub) * _round_up(shape[-1], 128) * itemsize


def mlora_kernel(x_ref, q_ref, wt_ref, b_ref, bat_ref,
                 gwt_ref, gb_ref, gg_ref, gbeta_ref, o_ref,
                 *, num_e, eps):
    x = x_ref[...]                                   # (TILE_N, D_in), native dtype -> MXU
    q = q_ref[...]                                   # (TILE_N, D_q)
    bias = b_ref[...].astype(jnp.float32)            # (1, D_out)

    # Base linear: x @ W.T + b (f32 accumulation on the MXU).
    acc = jnp.dot(x, wt_ref[...], preferred_element_type=jnp.float32) + bias

    # Per-expert gate + dense-folded LoRA expert; statically unrolled (num_e small).
    for e in range(num_e):
        # gate_e(query): Linear(D_q, D_out) -> LayerNorm -> Dropout(eval) -> Sigmoid
        g_lin = (jnp.dot(q, gwt_ref[e], preferred_element_type=jnp.float32)
                 + gb_ref[e].astype(jnp.float32))             # (TILE_N, D_out), f32
        mu = jnp.mean(g_lin, axis=-1, keepdims=True)
        cen = g_lin - mu
        var = jnp.mean(cen * cen, axis=-1, keepdims=True)     # two-pass variance (stable)
        g_ln = (cen * jax.lax.rsqrt(var + eps)
                * gg_ref[e].astype(jnp.float32)
                + gbeta_ref[e].astype(jnp.float32))
        gate2 = 2.0 * jax.nn.sigmoid(g_ln)                    # 2x folded into the gate

        # expert_e(x): x @ (B_e A_e * s).T + b   (BA folded dense on the host)
        expert = (jnp.dot(x, bat_ref[e], preferred_element_type=jnp.float32)
                  + bias)
        acc = acc + gate2 * expert

    o_ref[...] = acc.astype(o_ref.dtype)


def mlora_linear_forward(x, query, W, b, lora_A, lora_B,
                         gate_W, gate_b, ln_gamma, ln_beta,
                         *, lora_alpha, r, eps=1e-5, tile_n=512):
    N, D_in = x.shape
    D_out = W.shape[0]
    D_q = query.shape[1]
    num_e = lora_A.shape[0]
    scaling = float(lora_alpha) / float(r)

    # ---- one-time host-side weight prep: lane-major RHS layouts, LoRA folded dense.
    Wt = W.T                                                     # (D_in, D_out)
    # (B_e @ A_e * s).T = s * A_e.T @ B_e.T  ->  (D_in, D_out) per expert.
    # TODO(synk): for very large D_in*D_out keep the rank-r factorization instead.
    BAt = jnp.einsum('eri,eor->eio', lora_A, lora_B) * scaling   # (E, D_in, D_out)
    gate_Wt = jnp.transpose(gate_W, (0, 2, 1))                   # (E, D_q, D_out)
    b2 = b.reshape(1, D_out)
    gb2 = gate_b.reshape(num_e, 1, D_out)
    gg2 = ln_gamma.reshape(num_e, 1, D_out)
    gbeta2 = ln_beta.reshape(num_e, 1, D_out)

    # ---- device VMEM budget (v5e/v6e: 128 MiB, v7x: 64 MiB).
    try:
        vmem_cap = int(pltpu.get_tpu_info().vmem_capacity_bytes)
    except Exception:
        vmem_cap = 64 << 20                                      # conservative (v7x)
    vmem_budget = vmem_cap - (8 << 20)                           # pipeline headroom

    wdt = Wt.dtype
    weight_bytes = (_padded_block_bytes((D_in, D_out), wdt)
                    + _padded_block_bytes((1, D_out), wdt)
                    + _padded_block_bytes((num_e, D_in, D_out), BAt.dtype)
                    + _padded_block_bytes((num_e, D_q, D_out), gate_Wt.dtype)
                    + 3 * _padded_block_bytes((num_e, 1, D_out), wdt))

    def tile_bytes(t):
        return (_padded_block_bytes((t, D_in), x.dtype)
                + _padded_block_bytes((t, D_q), query.dtype)
                + _padded_block_bytes((t, D_out), x.dtype))

    # ---- token tiling: sublane-aligned, >= 2 tiles for v7x megacore, VMEM-fitting.
    sub = _sublane_multiple(x.dtype)
    tile_n = _round_up(min(tile_n, _round_up(N, sub)), sub)
    if N > sub and pl.cdiv(N, tile_n) < 2:
        tile_n = _round_up(pl.cdiv(N, 2), sub)                   # give both TCs work
    while tile_n > sub and 2 * (weight_bytes + tile_bytes(tile_n)) > vmem_budget:
        tile_n = _round_up(tile_n // 2, sub)

    N_pad = _round_up(N, tile_n)
    if N_pad != N:
        x = jnp.pad(x, ((0, N_pad - N), (0, 0)))
        query = jnp.pad(query, ((0, N_pad - N), (0, 0)))
    grid = (N_pad // tile_n,)

    est_bytes = 2 * (weight_bytes + tile_bytes(tile_n))
    vmem_limit = min(vmem_cap - (2 << 20),
                     max(32 << 20, est_bytes + (4 << 20)))

    in_specs = [
        pl.BlockSpec((tile_n, D_in), lambda i: (i, 0)),            # x tile
        pl.BlockSpec((tile_n, D_q), lambda i: (i, 0)),             # query tile
        pl.BlockSpec((D_in, D_out), lambda i: (0, 0)),             # W.T (resident)
        pl.BlockSpec((1, D_out), lambda i: (0, 0)),                # bias (resident)
        pl.BlockSpec((num_e, D_in, D_out), lambda i: (0, 0, 0)),   # folded LoRA (resident)
        pl.BlockSpec((num_e, D_q, D_out), lambda i: (0, 0, 0)),    # gate W.T (resident)
        pl.BlockSpec((num_e, 1, D_out), lambda i: (0, 0, 0)),      # gate bias
        pl.BlockSpec((num_e, 1, D_out), lambda i: (0, 0, 0)),      # LN gamma
        pl.BlockSpec((num_e, 1, D_out), lambda i: (0, 0, 0)),      # LN beta
    ]
    out_specs = pl.BlockSpec((tile_n, D_out), lambda i: (i, 0))

    kernel = functools.partial(mlora_kernel, num_e=num_e, eps=eps)

    out = pl.pallas_call(
        kernel,
        out_shape=jax.ShapeDtypeStruct((N_pad, D_out), x.dtype),
        grid=grid,
        in_specs=in_specs,
        out_specs=out_specs,
        compiler_params=pltpu.CompilerParams(
            dimension_semantics=("parallel",),
            vmem_limit_bytes=int(vmem_limit)),
    )(x, query, Wt, b2, BAt, gate_Wt, gb2, gg2, gbeta2)

    return out[:N]


def mlora_linear_reference(x, query, W, b, lora_A, lora_B,
                           gate_W, gate_b, ln_gamma, ln_beta,
                           *, lora_alpha, r, eps=1e-5):
    scaling = lora_alpha / r
    out = x @ W.T + b[None, :]
    for e in range(lora_A.shape[0]):
        g = query @ gate_W[e].T + gate_b[e][None, :]
        mu = jnp.mean(g, axis=-1, keepdims=True)
        var = jnp.mean((g - mu) ** 2, axis=-1, keepdims=True)
        g = (g - mu) / jnp.sqrt(var + eps) * ln_gamma[e][None, :] + ln_beta[e][None, :]
        gate = jax.nn.sigmoid(g)
        expert = x @ (lora_B[e] @ lora_A[e] * scaling).T + b[None, :]
        out = out + 2.0 * gate * expert
    return out


if __name__ == "__main__":
    # Small, module-consistent shapes (lane-friendly D_in/D_out; N not a tile multiple
    # to exercise padding and the 2-tile megacore split).
    N = 200          # tokens (batch * seq flattened)
    D_in = 128       # linear.in_features
    D_out = 256      # linear.out_features
    D_q = 768        # gate input dim is hard-coded to 768 in the module
    r = 4
    lora_alpha = 8
    num_E = 3

    key = jax.random.PRNGKey(0)
    ks = jax.random.split(key, 10)

    x = jax.random.normal(ks[0], (N, D_in), jnp.float32)
    query = jax.random.normal(ks[1], (N, D_q), jnp.float32)

    W = jax.random.normal(ks[2], (D_out, D_in), jnp.float32) * 0.05
    b = jax.random.normal(ks[3], (D_out,), jnp.float32) * 0.05
    lora_A = jax.random.normal(ks[4], (num_E, r, D_in), jnp.float32) * 0.05
    lora_B = jax.random.normal(ks[5], (num_E, D_out, r), jnp.float32) * 0.05
    gate_W = jax.random.normal(ks[6], (num_E, D_out, D_q), jnp.float32) * 0.02
    gate_b = jax.random.normal(ks[7], (num_E, D_out), jnp.float32) * 0.02
    ln_gamma = jnp.ones((num_E, D_out), jnp.float32) + \
        jax.random.normal(ks[8], (num_E, D_out), jnp.float32) * 0.01
    ln_beta = jax.random.normal(ks[9], (num_E, D_out), jnp.float32) * 0.01

    out = mlora_linear_forward(x, query, W, b, lora_A, lora_B,
                               gate_W, gate_b, ln_gamma, ln_beta,
                               lora_alpha=lora_alpha, r=r)
    out = jax.block_until_ready(out)

    ref = mlora_linear_reference(x, query, W, b, lora_A, lora_B,
                                 gate_W, gate_b, ln_gamma, ln_beta,
                                 lora_alpha=lora_alpha, r=r)
    assert out.shape == (N, D_out)
    max_err = float(jnp.max(jnp.abs(out - ref)))
    assert max_err < 2e-3, max_err

    print("KERNEL_OK")
</pallas_src>

<mosaic_0001>
module attributes {stable_mosaic.version = 11 : i64} {
  func.func @mlora_kernel(%arg0: i32, %arg1: memref<104x128xf32, #tpu.memory_space<vmem>>, %arg2: memref<104x768xf32, #tpu.memory_space<vmem>>, %arg3: memref<128x256xf32, #tpu.memory_space<vmem>>, %arg4: memref<1x256xf32, #tpu.memory_space<vmem>>, %arg5: memref<3x128x256xf32, #tpu.memory_space<vmem>>, %arg6: memref<3x768x256xf32, #tpu.memory_space<vmem>>, %arg7: memref<3x1x256xf32, #tpu.memory_space<vmem>>, %arg8: memref<3x1x256xf32, #tpu.memory_space<vmem>>, %arg9: memref<3x1x256xf32, #tpu.memory_space<vmem>>, %arg10: memref<104x256xf32, #tpu.memory_space<vmem>>) attributes {dimension_semantics = [#tpu.dimension_semantics<parallel>], iteration_bounds = array<i64: 2>, scalar_prefetch = 0 : i64, scratch_operands = 0 : i64, tpu.core_type = #tpu.core_type<tc>, window_params = [{transform_indices = @transform_0, window_bounds = array<i64: 104, 128>}, {transform_indices = @transform_1, window_bounds = array<i64: 104, 768>}, {pipeline_mode = #tpu.pipeline_mode<synchronous>, transform_indices = @transform_2, window_bounds = array<i64: 128, 256>}, {pipeline_mode = #tpu.pipeline_mode<synchronous>, transform_indices = @transform_3, window_bounds = array<i64: 1, 256>}, {pipeline_mode = #tpu.pipeline_mode<synchronous>, transform_indices = @transform_4, window_bounds = array<i64: 3, 128, 256>}, {pipeline_mode = #tpu.pipeline_mode<synchronous>, transform_indices = @transform_5, window_bounds = array<i64: 3, 768, 256>}, {pipeline_mode = #tpu.pipeline_mode<synchronous>, transform_indices = @transform_6, window_bounds = array<i64: 3, 1, 256>}, {pipeline_mode = #tpu.pipeline_mode<synchronous>, transform_indices = @transform_7, window_bounds = array<i64: 3, 1, 256>}, {pipeline_mode = #tpu.pipeline_mode<synchronous>, transform_indices = @transform_8, window_bounds = array<i64: 3, 1, 256>}, {transform_indices = @transform_9, window_bounds = array<i64: 104, 256>}]} {
    %c0 = arith.constant 0 : index
    %c0_0 = arith.constant 0 : index
    %0 = vector.load %arg1[%c0, %c0_0] : memref<104x128xf32, #tpu.memory_space<vmem>>, vector<104x128xf32>
    %c0_1 = arith.constant 0 : index
    %c0_2 = arith.constant 0 : index
    %1 = vector.load %arg2[%c0_1, %c0_2] : memref<104x768xf32, #tpu.memory_space<vmem>>, vector<104x768xf32>
    %c0_3 = arith.constant 0 : index
    %c0_4 = arith.constant 0 : index
    %2 = vector.load %arg4[%c0_3, %c0_4] : memref<1x256xf32, #tpu.memory_space<vmem>>, vector<1x256xf32>
    %c0_5 = arith.constant 0 : index
    %c0_6 = arith.constant 0 : index
    %3 = vector.load %arg3[%c0_5, %c0_6] : memref<128x256xf32, #tpu.memory_space<vmem>>, vector<128x256xf32>
    %cst = arith.constant dense<0.000000e+00> : vector<104x256xf32>
    %4 = tpu.matmul %0, %3, %cst {dimension_numbers = #tpu.dot_dimension_numbers<[1], [0], [0], [1], [0, 0, 1, 1], [], []>} : vector<104x128xf32>, vector<128x256xf32>, vector<104x256xf32> -> vector<104x256xf32>
    %5 = vector.broadcast %2 : vector<1x256xf32> to vector<104x256xf32>
    %6 = arith.addf %4, %5 : vector<104x256xf32>
    %c0_7 = arith.constant 0 : index
    %c0_8 = arith.constant 0 : index
    %c0_9 = arith.constant 0 : index
    %7 = vector.load %arg6[%c0_7, %c0_8, %c0_9] : memref<3x768x256xf32, #tpu.memory_space<vmem>>, vector<1x768x256xf32>
    %8 = vector.shape_cast %7 : vector<1x768x256xf32> to vector<768x256xf32>
    %cst_10 = arith.constant dense<0.000000e+00> : vector<104x256xf32>
    %9 = tpu.matmul %1, %8, %cst_10 {dimension_numbers = #tpu.dot_dimension_numbers<[1], [0], [0], [1], [0, 0, 1, 1], [], []>} : vector<104x768xf32>, vector<768x256xf32>, vector<104x256xf32> -> vector<104x256xf32>
    %c0_11 = arith.constant 0 : index
    %c0_12 = arith.constant 0 : index
    %c0_13 = arith.constant 0 : index
    %10 = vector.load %arg7[%c0_11, %c0_12, %c0_13] : memref<3x1x256xf32, #tpu.memory_space<vmem>>, vector<1x1x256xf32>
    %11 = vector.shape_cast %10 : vector<1x1x256xf32> to vector<1x256xf32>
    %12 = vector.broadcast %11 : vector<1x256xf32> to vector<104x256xf32>
    %13 = arith.addf %9, %12 : vector<104x256xf32>
    %cst_14 = arith.constant dense<0.000000e+00> : vector<104xf32>
    %14 = vector.multi_reduction <add>, %13, %cst_14 [1] : vector<104x256xf32> to vector<104xf32>
    %15 = vector.shape_cast %14 : vector<104xf32> to vector<104x1xf32>
    %cst_15 = arith.constant 2.560000e+02 : f32
    %16 = vector.broadcast %cst_15 : f32 to vector<104x1xf32>
    %17 = arith.divf %15, %16 : vector<104x1xf32>
    %18 = vector.broadcast %17 : vector<104x1xf32> to vector<104x256xf32>
    %19 = arith.subf %13, %18 : vector<104x256xf32>
    %20 = arith.mulf %19, %19 : vector<104x256xf32>
    %cst_16 = arith.constant dense<0.000000e+00> : vector<104xf32>
    %21 = vector.multi_reduction <add>, %20, %cst_16 [1] : vector<104x256xf32> to vector<104xf32>
    %22 = vector.shape_cast %21 : vector<104xf32> to vector<104x1xf32>
    %cst_17 = arith.constant 2.560000e+02 : f32
    %23 = vector.broadcast %cst_17 : f32 to vector<104x1xf32>
    %24 = arith.divf %22, %23 : vector<104x1xf32>
    %cst_18 = arith.constant 9.99999974E-6 : f32
    %25 = vector.broadcast %cst_18 : f32 to vector<104x1xf32>
    %26 = arith.addf %24, %25 : vector<104x1xf32>
    %27 = math.rsqrt %26 : vector<104x1xf32>
    %28 = vector.broadcast %27 : vector<104x1xf32> to vector<104x256xf32>
    %29 = arith.mulf %19, %28 : vector<104x256xf32>
    %c0_19 = arith.constant 0 : index
    %c0_20 = arith.constant 0 : index
    %c0_21 = arith.constant 0 : index
    %30 = vector.load %arg8[%c0_19, %c0_20, %c0_21] : memref<3x1x256xf32, #tpu.memory_space<vmem>>, vector<1x1x256xf32>
    %31 = vector.shape_cast %30 : vector<1x1x256xf32> to vector<1x256xf32>
    %32 = vector.broadcast %31 : vector<1x256xf32> to vector<104x256xf32>
    %33 = arith.mulf %29, %32 : vector<104x256xf32>
    %c0_22 = arith.constant 0 : index
    %c0_23 = arith.constant 0 : index
    %c0_24 = arith.constant 0 : index
    %34 = vector.load %arg9[%c0_22, %c0_23, %c0_24] : memref<3x1x256xf32, #tpu.memory_space<vmem>>, vector<1x1x256xf32>
    %35 = vector.shape_cast %34 : vector<1x1x256xf32> to vector<1x256xf32>
    %36 = vector.broadcast %35 : vector<1x256xf32> to vector<104x256xf32>
    %37 = arith.addf %33, %36 : vector<104x256xf32>
    %38 = arith.negf %37 : vector<104x256xf32>
    %39 = math.exp %38 : vector<104x256xf32>
    %cst_25 = arith.constant 1.000000e+00 : f32
    %40 = vector.broadcast %cst_25 : f32 to vector<104x256xf32>
    %41 = arith.addf %40, %39 : vector<104x256xf32>
    %42 = arith.divf %40, %41 : vector<104x256xf32>
    %cst_26 = arith.constant 2.000000e+00 : f32
    %43 = vector.broadcast %cst_26 : f32 to vector<104x256xf32>
    %44 = arith.mulf %43, %42 : vector<104x256xf32>
    %c0_27 = arith.constant 0 : index
    %c0_28 = arith.constant 0 : index
    %c0_29 = arith.constant 0 : index
    %45 = vector.load %arg5[%c0_27, %c0_28, %c0_29] : memref<3x128x256xf32, #tpu.memory_space<vmem>>, vector<1x128x256xf32>
    %46 = vector.shape_cast %45 : vector<1x128x256xf32> to vector<128x256xf32>
    %cst_30 = arith.constant dense<0.000000e+00> : vector<104x256xf32>
    %47 = tpu.matmul %0, %46, %cst_30 {dimension_numbers = #tpu.dot_dimension_numbers<[1], [0], [0], [1], [0, 0, 1, 1], [], []>} : vector<104x128xf32>, vector<128x256xf32>, vector<104x256xf32> -> vector<104x256xf32>
    %48 = vector.broadcast %2 : vector<1x256xf32> to vector<104x256xf32>
    %49 = arith.addf %47, %48 : vector<104x256xf32>
    %50 = arith.mulf %44, %49 : vector<104x256xf32>
    %51 = arith.addf %6, %50 : vector<104x256xf32>
    %c1 = arith.constant 1 : index
    %c0_31 = arith.constant 0 : index
    %c0_32 = arith.constant 0 : index
    %52 = vector.load %arg6[%c1, %c0_31, %c0_32] : memref<3x768x256xf32, #tpu.memory_space<vmem>>, vector<1x768x256xf32>
    %53 = vector.shape_cast %52 : vector<1x768x256xf32> to vector<768x256xf32>
    %cst_33 = arith.constant dense<0.000000e+00> : vector<104x256xf32>
    %54 = tpu.matmul %1, %53, %cst_33 {dimension_numbers = #tpu.dot_dimension_numbers<[1], [0], [0], [1], [0, 0, 1, 1], [], []>} : vector<104x768xf32>, vector<768x256xf32>, vector<104x256xf32> -> vector<104x256xf32>
    %c1_34 = arith.constant 1 : index
    %c0_35 = arith.constant 0 : index
    %c0_36 = arith.constant 0 : index
    %55 = vector.load %arg7[%c1_34, %c0_35, %c0_36] : memref<3x1x256xf32, #tpu.memory_space<vmem>>, vector<1x1x256xf32>
    %56 = vector.shape_cast %55 : vector<1x1x256xf32> to vector<1x256xf32>
    %57 = vector.broadcast %56 : vector<1x256xf32> to vector<104x256xf32>
    %58 = arith.addf %54, %57 : vector<104x256xf32>
    %cst_37 = arith.constant dense<0.000000e+00> : vector<104xf32>
    %59 = vector.multi_reduction <add>, %58, %cst_37 [1] : vector<104x256xf32> to vector<104xf32>
    %60 = vector.shape_cast %59 : vector<104xf32> to vector<104x1xf32>
    %cst_38 = arith.constant 2.560000e+02 : f32
    %61 = vector.broadcast %cst_38 : f32 to vector<104x1xf32>
    %62 = arith.divf %60, %61 : vector<104x1xf32>
    %63 = vector.broadcast %62 : vector<104x1xf32> to vector<104x256xf32>
    %64 = arith.subf %58, %63 : vector<104x256xf32>
    %65 = arith.mulf %64, %64 : vector<104x256xf32>
    %cst_39 = arith.constant dense<0.000000e+00> : vector<104xf32>
    %66 = vector.multi_reduction <add>, %65, %cst_39 [1] : vector<104x256xf32> to vector<104xf32>
    %67 = vector.shape_cast %66 : vector<104xf32> to vector<104x1xf32>
    %cst_40 = arith.constant 2.560000e+02 : f32
    %68 = vector.broadcast %cst_40 : f32 to vector<104x1xf32>
    %69 = arith.divf %67, %68 : vector<104x1xf32>
    %cst_41 = arith.constant 9.99999974E-6 : f32
    %70 = vector.broadcast %cst_41 : f32 to vector<104x1xf32>
    %71 = arith.addf %69, %70 : vector<104x1xf32>
    %72 = math.rsqrt %71 : vector<104x1xf32>
    %73 = vector.broadcast %72 : vector<104x1xf32> to vector<104x256xf32>
    %74 = arith.mulf %64, %73 : vector<104x256xf32>
    %c1_42 = arith.constant 1 : index
    %c0_43 = arith.constant 0 : index
    %c0_44 = arith.constant 0 : index
    %75 = vector.load %arg8[%c1_42, %c0_43, %c0_44] : memref<3x1x256xf32, #tpu.memory_space<vmem>>, vector<1x1x256xf32>
    %76 = vector.shape_cast %75 : vector<1x1x256xf32> to vector<1x256xf32>
    %77 = vector.broadcast %76 : vector<1x256xf32> to vector<104x256xf32>
    %78 = arith.mulf %74, %77 : vector<104x256xf32>
    %c1_45 = arith.constant 1 : index
    %c0_46 = arith.constant 0 : index
    %c0_47 = arith.constant 0 : index
    %79 = vector.load %arg9[%c1_45, %c0_46, %c0_47] : memref<3x1x256xf32, #tpu.memory_space<vmem>>, vector<1x1x256xf32>
    %80 = vector.shape_cast %79 : vector<1x1x256xf32> to vector<1x256xf32>
    %81 = vector.broadcast %80 : vector<1x256xf32> to vector<104x256xf32>
    %82 = arith.addf %78, %81 : vector<104x256xf32>
    %83 = arith.negf %82 : vector<104x256xf32>
    %84 = math.exp %83 : vector<104x256xf32>
    %cst_48 = arith.constant 1.000000e+00 : f32
    %85 = vector.broadcast %cst_48 : f32 to vector<104x256xf32>
    %86 = arith.addf %85, %84 : vector<104x256xf32>
    %87 = arith.divf %85, %86 : vector<104x256xf32>
    %cst_49 = arith.constant 2.000000e+00 : f32
    %88 = vector.broadcast %cst_49 : f32 to vector<104x256xf32>
    %89 = arith.mulf %88, %87 : vector<104x256xf32>
    %c1_50 = arith.constant 1 : index
    %c0_51 = arith.constant 0 : index
    %c0_52 = arith.constant 0 : index
    %90 = vector.load %arg5[%c1_50, %c0_51, %c0_52] : memref<3x128x256xf32, #tpu.memory_space<vmem>>, vector<1x128x256xf32>
    %91 = vector.shape_cast %90 : vector<1x128x256xf32> to vector<128x256xf32>
    %cst_53 = arith.constant dense<0.000000e+00> : vector<104x256xf32>
    %92 = tpu.matmul %0, %91, %cst_53 {dimension_numbers = #tpu.dot_dimension_numbers<[1], [0], [0], [1], [0, 0, 1, 1], [], []>} : vector<104x128xf32>, vector<128x256xf32>, vector<104x256xf32> -> vector<104x256xf32>
    %93 = vector.broadcast %2 : vector<1x256xf32> to vector<104x256xf32>
    %94 = arith.addf %92, %93 : vector<104x256xf32>
    %95 = arith.mulf %89, %94 : vector<104x256xf32>
    %96 = arith.addf %51, %95 : vector<104x256xf32>
    %c2 = arith.constant 2 : index
    %c0_54 = arith.constant 0 : index
    %c0_55 = arith.constant 0 : index
    %97 = vector.load %arg6[%c2, %c0_54, %c0_55] : memref<3x768x256xf32, #tpu.memory_space<vmem>>, vector<1x768x256xf32>
    %98 = vector.shape_cast %97 : vector<1x768x256xf32> to vector<768x256xf32>
    %cst_56 = arith.constant dense<0.000000e+00> : vector<104x256xf32>
    %99 = tpu.matmul %1, %98, %cst_56 {dimension_numbers = #tpu.dot_dimension_numbers<[1], [0], [0], [1], [0, 0, 1, 1], [], []>} : vector<104x768xf32>, vector<768x256xf32>, vector<104x256xf32> -> vector<104x256xf32>
    %c2_57 = arith.constant 2 : index
    %c0_58 = arith.constant 0 : index
    %c0_59 = arith.constant 0 : index
    %100 = vector.load %arg7[%c2_57, %c0_58, %c0_59] : memref<3x1x256xf32, #tpu.memory_space<vmem>>, vector<1x1x256xf32>
    %101 = vector.shape_cast %100 : vector<1x1x256xf32> to vector<1x256xf32>
    %102 = vector.broadcast %101 : vector<1x256xf32> to vector<104x256xf32>
    %103 = arith.addf %99, %102 : vector<104x256xf32>
    %cst_60 = arith.constant dense<0.000000e+00> : vector<104xf32>
    %104 = vector.multi_reduction <add>, %103, %cst_60 [1] : vector<104x256xf32> to vector<104xf32>
    %105 = vector.shape_cast %104 : vector<104xf32> to vector<104x1xf32>
    %cst_61 = arith.constant 2.560000e+02 : f32
    %106 = vector.broadcast %cst_61 : f32 to vector<104x1xf32>
    %107 = arith.divf %105, %106 : vector<104x1xf32>
    %108 = vector.broadcast %107 : vector<104x1xf32> to vector<104x256xf32>
    %109 = arith.subf %103, %108 : vector<104x256xf32>
    %110 = arith.mulf %109, %109 : vector<104x256xf32>
    %cst_62 = arith.constant dense<0.000000e+00> : vector<104xf32>
    %111 = vector.multi_reduction <add>, %110, %cst_62 [1] : vector<104x256xf32> to vector<104xf32>
    %112 = vector.shape_cast %111 : vector<104xf32> to vector<104x1xf32>
    %cst_63 = arith.constant 2.560000e+02 : f32
    %113 = vector.broadcast %cst_63 : f32 to vector<104x1xf32>
    %114 = arith.divf %112, %113 : vector<104x1xf32>
    %cst_64 = arith.constant 9.99999974E-6 : f32
    %115 = vector.broadcast %cst_64 : f32 to vector<104x1xf32>
    %116 = arith.addf %114, %115 : vector<104x1xf32>
    %117 = math.rsqrt %116 : vector<104x1xf32>
    %118 = vector.broadcast %117 : vector<104x1xf32> to vector<104x256xf32>
    %119 = arith.mulf %109, %118 : vector<104x256xf32>
    %c2_65 = arith.constant 2 : index
    %c0_66 = arith.constant 0 : index
    %c0_67 = arith.constant 0 : index
    %120 = vector.load %arg8[%c2_65, %c0_66, %c0_67] : memref<3x1x256xf32, #tpu.memory_space<vmem>>, vector<1x1x256xf32>
    %121 = vector.shape_cast %120 : vector<1x1x256xf32> to vector<1x256xf32>
    %122 = vector.broadcast %121 : vector<1x256xf32> to vector<104x256xf32>
    %123 = arith.mulf %119, %122 : vector<104x256xf32>
    %c2_68 = arith.constant 2 : index
    %c0_69 = arith.constant 0 : index
    %c0_70 = arith.constant 0 : index
    %124 = vector.load %arg9[%c2_68, %c0_69, %c0_70] : memref<3x1x256xf32, #tpu.memory_space<vmem>>, vector<1x1x256xf32>
    %125 = vector.shape_cast %124 : vector<1x1x256xf32> to vector<1x256xf32>
    %126 = vector.broadcast %125 : vector<1x256xf32> to vector<104x256xf32>
    %127 = arith.addf %123, %126 : vector<104x256xf32>
    %128 = arith.negf %127 : vector<104x256xf32>
    %129 = math.exp %128 : vector<104x256xf32>
    %cst_71 = arith.constant 1.000000e+00 : f32
    %130 = vector.broadcast %cst_71 : f32 to vector<104x256xf32>
    %131 = arith.addf %130, %129 : vector<104x256xf32>
    %132 = arith.divf %130, %131 : vector<104x256xf32>
    %cst_72 = arith.constant 2.000000e+00 : f32
    %133 = vector.broadcast %cst_72 : f32 to vector<104x256xf32>
    %134 = arith.mulf %133, %132 : vector<104x256xf32>
    %c2_73 = arith.constant 2 : index
    %c0_74 = arith.constant 0 : index
    %c0_75 = arith.constant 0 : index
    %135 = vector.load %arg5[%c2_73, %c0_74, %c0_75] : memref<3x128x256xf32, #tpu.memory_space<vmem>>, vector<1x128x256xf32>
    %136 = vector.shape_cast %135 : vector<1x128x256xf32> to vector<128x256xf32>
    %cst_76 = arith.constant dense<0.000000e+00> : vector<104x256xf32>
    %137 = tpu.matmul %0, %136, %cst_76 {dimension_numbers = #tpu.dot_dimension_numbers<[1], [0], [0], [1], [0, 0, 1, 1], [], []>} : vector<104x128xf32>, vector<128x256xf32>, vector<104x256xf32> -> vector<104x256xf32>
    %138 = vector.broadcast %2 : vector<1x256xf32> to vector<104x256xf32>
    %139 = arith.addf %137, %138 : vector<104x256xf32>
    %140 = arith.mulf %134, %139 : vector<104x256xf32>
    %141 = arith.addf %96, %140 : vector<104x256xf32>
    %c0_77 = arith.constant 0 : index
    %c0_78 = arith.constant 0 : index
    %142 = vector.load %arg10[%c0_77, %c0_78] : memref<104x256xf32, #tpu.memory_space<vmem>>, vector<104x256xf32>
    tpu.vector_store %arg10[%c0_77, %c0_78], %141 {strides = array<i32>} : memref<104x256xf32, #tpu.memory_space<vmem>>, vector<104x256xf32>,
    return
  }
  func.func @transform_0(%arg0: i32) -> (i32, i32) {
    %c0_i32 = arith.constant 0 : i32
    %c0_i32_0 = arith.constant 0 : i32
    return %arg0, %c0_i32 : i32, i32
  }
  func.func @transform_1(%arg0: i32) -> (i32, i32) {
    %c0_i32 = arith.constant 0 : i32
    %c0_i32_0 = arith.constant 0 : i32
    return %arg0, %c0_i32 : i32, i32
  }
  func.func @transform_2(%arg0: i32) -> (i32, i32) {
    %c0_i32 = arith.constant 0 : i32
    %c0_i32_0 = arith.constant 0 : i32
    %c0_i32_1 = arith.constant 0 : i32
    return %c0_i32, %c0_i32_0 : i32, i32
  }
  func.func @transform_3(%arg0: i32) -> (i32, i32) {
    %c0_i32 = arith.constant 0 : i32
    %c0_i32_0 = arith.constant 0 : i32
    %c0_i32_1 = arith.constant 0 : i32
    return %c0_i32, %c0_i32_0 : i32, i32
  }
  func.func @transform_4(%arg0: i32) -> (i32, i32, i32) {
    %c0_i32 = arith.constant 0 : i32
    %c0_i32_0 = arith.constant 0 : i32
    %c0_i32_1 = arith.constant 0 : i32
    %c0_i32_2 = arith.constant 0 : i32
    return %c0_i32, %c0_i32_0, %c0_i32_1 : i32, i32, i32
  }
  func.func @transform_5(%arg0: i32) -> (i32, i32, i32) {
    %c0_i32 = arith.constant 0 : i32
    %c0_i32_0 = arith.constant 0 : i32
    %c0_i32_1 = arith.constant 0 : i32
    %c0_i32_2 = arith.constant 0 : i32
    return %c0_i32, %c0_i32_0, %c0_i32_1 : i32, i32, i32
  }
  func.func @transform_6(%arg0: i32) -> (i32, i32, i32) {
    %c0_i32 = arith.constant 0 : i32
    %c0_i32_0 = arith.constant 0 : i32
    %c0_i32_1 = arith.constant 0 : i32
    %c0_i32_2 = arith.constant 0 : i32
    return %c0_i32, %c0_i32_0, %c0_i32_1 : i32, i32, i32
  }
  func.func @transform_7(%arg0: i32) -> (i32, i32, i32) {
    %c0_i32 = arith.constant 0 : i32
    %c0_i32_0 = arith.constant 0 : i32
    %c0_i32_1 = arith.constant 0 : i32
    %c0_i32_2 = arith.constant 0 : i32
    return %c0_i32, %c0_i32_0, %c0_i32_1 : i32, i32, i32
  }
  func.func @transform_8(%arg0: i32) -> (i32, i32, i32) {
    %c0_i32 = arith.constant 0 : i32
    %c0_i32_0 = arith.constant 0 : i32
    %c0_i32_1 = arith.constant 0 : i32
    %c0_i32_2 = arith.constant 0 : i32
    return %c0_i32, %c0_i32_0, %c0_i32_1 : i32, i32, i32
  }
  func.func @transform_9(%arg0: i32) -> (i32, i32) {
    %c0_i32 = arith.constant 0 : i32
    %c0_i32_0 = arith.constant 0 : i32
    return %arg0, %c0_i32 : i32, i32
  }
}

</mosaic_0001>

<llo_original>
// kernel: tpu_custom_call.1
$region0: #{tpu_custom_call.1}
  #allocation0 [shape = 'u32[]', space=smem, size = 0x4, offset = 0x4, fixed_abs, tag = 'smem constant byte address 0x4 - core index']
  #allocation1 [shape = 'u32[144,128]{1,0:T(1,128)}', space=vmem, size = 0x12000, scoped, tag = 'internal scratch']
  %s0 = inlined_call_operand.hbm [shape: f32[208,128], index: 0, kind: input, shape index: {}]
  %s1 = inlined_call_operand.hbm [shape: f32[208,768], index: 1, kind: input, shape index: {}]
  %s2 = inlined_call_operand.hbm [shape: f32[128,256], index: 2, kind: input, shape index: {}]
  %s3 = inlined_call_operand.hbm [shape: f32[1,256], index: 3, kind: input, shape index: {}]
  %s4 = inlined_call_operand.hbm [shape: f32[3,128,256], index: 4, kind: input, shape index: {}]
  %s5 = inlined_call_operand.hbm [shape: f32[3,768,256], index: 5, kind: input, shape index: {}]
  %s6 = inlined_call_operand.hbm [shape: f32[3,1,256], index: 6, kind: input, shape index: {}]
  %s7 = inlined_call_operand.hbm [shape: f32[3,1,256], index: 7, kind: input, shape index: {}]
  %s8 = inlined_call_operand.hbm [shape: f32[3,1,256], index: 8, kind: input, shape index: {}]
  %s9 = inlined_call_operand.hbm [shape: f32[208,256], index: 9, kind: output, shape index: {}]
  %s10 = sld [smem:[#allocation0]]
  $region105: #{tpu_custom_call.1} parent=0
    _
  %s12 = ssub.s32 1, %s10
  %s13 = scalar_select 0, %s12, %s10
  $region1: #{tpu_custom_call.1} parent=0
    #allocation2 [shape = 'u8[106496]{0}', space=vmem, size = 0x1a000, scoped, tag = 'input window, operand 0']
    #allocation3 [shape = 's32[2]{0}', space=sflag, size = 0x8, scoped, tag = 'scoped memory for tpu_custom_call.1']
    #allocation4 [shape = 's32[2]{0}', space=sflag, size = 0x8, scoped, tag = 'scoped memory for tpu_custom_call.1']
    #allocation5 [shape = 'u8[638976]{0}', space=vmem, size = 0x9c000, scoped, tag = 'input window, operand 1']
    #allocation6 [shape = 's32[2]{0}', space=sflag, size = 0x8, scoped, tag = 'scoped memory for tpu_custom_call.1']
    #allocation7 [shape = 'u8[131072]{0}', space=vmem, size = 0x20000, scoped, tag = 'input window, operand 2, single buffered']
    #allocation8 [shape = 'u8[1024]{0}', space=vmem, size = 0x400, scoped, tag = 'input window, operand 3, single buffered']
    #allocation9 [shape = 's32[1]{0}', space=sflag, size = 0x4, scoped, tag = 'scoped memory for tpu_custom_call.1']
    #allocation10 [shape = 'u8[393216]{0}', space=vmem, size = 0x60000, scoped, tag = 'input window, operand 4, single buffered']
    #allocation11 [shape = 'u8[2359296]{0}', space=vmem, size = 0x240000, scoped, tag = 'input window, operand 5, single buffered']
    #allocation12 [shape = 's32[1]{0}', space=sflag, size = 0x4, scoped, tag = 'scoped memory for tpu_custom_call.1']
    #allocation13 [shape = 'u8[3072]{0}', space=vmem, size = 0xc00, scoped, tag = 'input window, operand 6, single buffered']
    #allocation14 [shape = 'u8[3072]{0}', space=vmem, size = 0xc00, scoped, tag = 'input window, operand 7, single buffered']
    #allocation15 [shape = 's32[1]{0}', space=sflag, size = 0x4, scoped, tag = 'scoped memory for tpu_custom_call.1']
    #allocation16 [shape = 'u8[3072]{0}', space=vmem, size = 0xc00, scoped, tag = 'input window, operand 8, single buffered']
    #allocation17 [shape = 'u8[212992]{0}', space=vmem, size = 0x34000, scoped, tag = 'output window, operand 0']
    %14 = vsyncpa [#allocation3], 0
    %s15 = scalar_lea.sflag [#allocation3], 1
    %16 = vsyncpa %s15, 0
    %17 = vsyncpa [#allocation6], 0
    %s18 = scalar_lea.sflag [#allocation6], 1
    %19 = vsyncpa %s18, 0
    %20 = vsyncpa [#allocation9], 0
    %21 = vsyncpa [#allocation12], 0
    %22 = vsyncpa [#allocation15], 0
    %23 = vsyncpa [#allocation4], 0
    %s24 = scalar_lea.sflag [#allocation4], 1
    %25 = vsyncpa %s24, 0
    loop: start=0, step=1, limit=4
    $region2: #{tpu_custom_call.1} parent=1 // loop_pre_header
      _
    $region3: #{tpu_custom_call.1} parent=1 // loop_header
      %s27 = sphi 0, %s31
      %p28 = scmp.ge.s32.totalorder %s27, 4
      %s37 = sphi 0, %s39
      %s40 = sphi 0, %s37
      %s41 = sphi 0, %s40
      %s57 = sphi 0, %s41
      %s63 = sphi 0, %s65
      %s66 = sphi 0, %s63
      %s67 = sphi 0, %s66
      %s83 = sphi 0, %s67
      %s87 = sphi 0, %s87
      %s89 = sphi 0, %s87
      %s90 = sphi 0, %s89
      %s104 = sphi 0, %s90
      %s108 = sphi 0, %s108
      %s110 = sphi 0, %s108
      %s111 = sphi 0, %s110
      %s125 = sphi 0, %s111
      %s129 = sphi 0, %s129
      %s131 = sphi 0, %s129
      %s132 = sphi 0, %s131
      %s146 = sphi 0, %s132
      %s150 = sphi 0, %s150
      %s152 = sphi 0, %s150
      %s153 = sphi 0, %s152
      %s167 = sphi 0, %s153
      %s171 = sphi 0, %s171
      %s173 = sphi 0, %s171
      %s174 = sphi 0, %s173
      %s188 = sphi 0, %s174
      %s192 = sphi 0, %s192
      %s194 = sphi 0, %s192
      %s195 = sphi 0, %s194
      %s209 = sphi 0, %s195
      %s213 = sphi 0, %s213
      %s215 = sphi 0, %s213
      %s216 = sphi 0, %s215
      %s230 = sphi 0, %s216
      %s236 = sphi 0, %s238
      %s239 = sphi 0, %s236
      %s240 = sphi 0, %s239
      %s256 = sphi 0, %s240
    $region4: #{tpu_custom_call.1} parent=1 // loop_header_branch
      %30 = sbr.rel (%p28) target = $region8
    $region5: #{tpu_custom_call.1} parent=1 // loop_body
      %s32 = ssub.s32 %s27, 1
      %s33 = ssub.s32 %s27, 2
      %s34 = sadd.s32 %s27, 1
      %s35 = ssub.s32 %s27, %s34
      %p36 = scmp.eq.s32.totalorder %s35, 0
      %s38 = sadd.s32 %s37, 1
      %s39 = scalar_select %p36, %s37, %s38
      %p42 = pneg %p36
      %p43 = scmp.eq.s32.totalorder %s27, 1
      %p44 = por %p42, %p43
      %p45 = scmp.ne.s32.totalorder %s37, %s40
      %p46 = scmp.eq.s32.totalorder %s27, 0
      %p47 = por %p45, %p46
      %p48 = scmp.ne.s32.totalorder %s37, %s40
      %p49 = scmp.eq.s32.totalorder %s32, 1
      %p50 = por %p48, %p49
      %p51 = scmp.ne.s32.totalorder %s40, %s41
      %p52 = scmp.eq.s32.totalorder %s32, 0
      %p53 = por %p51, %p52
      %p54 = scmp.ne.s32.totalorder %s40, %s41
      %p55 = scmp.eq.s32.totalorder %s33, 1
      %p56 = por %p54, %p55
      %p58 = scmp.ne.s32.totalorder %s41, %s57
      %p59 = scmp.eq.s32.totalorder %s33, 0
      %p60 = por %p58, %p59
      %s61 = ssub.s32 %s27, %s34
      %p62 = scmp.eq.s32.totalorder %s61, 0
      %s64 = sadd.s32 %s63, 1
      %s65 = scalar_select %p62, %s63, %s64
      %p68 = pneg %p62
      %p69 = scmp.eq.s32.totalorder %s27, 1
      %p70 = por %p68, %p69
      %p71 = scmp.ne.s32.totalorder %s63, %s66
      %p72 = scmp.eq.s32.totalorder %s27, 0
      %p73 = por %p71, %p72
      %p74 = scmp.ne.s32.totalorder %s63, %s66
      %p75 = scmp.eq.s32.totalorder %s32, 1
      %p76 = por %p74, %p75
      %p77 = scmp.ne.s32.totalorder %s66, %s67
      %p78 = scmp.eq.s32.totalorder %s32, 0
      %p79 = por %p77, %p78
      %p80 = scmp.ne.s32.totalorder %s66, %s67
      %p81 = scmp.eq.s32.totalorder %s33, 1
      %p82 = por %p80, %p81
      %p84 = scmp.ne.s32.totalorder %s67, %s83
      %p85 = scmp.eq.s32.totalorder %s33, 0
      %p86 = por %p84, %p85
      %s88 = sadd.s32 %s87, 1
      %p91 = scmp.eq.s32.totalorder %s27, 1
      %p92 = scmp.ne.s32.totalorder %s87, %s89
      %p93 = scmp.eq.s32.totalorder %s27, 0
      %p94 = por %p92, %p93
      %p95 = scmp.ne.s32.totalorder %s87, %s89
      %p96 = scmp.eq.s32.totalorder %s32, 1
      %p97 = por %p95, %p96
      %p98 = scmp.ne.s32.totalorder %s89, %s90
      %p99 = scmp.eq.s32.totalorder %s32, 0
      %p100 = por %p98, %p99
      %p101 = scmp.ne.s32.totalorder %s89, %s90
      %p102 = scmp.eq.s32.totalorder %s33, 1
      %p103 = por %p101, %p102
      %p105 = scmp.ne.s32.totalorder %s90, %s104
      %p106 = scmp.eq.s32.totalorder %s33, 0
      %p107 = por %p105, %p106
      %s109 = sadd.s32 %s108, 1
      %p112 = scmp.eq.s32.totalorder %s27, 1
      %p113 = scmp.ne.s32.totalorder %s108, %s110
      %p114 = scmp.eq.s32.totalorder %s27, 0
      %p115 = por %p113, %p114
      %p116 = scmp.ne.s32.totalorder %s108, %s110
      %p117 = scmp.eq.s32.totalorder %s32, 1
      %p118 = por %p116, %p117
      %p119 = scmp.ne.s32.totalorder %s110, %s111
      %p120 = scmp.eq.s32.totalorder %s32, 0
      %p121 = por %p119, %p120
      %p122 = scmp.ne.s32.totalorder %s110, %s111
      %p123 = scmp.eq.s32.totalorder %s33, 1
      %p124 = por %p122, %p123
      %p126 = scmp.ne.s32.totalorder %s111, %s125
      %p127 = scmp.eq.s32.totalorder %s33, 0
      %p128 = por %p126, %p127
      %s130 = sadd.s32 %s129, 1
      %p133 = scmp.eq.s32.totalorder %s27, 1
      %p134 = scmp.ne.s32.totalorder %s129, %s131
      %p135 = scmp.eq.s32.totalorder %s27, 0
      %p136 = por %p134, %p135
      %p137 = scmp.ne.s32.totalorder %s129, %s131
      %p138 = scmp.eq.s32.totalorder %s32, 1
      %p139 = por %p137, %p138
      %p140 = scmp.ne.s32.totalorder %s131, %s132
      %p141 = scmp.eq.s32.totalorder %s32, 0
      %p142 = por %p140, %p141
      %p143 = scmp.ne.s32.totalorder %s131, %s132
      %p144 = scmp.eq.s32.totalorder %s33, 1
      %p145 = por %p143, %p144
      %p147 = scmp.ne.s32.totalorder %s132, %s146
      %p148 = scmp.eq.s32.totalorder %s33, 0
      %p149 = por %p147, %p148
      %s151 = sadd.s32 %s150, 1
      %p154 = scmp.eq.s32.totalorder %s27, 1
      %p155 = scmp.ne.s32.totalorder %s150, %s152
      %p156 = scmp.eq.s32.totalorder %s27, 0
      %p157 = por %p155, %p156
      %p158 = scmp.ne.s32.totalorder %s150, %s152
      %p159 = scmp.eq.s32.totalorder %s32, 1
      %p160 = por %p158, %p159
      %p161 = scmp.ne.s32.totalorder %s152, %s153
      %p162 = scmp.eq.s32.totalorder %s32, 0
      %p163 = por %p161, %p162
      %p164 = scmp.ne.s32.totalorder %s152, %s153
      %p165 = scmp.eq.s32.totalorder %s33, 1
      %p166 = por %p164, %p165
      %p168 = scmp.ne.s32.totalorder %s153, %s167
      %p169 = scmp.eq.s32.totalorder %s33, 0
      %p170 = por %p168, %p169
      %s172 = sadd.s32 %s171, 1
      %p175 = scmp.eq.s32.totalorder %s27, 1
      %p176 = scmp.ne.s32.totalorder %s171, %s173
      %p177 = scmp.eq.s32.totalorder %s27, 0
      %p178 = por %p176, %p177
      %p179 = scmp.ne.s32.totalorder %s171, %s173
      %p180 = scmp.eq.s32.totalorder %s32, 1
      %p181 = por %p179, %p180
      %p182 = scmp.ne.s32.totalorder %s173, %s174
      %p183 = scmp.eq.s32.totalorder %s32, 0
      %p184 = por %p182, %p183
      %p185 = scmp.ne.s32.totalorder %s173, %s174
      %p186 = scmp.eq.s32.totalorder %s33, 1
      %p187 = por %p185, %p186
      %p189 = scmp.ne.s32.totalorder %s174, %s188
      %p190 = scmp.eq.s32.totalorder %s33, 0
      %p191 = por %p189, %p190
      %s193 = sadd.s32 %s192, 1
      %p196 = scmp.eq.s32.totalorder %s27, 1
      %p197 = scmp.ne.s32.totalorder %s192, %s194
      %p198 = scmp.eq.s32.totalorder %s27, 0
      %p199 = por %p197, %p198
      %p200 = scmp.ne.s32.totalorder %s192, %s194
      %p201 = scmp.eq.s32.totalorder %s32, 1
      %p202 = por %p200, %p201
      %p203 = scmp.ne.s32.totalorder %s194, %s195
      %p204 = scmp.eq.s32.totalorder %s32, 0
      %p205 = por %p203, %p204
      %p206 = scmp.ne.s32.totalorder %s194, %s195
      %p207 = scmp.eq.s32.totalorder %s33, 1
      %p208 = por %p206, %p207
      %p210 = scmp.ne.s32.totalorder %s195, %s209
      %p211 = scmp.eq.s32.totalorder %s33, 0
      %p212 = por %p210, %p211
      %s214 = sadd.s32 %s213, 1
      %p217 = scmp.eq.s32.totalorder %s27, 1
      %p218 = scmp.ne.s32.totalorder %s213, %s215
      %p219 = scmp.eq.s32.totalorder %s27, 0
      %p220 = por %p218, %p219
      %p221 = scmp.ne.s32.totalorder %s213, %s215
      %p222 = scmp.eq.s32.totalorder %s32, 1
      %p223 = por %p221, %p222
      %p224 = scmp.ne.s32.totalorder %s215, %s216
      %p225 = scmp.eq.s32.totalorder %s32, 0
      %p226 = por %p224, %p225
      %p227 = scmp.ne.s32.totalorder %s215, %s216
      %p228 = scmp.eq.s32.totalorder %s33, 1
      %p229 = por %p227, %p228
      %p231 = scmp.ne.s32.totalorder %s216, %s230
      %p232 = scmp.eq.s32.totalorder %s33, 0
      %p233 = por %p231, %p232
      %s234 = ssub.s32 %s27, %s34
      %p235 = scmp.eq.s32.totalorder %s234, 0
      %s237 = sadd.s32 %s236, 1
      %s238 = scalar_select %p235, %s236, %s237
      %p241 = pneg %p235
      %p242 = scmp.eq.s32.totalorder %s27, 1
      %p243 = por %p241, %p242
      %p244 = scmp.ne.s32.totalorder %s236, %s239
      %p245 = scmp.eq.s32.totalorder %s27, 0
      %p246 = por %p244, %p245
      %p247 = scmp.ne.s32.totalorder %s236, %s239
      %p248 = scmp.eq.s32.totalorder %s32, 1
      %p249 = por %p247, %p248
      %p250 = scmp.ne.s32.totalorder %s239, %s240
      %p251 = scmp.eq.s32.totalorder %s32, 0
      %p252 = por %p250, %p251
      %p253 = scmp.ne.s32.totalorder %s239, %s240
      %p254 = scmp.eq.s32.totalorder %s33, 1
      %p255 = por %p253, %p254
      %p257 = scmp.ne.s32.totalorder %s240, %s256
      %p258 = scmp.eq.s32.totalorder %s33, 0
      %p259 = por %p257, %p258
      %p260 = scmp.le.s32.totalorder 1, %s27
      %p261 = scmp.lt.s32.totalorder %s27, 3
      %p262 = pnand %p260, %p261
      %p263 = pneg %p262
      // Predicated region
      $region9: #{tpu_custom_call.1} parent=5 // pred_check
        _
      $region10: #{tpu_custom_call.1} parent=5 // pred_check_branch
        %265 = sbr.rel (%p262) target = $region12
      $region11: #{tpu_custom_call.1} parent=5 // pred_region
        %s266 = ssub.s32 %s27, 1
        // Predicated region
        $region13: #{tpu_custom_call.1} parent=11 // pred_check
          %p267 = pneg %p100
        $region14: #{tpu_custom_call.1} parent=11 // pred_check_branch
          %269 = sbr.rel (%p267) target = $region16
        $region15: #{tpu_custom_call.1} parent=11 // pred_region
          %s271 = ssub.s32 4096, 4096
          %272 = vsyncadd [#allocation6], %s271
          %s273 = sshll.u32 [#allocation7], 4
          %s274 = int_to_ptr.vmem [resolvable:$true] %s273
          %279 = dma.hbm_to_vmem [thread:$0]  %s2, 4096, %s274, [#allocation6], 256, 256, 16
        $region16: #{tpu_custom_call.1} parent=11 // pred_fallthru
          _
        // Predicated region
        $region17: #{tpu_custom_call.1} parent=11 // pred_check
          %p280 = pneg %p121
        $region18: #{tpu_custom_call.1} parent=11 // pred_check_branch
          %282 = sbr.rel (%p280) target = $region20
        $region19: #{tpu_custom_call.1} parent=11 // pred_region
          %s284 = ssub.s32 32, 32
          %285 = vsyncadd [#allocation9], %s284
          %s287 = sshll.u32 [#allocation8], 4
          %s288 = int_to_ptr.vmem [resolvable:$true] %s287
          %290 = dma.hbm_to_vmem [thread:$0]  %s3, 32, %s288, [#allocation9]
        $region20: #{tpu_custom_call.1} parent=11 // pred_fallthru
          _
        // Predicated region
        $region21: #{tpu_custom_call.1} parent=11 // pred_check
          %p291 = pneg %p142
        $region22: #{tpu_custom_call.1} parent=11 // pred_check_branch
          %293 = sbr.rel (%p291) target = $region24
        $region23: #{tpu_custom_call.1} parent=11 // pred_region
          %s295 = ssub.s32 12288, 12288
          %296 = vsyncadd [#allocation9], %s295
          %s297 = sshll.u32 [#allocation10], 4
          %s298 = int_to_ptr.vmem [resolvable:$true] %s297
          %303 = dma.hbm_to_vmem [thread:$0]  %s4, 12288, %s298, [#allocation9], 256, 256, 16
        $region24: #{tpu_custom_call.1} parent=11 // pred_fallthru
          _
        // Predicated region
        $region25: #{tpu_custom_call.1} parent=11 // pred_check
          %p304 = pneg %p163
        $region26: #{tpu_custom_call.1} parent=11 // pred_check_branch
          %306 = sbr.rel (%p304) target = $region28
        $region27: #{tpu_custom_call.1} parent=11 // pred_region
          %s308 = ssub.s32 73728, 73728
          %309 = vsyncadd [#allocation12], %s308
          %s310 = sshll.u32 [#allocation11], 4
          %s311 = int_to_ptr.vmem [resolvable:$true] %s310
          %316 = dma.hbm_to_vmem [thread:$0]  %s5, 73728, %s311, [#allocation12], 256, 256, 16
        $region28: #{tpu_custom_call.1} parent=11 // pred_fallthru
          _
        // Predicated region
        $region29: #{tpu_custom_call.1} parent=11 // pred_check
          %p317 = pneg %p184
        $region30: #{tpu_custom_call.1} parent=11 // pred_check_branch
          %319 = sbr.rel (%p317) target = $region32
        $region31: #{tpu_custom_call.1} parent=11 // pred_region
          %s321 = ssub.s32 96, 96
          %322 = vsyncadd [#allocation12], %s321
          %s323 = sshll.u32 [#allocation13], 4
          %s324 = int_to_ptr.vmem [resolvable:$true] %s323
          %329 = dma.hbm_to_vmem [thread:$0]  %s6, 96, %s324, [#allocation12], 32, 32, 2
        $region32: #{tpu_custom_call.1} parent=11 // pred_fallthru
          _
        // Predicated region
        $region33: #{tpu_custom_call.1} parent=11 // pred_check
          %p330 = pneg %p205
        $region34: #{tpu_custom_call.1} parent=11 // pred_check_branch
          %332 = sbr.rel (%p330) target = $region36
        $region35: #{tpu_custom_call.1} parent=11 // pred_region
          %s334 = ssub.s32 96, 96
          %335 = vsyncadd [#allocation15], %s334
          %s336 = sshll.u32 [#allocation14], 4
          %s337 = int_to_ptr.vmem [resolvable:$true] %s336
          %342 = dma.hbm_to_vmem [thread:$0]  %s7, 96, %s337, [#allocation15], 32, 32, 2
        $region36: #{tpu_custom_call.1} parent=11 // pred_fallthru
          _
        // Predicated region
        $region37: #{tpu_custom_call.1} parent=11 // pred_check
          %p343 = pneg %p226
        $region38: #{tpu_custom_call.1} parent=11 // pred_check_branch
          %345 = sbr.rel (%p343) target = $region40
        $region39: #{tpu_custom_call.1} parent=11 // pred_region
          %s347 = ssub.s32 96, 96
          %348 = vsyncadd [#allocation15], %s347
          %s349 = sshll.u32 [#allocation16], 4
          %s350 = int_to_ptr.vmem [resolvable:$true] %s349
          %355 = dma.hbm_to_vmem [thread:$0]  %s8, 96, %s350, [#allocation15], 32, 32, 2
        $region40: #{tpu_custom_call.1} parent=11 // pred_fallthru
          _
      $region12: #{tpu_custom_call.1} parent=5 // pred_fallthru
        _
      %p356 = scmp.lt.s32.totalorder %s27, 2
      // Predicated region
      $region41: #{tpu_custom_call.1} parent=5 // pred_check
        %p357 = pneg %p356
      $region42: #{tpu_custom_call.1} parent=5 // pred_check_branch
        %359 = sbr.rel (%p357) target = $region44
      $region43: #{tpu_custom_call.1} parent=5 // pred_region
        // Predicated region
        $region45: #{tpu_custom_call.1} parent=43 // pred_check
          %p360 = pneg %p47
        $region46: #{tpu_custom_call.1} parent=43 // pred_check_branch
          %362 = sbr.rel (%p360) target = $region48
        $region47: #{tpu_custom_call.1} parent=43 // pred_region
          %s363 = sand.u32 %s37, 1
          %s364 = scalar_lea.sflag [#allocation3], %s363
          %s365 = sand.u32 %s37, 1
          %s366 = smul.addr %s365, 104
          %s367 = scalar_lea.vmem [#allocation2], %s366
          %s368 = smul.u32 13, %s27
          %s370 = ssub.s32 1664, 1664
          %371 = vsyncadd %s364, %s370
          %s372 = smul.addr %s368, 128
          %s373 = scalar_lea.hbm %s0, %s372
          %s374 = sshll.u32 %s367, 4
          %s375 = int_to_ptr.vmem [resolvable:$true] %s374
          %380 = dma.hbm_to_vmem [thread:$0]  %s373, 1664, %s375, %s364, 128, 128, 8
        $region48: #{tpu_custom_call.1} parent=43 // pred_fallthru
          _
        // Predicated region
        $region49: #{tpu_custom_call.1} parent=43 // pred_check
          %p381 = pneg %p73
        $region50: #{tpu_custom_call.1} parent=43 // pred_check_branch
          %383 = sbr.rel (%p381) target = $region52
        $region51: #{tpu_custom_call.1} parent=43 // pred_region
          %s384 = sand.u32 %s27, 1
          %s385 = scalar_lea.sflag [#allocation6], %s384
          %s386 = sand.u32 %s63, 1
          %s387 = smul.addr %s386, 624
          %s388 = scalar_lea.vmem [#allocation5], %s387
          %s389 = smul.u32 13, %s27
          %s391 = ssub.s32 9984, 9984
          %392 = vsyncadd %s385, %s391
          %s393 = smul.addr %s389, 6
          %s394 = smul.addr %s393, 128
          %s395 = scalar_lea.hbm %s1, %s394
          %s396 = sshll.u32 %s388, 4
          %s397 = int_to_ptr.vmem [resolvable:$true] %s396
          %402 = dma.hbm_to_vmem [thread:$0]  %s395, 9984, %s397, %s385, 768, 768, 48
        $region52: #{tpu_custom_call.1} parent=43 // pred_fallthru
          _
      $region44: #{tpu_custom_call.1} parent=5 // pred_fallthru
        _
      %p403 = scmp.le.s32.totalorder 1, %s27
      %p404 = scmp.lt.s32.totalorder %s27, 3
      %p405 = pnand %p403, %p404
      %p406 = pneg %p405
      // Predicated region
      $region53: #{tpu_custom_call.1} parent=5 // pred_check
        _
      $region54: #{tpu_custom_call.1} parent=5 // pred_check_branch
        %408 = sbr.rel (%p405) target = $region56
      $region55: #{tpu_custom_call.1} parent=5 // pred_region
        %s409 = ssub.s32 %s27, 1
        %s410 = sand.u32 %s40, 1
        %s411 = scalar_lea.sflag [#allocation3], %s410
        %s412 = sand.u32 %s40, 1
        %s413 = smul.addr %s412, 104
        %s414 = scalar_lea.vmem [#allocation2], %s413
        // Predicated region
        $region57: #{tpu_custom_call.1} parent=55 // pred_check
          %p415 = pneg %p53
        $region58: #{tpu_custom_call.1} parent=55 // pred_check_branch
          %417 = sbr.rel (%p415) target = $region60
        $region59: #{tpu_custom_call.1} parent=55 // pred_region
          %418 = dma.done %s411, 1664
        $region60: #{tpu_custom_call.1} parent=55 // pred_fallthru
          _
        %s419 = sand.u32 %s32, 1
        %s420 = scalar_lea.sflag [#allocation6], %s419
        %s421 = sand.u32 %s66, 1
        %s422 = smul.addr %s421, 624
        %s423 = scalar_lea.vmem [#allocation5], %s422
        // Predicated region
        $region61: #{tpu_custom_call.1} parent=55 // pred_check
          %p424 = pneg %p79
        $region62: #{tpu_custom_call.1} parent=55 // pred_check_branch
          %426 = sbr.rel (%p424) target = $region64
        $region63: #{tpu_custom_call.1} parent=55 // pred_region
          %427 = dma.done %s420, 9984
        $region64: #{tpu_custom_call.1} parent=55 // pred_fallthru
          _
        // Predicated region
        $region65: #{tpu_custom_call.1} parent=55 // pred_check
          %p428 = pneg %p100
        $region66: #{tpu_custom_call.1} parent=55 // pred_check_branch
          %430 = sbr.rel (%p428) target = $region68
        $region67: #{tpu_custom_call.1} parent=55 // pred_region
          %431 = dma.done [#allocation6], 4096
        $region68: #{tpu_custom_call.1} parent=55 // pred_fallthru
          _
        // Predicated region
        $region69: #{tpu_custom_call.1} parent=55 // pred_check
          %p432 = pneg %p121
        $region70: #{tpu_custom_call.1} parent=55 // pred_check_branch
          %434 = sbr.rel (%p432) target = $region72
        $region71: #{tpu_custom_call.1} parent=55 // pred_region
          %435 = dma.done [#allocation9], 32
        $region72: #{tpu_custom_call.1} parent=55 // pred_fallthru
          _
        // Predicated region
        $region73: #{tpu_custom_call.1} parent=55 // pred_check
          %p436 = pneg %p142
        $region74: #{tpu_custom_call.1} parent=55 // pred_check_branch
          %438 = sbr.rel (%p436) target = $region76
        $region75: #{tpu_custom_call.1} parent=55 // pred_region
          %439 = dma.done [#allocation9], 12288
        $region76: #{tpu_custom_call.1} parent=55 // pred_fallthru
          _
        // Predicated region
        $region77: #{tpu_custom_call.1} parent=55 // pred_check
          %p440 = pneg %p163
        $region78: #{tpu_custom_call.1} parent=55 // pred_check_branch
          %442 = sbr.rel (%p440) target = $region80
        $region79: #{tpu_custom_call.1} parent=55 // pred_region
          %443 = dma.done [#allocation12], 73728
        $region80: #{tpu_custom_call.1} parent=55 // pred_fallthru
          _
        // Predicated region
        $region81: #{tpu_custom_call.1} parent=55 // pred_check
          %p444 = pneg %p184
        $region82: #{tpu_custom_call.1} parent=55 // pred_check_branch
          %446 = sbr.rel (%p444) target = $region84
        $region83: #{tpu_custom_call.1} parent=55 // pred_region
          %447 = dma.done [#allocation12], 96
        $region84: #{tpu_custom_call.1} parent=55 // pred_fallthru
          _
        // Predicated region
        $region85: #{tpu_custom_call.1} parent=55 // pred_check
          %p448 = pneg %p205
        $region86: #{tpu_custom_call.1} parent=55 // pred_check_branch
          %450 = sbr.rel (%p448) target = $region88
        $region87: #{tpu_custom_call.1} parent=55 // pred_region
          %451 = dma.done [#allocation15], 96
        $region88: #{tpu_custom_call.1} parent=55 // pred_fallthru
          _
        // Predicated region
        $region89: #{tpu_custom_call.1} parent=55 // pred_check
          %p452 = pneg %p226
        $region90: #{tpu_custom_call.1} parent=55 // pred_check_branch
          %454 = sbr.rel (%p452) target = $region92
        $region91: #{tpu_custom_call.1} parent=55 // pred_region
          %455 = dma.done [#allocation15], 96
        $region92: #{tpu_custom_call.1} parent=55 // pred_fallthru
          _
        %s456 = sand.u32 %s40, 1
        %s457 = scalar_lea.sflag [#allocation3], %s456
        %s458 = sand.u32 %s40, 1
        %s459 = smul.addr %s458, 104
        %s460 = scalar_lea.vmem [#allocation2], %s459
        %p461 = pneg %p53
        %p462 = pneg %p50
        %s463 = sand.u32 %s32, 1
        %s464 = scalar_lea.sflag [#allocation6], %s463
        %s465 = sand.u32 %s66, 1
        %s466 = smul.addr %s465, 624
        %s467 = scalar_lea.vmem [#allocation5], %s466
        %p468 = pneg %p79
        %p469 = pneg %p76
        %p470 = pneg %p100
        %p471 = pneg %p97
        %p472 = pneg %p121
        %p473 = pneg %p118
        %p474 = pneg %p142
        %p475 = pneg %p139
        %p476 = pneg %p163
        %p477 = pneg %p160
        %p478 = pneg %p184
        %p479 = pneg %p181
        %p480 = pneg %p205
        %p481 = pneg %p202
        %p482 = pneg %p226
        %p483 = pneg %p223
        %p484 = pneg %p252
        %p485 = pneg %p249
        %s486 = sand.u32 %s239, 1
        %s487 = scalar_lea.sflag [#allocation4], %s486
        %s488 = sand.u32 %s239, 1
        %s489 = smul.addr %s488, 208
        %s490 = scalar_lea.vmem [#allocation17], %s489
        %s491 = smul.u32 13, %s32
        %s492 = smul.u32 13, %s32
        %s493 = smul.u32 13, %s32
        %v494 = vld [vmem:[%s414] sm:$0xff]
        %v495 = vld [vmem:[%s414 + $0x8] sm:$0xff]
        %v496 = vld [vmem:[%s414 + $0x10] sm:$0xff]
        %v497 = vld [vmem:[%s414 + $0x18] sm:$0xff]
        %v498 = vld [vmem:[%s414 + $0x20] sm:$0xff]
        %v499 = vld [vmem:[%s414 + $0x28] sm:$0xff]
        %v500 = vld [vmem:[%s414 + $0x30] sm:$0xff]
        %v501 = vld [vmem:[%s414 + $0x38] sm:$0xff]
        %v502 = vld [vmem:[%s414 + $0x40] sm:$0xff]
        %v503 = vld [vmem:[%s414 + $0x48] sm:$0xff]
        %v504 = vld [vmem:[%s414 + $0x50] sm:$0xff]
        %v505 = vld [vmem:[%s414 + $0x58] sm:$0xff]
        %v506 = vld [vmem:[%s414 + $0x60] sm:$0xff]
        %v507 = vld [vmem:[%s423] sm:$0xff]
        %v508 = vld [vmem:[%s423 + $0x8] sm:$0xff]
        %v509 = vld [vmem:[%s423 + $0x10] sm:$0xff]
        %v510 = vld [vmem:[%s423 + $0x18] sm:$0xff]
        %v511 = vld [vmem:[%s423 + $0x20] sm:$0xff]
        %v512 = vld [vmem:[%s423 + $0x28] sm:$0xff]
        %v513 = vld [vmem:[%s423 + $0x30] sm:$0xff]
        %v514 = vld [vmem:[%s423 + $0x38] sm:$0xff]
        %v515 = vld [vmem:[%s423 + $0x40] sm:$0xff]
        %v516 = vld [vmem:[%s423 + $0x48] sm:$0xff]
        %v517 = vld [vmem:[%s423 + $0x50] sm:$0xff]
        %v518 = vld [vmem:[%s423 + $0x58] sm:$0xff]
        %v519 = vld [vmem:[%s423 + $0x60] sm:$0xff]
        %v520 = vld [vmem:[%s423 + $0x68] sm:$0xff]
        %v521 = vld [vmem:[%s423 + $0x70] sm:$0xff]
        %v522 = vld [vmem:[%s423 + $0x78] sm:$0xff]
        %v523 = vld [vmem:[%s423 + $0x80] sm:$0xff]
        %v524 = vld [vmem:[%s423 + $0x88] sm:$0xff]
        %v525 = vld [vmem:[%s423 + $0x90] sm:$0xff]
        %v526 = vld [vmem:[%s423 + $0x98] sm:$0xff]
        %v527 = vld [vmem:[%s423 + $0xa0] sm:$0xff]
        %v528 = vld [vmem:[%s423 + $0xa8] sm:$0xff]
        %v529 = vld [vmem:[%s423 + $0xb0] sm:$0xff]
        %v530 = vld [vmem:[%s423 + $0xb8] sm:$0xff]
        %v531 = vld [vmem:[%s423 + $0xc0] sm:$0xff]
        %v532 = vld [vmem:[%s423 + $0xc8] sm:$0xff]
        %v533 = vld [vmem:[%s423 + $0xd0] sm:$0xff]
        %v534 = vld [vmem:[%s423 + $0xd8] sm:$0xff]
        %v535 = vld [vmem:[%s423 + $0xe0] sm:$0xff]
        %v536 = vld [vmem:[%s423 + $0xe8] sm:$0xff]
        %v537 = vld [vmem:[%s423 + $0xf0] sm:$0xff]
        %v538 = vld [vmem:[%s423 + $0xf8] sm:$0xff]
        %v539 = vld [vmem:[%s423 + $0x100] sm:$0xff]
        %v540 = vld [vmem:[%s423 + $0x108] sm:$0xff]
        %v541 = vld [vmem:[%s423 + $0x110] sm:$0xff]
        %v542 = vld [vmem:[%s423 + $0x118] sm:$0xff]
        %v543 = vld [vmem:[%s423 + $0x120] sm:$0xff]
        %v544 = vld [vmem:[%s423 + $0x128] sm:$0xff]
        %v545 = vld [vmem:[%s423 + $0x130] sm:$0xff]
        %v546 = vld [vmem:[%s423 + $0x138] sm:$0xff]
        %v547 = vld [vmem:[%s423 + $0x140] sm:$0xff]
        %v548 = vld [vmem:[%s423 + $0x148] sm:$0xff]
        %v549 = vld [vmem:[%s423 + $0x150] sm:$0xff]
        %v550 = vld [vmem:[%s423 + $0x158] sm:$0xff]
        %v551 = vld [vmem:[%s423 + $0x160] sm:$0xff]
        %v552 = vld [vmem:[%s423 + $0x168] sm:$0xff]
        %v553 = vld [vmem:[%s423 + $0x170] sm:$0xff]
        %v554 = vld [vmem:[%s423 + $0x178] sm:$0xff]
        %v555 = vld [vmem:[%s423 + $0x180] sm:$0xff]
        %v556 = vld [vmem:[%s423 + $0x188] sm:$0xff]
        %v557 = vld [vmem:[%s423 + $0x190] sm:$0xff]
        %v558 = vld [vmem:[%s423 + $0x198] sm:$0xff]
        %v559 = vld [vmem:[%s423 + $0x1a0] sm:$0xff]
        %v560 = vld [vmem:[%s423 + $0x1a8] sm:$0xff]
        %v561 = vld [vmem:[%s423 + $0x1b0] sm:$0xff]
        %v562 = vld [vmem:[%s423 + $0x1b8] sm:$0xff]
        %v563 = vld [vmem:[%s423 + $0x1c0] sm:$0xff]
        %v564 = vld [vmem:[%s423 + $0x1c8] sm:$0xff]
        %v565 = vld [vmem:[%s423 + $0x1d0] sm:$0xff]
        %v566 = vld [vmem:[%s423 + $0x1d8] sm:$0xff]
        %v567 = vld [vmem:[%s423 + $0x1e0] sm:$0xff]
        %v568 = vld [vmem:[%s423 + $0x1e8] sm:$0xff]
        %v569 = vld [vmem:[%s423 + $0x1f0] sm:$0xff]
        %v570 = vld [vmem:[%s423 + $0x1f8] sm:$0xff]
        %v571 = vld [vmem:[%s423 + $0x200] sm:$0xff]
        %v572 = vld [vmem:[%s423 + $0x208] sm:$0xff]
        %v573 = vld [vmem:[%s423 + $0x210] sm:$0xff]
        %v574 = vld [vmem:[%s423 + $0x218] sm:$0xff]
        %v575 = vld [vmem:[%s423 + $0x220] sm:$0xff]
        %v576 = vld [vmem:[%s423 + $0x228] sm:$0xff]
        %v577 = vld [vmem:[%s423 + $0x230] sm:$0xff]
        %v578 = vld [vmem:[%s423 + $0x238] sm:$0xff]
        %v579 = vld [vmem:[%s423 + $0x240] sm:$0xff]
        %v580 = vld [vmem:[%s423 + $0x248] sm:$0xff]
        %v581 = vld [vmem:[%s423 + $0x250] sm:$0xff]
        %v582 = vld [vmem:[%s423 + $0x258] sm:$0xff]
        %v583 = vld [vmem:[%s423 + $0x260] sm:$0xff]
        %v584 = vld [vmem:[%s423 + $0x268] sm:$0xff]
        %v585 = vld [vmem:[#allocation8] sm:$0x3]
        %v586 = vld [vmem:[#allocation7] sm:$0xff]
        %v587 = vld [vmem:[#allocation7 + $0x8] sm:$0xff]
        %v588 = vld [vmem:[#allocation7 + $0x10] sm:$0xff]
        %v589 = vld [vmem:[#allocation7 + $0x18] sm:$0xff]
        %v590 = vld [vmem:[#allocation7 + $0x20] sm:$0xff]
        %v591 = vld [vmem:[#allocation7 + $0x28] sm:$0xff]
        %v592 = vld [vmem:[#allocation7 + $0x30] sm:$0xff]
        %v593 = vld [vmem:[#allocation7 + $0x38] sm:$0xff]
        %v594 = vld [vmem:[#allocation7 + $0x40] sm:$0xff]
        %v595 = vld [vmem:[#allocation7 + $0x48] sm:$0xff]
        %v596 = vld [vmem:[#allocation7 + $0x50] sm:$0xff]
        %v597 = vld [vmem:[#allocation7 + $0x58] sm:$0xff]
        %v598 = vld [vmem:[#allocation7 + $0x60] sm:$0xff]
        %v599 = vld [vmem:[#allocation7 + $0x68] sm:$0xff]
        %v600 = vld [vmem:[#allocation7 + $0x70] sm:$0xff]
        %v601 = vld [vmem:[#allocation7 + $0x78] sm:$0xff]
        %v602 = vld [vmem:[#allocation7 + $0x80] sm:$0xff]
        %v603 = vld [vmem:[#allocation7 + $0x88] sm:$0xff]
        %v604 = vld [vmem:[#allocation7 + $0x90] sm:$0xff]
        %v605 = vld [vmem:[#allocation7 + $0x98] sm:$0xff]
        %v606 = vld [vmem:[#allocation7 + $0xa0] sm:$0xff]
        %v607 = vld [vmem:[#allocation7 + $0xa8] sm:$0xff]
        %v608 = vld [vmem:[#allocation7 + $0xb0] sm:$0xff]
        %v609 = vld [vmem:[#allocation7 + $0xb8] sm:$0xff]
        %v610 = vld [vmem:[#allocation7 + $0xc0] sm:$0xff]
        %v611 = vld [vmem:[#allocation7 + $0xc8] sm:$0xff]
        %v612 = vld [vmem:[#allocation7 + $0xd0] sm:$0xff]
        %v613 = vld [vmem:[#allocation7 + $0xd8] sm:$0xff]
        %v614 = vld [vmem:[#allocation7 + $0xe0] sm:$0xff]
        %v615 = vld [vmem:[#allocation7 + $0xe8] sm:$0xff]
        %v616 = vld [vmem:[#allocation7 + $0xf0] sm:$0xff]
        %v617 = vld [vmem:[#allocation7 + $0xf8] sm:$0xff]
        %v619 = vlaneseq
        %v620 = vshrl.u32 %v619, 7
        %v621 = vsub.s32 0, %v620
        %v622 = vrot.slane %v585, %v621
        %v623 = vlaneseq
        %v624 = vshrl.u32 %v623, 7
        %v625 = vsub.s32 1, %v624
        %v626 = vrot.slane %v585, %v625
        %629 = vmatprep.subr.mxu0 %v587
        %630 = vmatpush1.msra.mxu0 %v586
        %631 = vmatprep.subr.mxu0 %v589
        %632 = vmatpush1.msra.mxu0 %v588
        %633 = vmatprep.subr.mxu0 %v591
        %634 = vmatpush1.msra.mxu0 %v590
        %635 = vmatprep.subr.mxu0 %v593
        %636 = vmatpush1.msra.mxu0 %v592
        %637 = vmatprep.subr.mxu0 %v595
        %638 = vmatpush1.msra.mxu0 %v594
        %639 = vmatprep.subr.mxu0 %v597
        %640 = vmatpush1.msra.mxu0 %v596
        %641 = vmatprep.subr.mxu0 %v599
        %642 = vmatpush1.msra.mxu0 %v598
        %643 = vmatprep.subr.mxu0 %v601
        %644 = vmatpush1.msra.mxu0 %v600
        %645 = vmatprep.subr.mxu0 %v603
        %646 = vmatpush1.msra.mxu0 %v602
        %647 = vmatprep.subr.mxu0 %v605
        %648 = vmatpush1.msra.mxu0 %v604
        %649 = vmatprep.subr.mxu0 %v607
        %650 = vmatpush1.msra.mxu0 %v606
        %651 = vmatprep.subr.mxu0 %v609
        %652 = vmatpush1.msra.mxu0 %v608
        %653 = vmatprep.subr.mxu0 %v611
        %654 = vmatpush1.msra.mxu0 %v610
        %655 = vmatprep.subr.mxu0 %v613
        %656 = vmatpush1.msra.mxu0 %v612
        %657 = vmatprep.subr.mxu0 %v615
        %658 = vmatpush1.msra.mxu0 %v614
        %659 = vmatprep.subr.mxu0 %v617
        %660 = vmatpush1.msra.mxu0 %v616
        %661 = vmatprep.subr.mxu0 0.0
        %662 = vmatpush1.msra.mxu0 0.0
        %663 = vmatprep.subr.mxu0 0.0
        %664 = vmatpush1.msra.mxu0 0.0
        %665 = vmatprep.subr.mxu0 0.0
        %666 = vmatpush1.msra.mxu0 0.0
        %667 = vmatprep.subr.mxu0 0.0
        %668 = vmatpush1.msra.mxu0 0.0
        %669 = vmatprep.subr.mxu0 0.0
        %670 = vmatpush1.msra.mxu0 0.0
        %671 = vmatprep.subr.mxu0 0.0
        %672 = vmatpush1.msra.mxu0 0.0
        %673 = vmatprep.subr.mxu0 0.0
        %674 = vmatpush1.msra.mxu0 0.0
        %675 = vmatprep.subr.mxu0 0.0
        %676 = vmatpush1.msra.mxu0 0.0
        %677 = vmatprep.subr.mxu0 0.0
        %678 = vmatpush1.msra.mxu0 0.0
        %679 = vmatprep.subr.mxu0 0.0
        %680 = vmatpush1.msra.mxu0 0.0
        %681 = vmatprep.subr.mxu0 0.0
        %682 = vmatpush1.msra.mxu0 0.0
        %683 = vmatprep.subr.mxu0 0.0
        %684 = vmatpush1.msra.mxu0 0.0
        %685 = vmatprep.subr.mxu0 0.0
        %686 = vmatpush1.msra.mxu0 0.0
        %687 = vmatprep.subr.mxu0 0.0
        %688 = vmatpush1.msra.mxu0 0.0
        %689 = vmatprep.subr.mxu0 0.0
        %690 = vmatpush1.msra.mxu0 0.0
        %691 = vmatprep.subr.mxu0 0.0
        %692 = vmatpush1.msra.mxu0 0.0
        %693 = vmatprep.mubr.f32.mxu0 0.0
        %694 = vmatmul.mubr.f32.gmra.mrb[0].mxu0 %v494
        %v695 = vpop.f32.mrb[0].mxu0
        %v696 = vadd.f32 %v622, %v695
        %v697 = vpop.f32.mrb[0].mxu0
        %v698 = vadd.f32 %v626, %v697
        %699 = vmatprep.mubr.f32.mxu0 0.0
        %700 = vmatmul.mubr.f32.gmra.mrb[0].mxu0 %v495
        %v701 = vpop.f32.mrb[0].mxu0
        %v702 = vadd.f32 %v622, %v701
        %v703 = vpop.f32.mrb[0].mxu0
        %v704 = vadd.f32 %v626, %v703
        %705 = vmatprep.mubr.f32.mxu0 0.0
        %706 = vmatmul.mubr.f32.gmra.mrb[0].mxu0 %v496
        %v707 = vpop.f32.mrb[0].mxu0
        %v708 = vadd.f32 %v622, %v707
        %v709 = vpop.f32.mrb[0].mxu0
        %v710 = vadd.f32 %v626, %v709
        %711 = vmatprep.mubr.f32.mxu0 0.0
        %712 = vmatmul.mubr.f32.gmra.mrb[0].mxu0 %v497
        %v713 = vpop.f32.mrb[0].mxu0
        %v714 = vadd.f32 %v622, %v713
        %v715 = vpop.f32.mrb[0].mxu0
        %v716 = vadd.f32 %v626, %v715
        %717 = vmatprep.mubr.f32.mxu0 0.0
        %718 = vmatmul.mubr.f32.gmra.mrb[0].mxu0 %v498
        %v719 = vpop.f32.mrb[0].mxu0
        %v720 = vadd.f32 %v622, %v719
        %v721 = vpop.f32.mrb[0].mxu0
        %v722 = vadd.f32 %v626, %v721
        %723 = vmatprep.mubr.f32.mxu0 0.0
        %724 = vmatmul.mubr.f32.gmra.mrb[0].mxu0 %v499
        %v725 = vpop.f32.mrb[0].mxu0
        %v726 = vadd.f32 %v622, %v725
        %v727 = vpop.f32.mrb[0].mxu0
        %v728 = vadd.f32 %v626, %v727
        %729 = vmatprep.mubr.f32.mxu0 0.0
        %730 = vmatmul.mubr.f32.gmra.mrb[0].mxu0 %v500
        %v731 = vpop.f32.mrb[0].mxu0
        %v732 = vadd.f32 %v622, %v731
        %v733 = vpop.f32.mrb[0].mxu0
        %v734 = vadd.f32 %v626, %v733
        %735 = vmatprep.mubr.f32.mxu0 0.0
        %736 = vmatmul.mubr.f32.gmra.mrb[0].mxu0 %v501
        %v737 = vpop.f32.mrb[0].mxu0
        %v738 = vadd.f32 %v622, %v737
        %v739 = vpop.f32.mrb[0].mxu0
        %v740 = vadd.f32 %v626, %v739
        %741 = vmatprep.mubr.f32.mxu0 0.0
        %742 = vmatmul.mubr.f32.gmra.mrb[0].mxu0 %v502
        %v743 = vpop.f32.mrb[0].mxu0
        %v744 = vadd.f32 %v622, %v743
        %v745 = vpop.f32.mrb[0].mxu0
        %v746 = vadd.f32 %v626, %v745
        %747 = vmatprep.mubr.f32.mxu0 0.0
        %748 = vmatmul.mubr.f32.gmra.mrb[0].mxu0 %v503
        %v749 = vpop.f32.mrb[0].mxu0
        %v750 = vadd.f32 %v622, %v749
        %v751 = vpop.f32.mrb[0].mxu0
        %v752 = vadd.f32 %v626, %v751
        %753 = vmatprep.mubr.f32.mxu0 0.0
        %754 = vmatmul.mubr.f32.gmra.mrb[0].mxu0 %v504
        %v755 = vpop.f32.mrb[0].mxu0
        %v756 = vadd.f32 %v622, %v755
        %v757 = vpop.f32.mrb[0].mxu0
        %v758 = vadd.f32 %v626, %v757
        %759 = vmatprep.mubr.f32.mxu0 0.0
        %760 = vmatmul.mubr.f32.gmra.mrb[0].mxu0 %v505
        %v761 = vpop.f32.mrb[0].mxu0
        %v762 = vadd.f32 %v622, %v761
        %v763 = vpop.f32.mrb[0].mxu0
        %v764 = vadd.f32 %v626, %v763
        %765 = vmatprep.mubr.f32.mxu0 0.0
        %766 = vmatmul.mubr.f32.gmra.mrb[0].mxu0 %v506
        %v767 = vpop.f32.mrb[0].mxu0
        %v768 = vadd.f32 %v622, %v767
        %v769 = vpop.f32.mrb[0].mxu0
        %v770 = vadd.f32 %v626, %v769
        %771 = vdwg.mxu0
        %v772 = vld [vmem:[#allocation11] sm:$0xff]
        %v773 = vld [vmem:[#allocation11 + $0x8] sm:$0xff]
        %v774 = vld [vmem:[#allocation11 + $0x10] sm:$0xff]
        %v775 = vld [vmem:[#allocation11 + $0x18] sm:$0xff]
        %v776 = vld [vmem:[#allocation11 + $0x20] sm:$0xff]
        %v777 = vld [vmem:[#allocation11 + $0x28] sm:$0xff]
        %v778 = vld [vmem:[#allocation11 + $0x30] sm:$0xff]
        %v779 = vld [vmem:[#allocation11 + $0x38] sm:$0xff]
        %v780 = vld [vmem:[#allocation11 + $0x40] sm:$0xff]
        %v781 = vld [vmem:[#allocation11 + $0x48] sm:$0xff]
        %v782 = vld [vmem:[#allocation11 + $0x50] sm:$0xff]
        %v783 = vld [vmem:[#allocation11 + $0x58] sm:$0xff]
        %v784 = vld [vmem:[#allocation11 + $0x60] sm:$0xff]
        %v785 = vld [vmem:[#allocation11 + $0x68] sm:$0xff]
        %v786 = vld [vmem:[#allocation11 + $0x70] sm:$0xff]
        %v787 = vld [vmem:[#allocation11 + $0x78] sm:$0xff]
        %v788 = vld [vmem:[#allocation11 + $0x80] sm:$0xff]
        %v789 = vld [vmem:[#allocation11 + $0x88] sm:$0xff]
        %v790 = vld [vmem:[#allocation11 + $0x90] sm:$0xff]
        %v791 = vld [vmem:[#allocation11 + $0x98] sm:$0xff]
        %v792 = vld [vmem:[#allocation11 + $0xa0] sm:$0xff]
        %v793 = vld [vmem:[#allocation11 + $0xa8] sm:$0xff]
        %v794 = vld [vmem:[#allocation11 + $0xb0] sm:$0xff]
        %v795 = vld [vmem:[#allocation11 + $0xb8] sm:$0xff]
        %v796 = vld [vmem:[#allocation11 + $0xc0] sm:$0xff]
        %v797 = vld [vmem:[#allocation11 + $0xc8] sm:$0xff]
        %v798 = vld [vmem:[#allocation11 + $0xd0] sm:$0xff]
        %v799 = vld [vmem:[#allocation11 + $0xd8] sm:$0xff]
        %v800 = vld [vmem:[#allocation11 + $0xe0] sm:$0xff]
        %v801 = vld [vmem:[#allocation11 + $0xe8] sm:$0xff]
        %v802 = vld [vmem:[#allocation11 + $0xf0] sm:$0xff]
        %v803 = vld [vmem:[#allocation11 + $0xf8] sm:$0xff]
        %v804 = vld [vmem:[#allocation11 + $0x100] sm:$0xff]
        %v805 = vld [vmem:[#allocation11 + $0x108] sm:$0xff]
        %v806 = vld [vmem:[#allocation11 + $0x110] sm:$0xff]
        %v807 = vld [vmem:[#allocation11 + $0x118] sm:$0xff]
        %v808 = vld [vmem:[#allocation11 + $0x120] sm:$0xff]
        %v809 = vld [vmem:[#allocation11 + $0x128] sm:$0xff]
        %v810 = vld [vmem:[#allocation11 + $0x130] sm:$0xff]
        %v811 = vld [vmem:[#allocation11 + $0x138] sm:$0xff]
        %v812 = vld [vmem:[#allocation11 + $0x140] sm:$0xff]
        %v813 = vld [vmem:[#allocation11 + $0x148] sm:$0xff]
        %v814 = vld [vmem:[#allocation11 + $0x150] sm:$0xff]
        %v815 = vld [vmem:[#allocation11 + $0x158] sm:$0xff]
        %v816 = vld [vmem:[#allocation11 + $0x160] sm:$0xff]
        %v817 = vld [vmem:[#allocation11 + $0x168] sm:$0xff]
        %v818 = vld [vmem:[#allocation11 + $0x170] sm:$0xff]
        %v819 = vld [vmem:[#allocation11 + $0x178] sm:$0xff]
        %v820 = vld [vmem:[#allocation11 + $0x180] sm:$0xff]
        %v821 = vld [vmem:[#allocation11 + $0x188] sm:$0xff]
        %v822 = vld [vmem:[#allocation11 + $0x190] sm:$0xff]
        %v823 = vld [vmem:[#allocation11 + $0x198] sm:$0xff]
        %v824 = vld [vmem:[#allocation11 + $0x1a0] sm:$0xff]
        %v825 = vld [vmem:[#allocation11 + $0x1a8] sm:$0xff]
        %v826 = vld [vmem:[#allocation11 + $0x1b0] sm:$0xff]
        %v827 = vld [vmem:[#allocation11 + $0x1b8] sm:$0xff]
        %v828 = vld [vmem:[#allocation11 + $0x1c0] sm:$0xff]
        %v829 = vld [vmem:[#allocation11 + $0x1c8] sm:$0xff]
        %v830 = vld [vmem:[#allocation11 + $0x1d0] sm:$0xff]
        %v831 = vld [vmem:[#allocation11 + $0x1d8] sm:$0xff]
        %v832 = vld [vmem:[#allocation11 + $0x1e0] sm:$0xff]
        %v833 = vld [vmem:[#allocation11 + $0x1e8] sm:$0xff]
        %v834 = vld [vmem:[#allocation11 + $0x1f0] sm:$0xff]
        %v835 = vld [vmem:[#allocation11 + $0x1f8] sm:$0xff]
        %v836 = vld [vmem:[#allocation11 + $0x200] sm:$0xff]
        %v837 = vld [vmem:[#allocation11 + $0x208] sm:$0xff]
        %v838 = vld [vmem:[#allocation11 + $0x210] sm:$0xff]
        %v839 = vld [vmem:[#allocation11 + $0x218] sm:$0xff]
        %v840 = vld [vmem:[#allocation11 + $0x220] sm:$0xff]
        %v841 = vld [vmem:[#allocation11 + $0x228] sm:$0xff]
        %v842 = vld [vmem:[#allocation11 + $0x230] sm:$0xff]
        %v843 = vld [vmem:[#allocation11 + $0x238] sm:$0xff]
        %v844 = vld [vmem:[#allocation11 + $0x240] sm:$0xff]
        %v845 = vld [vmem:[#allocation11 + $0x248] sm:$0xff]
        %v846 = vld [vmem:[#allocation11 + $0x250] sm:$0xff]
        %v847 = vld [vmem:[#allocation11 + $0x258] sm:$0xff]
        %v848 = vld [vmem:[#allocation11 + $0x260] sm:$0xff]
        %v849 = vld [vmem:[#allocation11 + $0x268] sm:$0xff]
        %v850 = vld [vmem:[#allocation11 + $0x270] sm:$0xff]
        %v851 = vld [vmem:[#allocation11 + $0x278] sm:$0xff]
        %v852 = vld [vmem:[#allocation11 + $0x280] sm:$0xff]
        %v853 = vld [vmem:[#allocation11 + $0x288] sm:$0xff]
        %v854 = vld [vmem:[#allocation11 + $0x290] sm:$0xff]
        %v855 = vld [vmem:[#allocation11 + $0x298] sm:$0xff]
        %v856 = vld [vmem:[#allocation11 + $0x2a0] sm:$0xff]
        %v857 = vld [vmem:[#allocation11 + $0x2a8] sm:$0xff]
        %v858 = vld [vmem:[#allocation11 + $0x2b0] sm:$0xff]
        %v859 = vld [vmem:[#allocation11 + $0x2b8] sm:$0xff]
        %v860 = vld [vmem:[#allocation11 + $0x2c0] sm:$0xff]
        %v861 = vld [vmem:[#allocation11 + $0x2c8] sm:$0xff]
        %v862 = vld [vmem:[#allocation11 + $0x2d0] sm:$0xff]
        %v863 = vld [vmem:[#allocation11 + $0x2d8] sm:$0xff]
        %v864 = vld [vmem:[#allocation11 + $0x2e0] sm:$0xff]
        %v865 = vld [vmem:[#allocation11 + $0x2e8] sm:$0xff]
        %v866 = vld [vmem:[#allocation11 + $0x2f0] sm:$0xff]
        %v867 = vld [vmem:[#allocation11 + $0x2f8] sm:$0xff]
        %v868 = vld [vmem:[#allocation11 + $0x300] sm:$0xff]
        %v869 = vld [vmem:[#allocation11 + $0x308] sm:$0xff]
        %v870 = vld [vmem:[#allocation11 + $0x310] sm:$0xff]
        %v871 = vld [vmem:[#allocation11 + $0x318] sm:$0xff]
        %v872 = vld [vmem:[#allocation11 + $0x320] sm:$0xff]
        %v873 = vld [vmem:[#allocation11 + $0x328] sm:$0xff]
        %v874 = vld [vmem:[#allocation11 + $0x330] sm:$0xff]
        %v875 = vld [vmem:[#allocation11 + $0x338] sm:$0xff]
        %v876 = vld [vmem:[#allocation11 + $0x340] sm:$0xff]
        %v877 = vld [vmem:[#allocation11 + $0x348] sm:$0xff]
        %v878 = vld [vmem:[#allocation11 + $0x350] sm:$0xff]
        %v879 = vld [vmem:[#allocation11 + $0x358] sm:$0xff]
        %v880 = vld [vmem:[#allocation11 + $0x360] sm:$0xff]
        %v881 = vld [vmem:[#allocation11 + $0x368] sm:$0xff]
        %v882 = vld [vmem:[#allocation11 + $0x370] sm:$0xff]
        %v883 = vld [vmem:[#allocation11 + $0x378] sm:$0xff]
        %v884 = vld [vmem:[#allocation11 + $0x380] sm:$0xff]
        %v885 = vld [vmem:[#allocation11 + $0x388] sm:$0xff]
        %v886 = vld [vmem:[#allocation11 + $0x390] sm:$0xff]
        %v887 = vld [vmem:[#allocation11 + $0x398] sm:$0xff]
        %v888 = vld [vmem:[#allocation11 + $0x3a0] sm:$0xff]
        %v889 = vld [vmem:[#allocation11 + $0x3a8] sm:$0xff]
        %v890 = vld [vmem:[#allocation11 + $0x3b0] sm:$0xff]
        %v891 = vld [vmem:[#allocation11 + $0x3b8] sm:$0xff]
        %v892 = vld [vmem:[#allocation11 + $0x3c0] sm:$0xff]
        %v893 = vld [vmem:[#allocation11 + $0x3c8] sm:$0xff]
        %v894 = vld [vmem:[#allocation11 + $0x3d0] sm:$0xff]
        %v895 = vld [vmem:[#allocation11 + $0x3d8] sm:$0xff]
        %v896 = vld [vmem:[#allocation11 + $0x3e0] sm:$0xff]
        %v897 = vld [vmem:[#allocation11 + $0x3e8] sm:$0xff]
        %v898 = vld [vmem:[#allocation11 + $0x3f0] sm:$0xff]
        %v899 = vld [vmem:[#allocation11 + $0x3f8] sm:$0xff]
        %v900 = vld [vmem:[#allocation11 + $0x400] sm:$0xff]
        %v901 = vld [vmem:[#allocation11 + $0x408] sm:$0xff]
        %v902 = vld [vmem:[#allocation11 + $0x410] sm:$0xff]
        %v903 = vld [vmem:[#allocation11 + $0x418] sm:$0xff]
        %v904 = vld [vmem:[#allocation11 + $0x420] sm:$0xff]
        %v905 = vld [vmem:[#allocation11 + $0x428] sm:$0xff]
        %v906 = vld [vmem:[#allocation11 + $0x430] sm:$0xff]
        %v907 = vld [vmem:[#allocation11 + $0x438] sm:$0xff]
        %v908 = vld [vmem:[#allocation11 + $0x440] sm:$0xff]
        %v909 = vld [vmem:[#allocation11 + $0x448] sm:$0xff]
        %v910 = vld [vmem:[#allocation11 + $0x450] sm:$0xff]
        %v911 = vld [vmem:[#allocation11 + $0x458] sm:$0xff]
        %v912 = vld [vmem:[#allocation11 + $0x460] sm:$0xff]
        %v913 = vld [vmem:[#allocation11 + $0x468] sm:$0xff]
        %v914 = vld [vmem:[#allocation11 + $0x470] sm:$0xff]
        %v915 = vld [vmem:[#allocation11 + $0x478] sm:$0xff]
        %v916 = vld [vmem:[#allocation11 + $0x480] sm:$0xff]
        %v917 = vld [vmem:[#allocation11 + $0x488] sm:$0xff]
        %v918 = vld [vmem:[#allocation11 + $0x490] sm:$0xff]
        %v919 = vld [vmem:[#allocation11 + $0x498] sm:$0xff]
        %v920 = vld [vmem:[#allocation11 + $0x4a0] sm:$0xff]
        %v921 = vld [vmem:[#allocation11 + $0x4a8] sm:$0xff]
        %v922 = vld [vmem:[#allocation11 + $0x4b0] sm:$0xff]
        %v923 = vld [vmem:[#allocation11 + $0x4b8] sm:$0xff]
        %v924 = vld [vmem:[#allocation11 + $0x4c0] sm:$0xff]
        %v925 = vld [vmem:[#allocation11 + $0x4c8] sm:$0xff]
        %v926 = vld [vmem:[#allocation11 + $0x4d0] sm:$0xff]
        %v927 = vld [vmem:[#allocation11 + $0x4d8] sm:$0xff]
        %v928 = vld [vmem:[#allocation11 + $0x4e0] sm:$0xff]
        %v929 = vld [vmem:[#allocation11 + $0x4e8] sm:$0xff]
        %v930 = vld [vmem:[#allocation11 + $0x4f0] sm:$0xff]
        %v931 = vld [vmem:[#allocation11 + $0x4f8] sm:$0xff]
        %v932 = vld [vmem:[#allocation11 + $0x500] sm:$0xff]
        %v933 = vld [vmem:[#allocation11 + $0x508] sm:$0xff]
        %v934 = vld [vmem:[#allocation11 + $0x510] sm:$0xff]
        %v935 = vld [vmem:[#allocation11 + $0x518] sm:$0xff]
        %v936 = vld [vmem:[#allocation11 + $0x520] sm:$0xff]
        %v937 = vld [vmem:[#allocation11 + $0x528] sm:$0xff]
        %v938 = vld [vmem:[#allocation11 + $0x530] sm:$0xff]
        %v939 = vld [vmem:[#allocation11 + $0x538] sm:$0xff]
        %v940 = vld [vmem:[#allocation11 + $0x540] sm:$0xff]
        %v941 = vld [vmem:[#allocation11 + $0x548] sm:$0xff]
        %v942 = vld [vmem:[#allocation11 + $0x550] sm:$0xff]
        %v943 = vld [vmem:[#allocation11 + $0x558] sm:$0xff]
        %v944 = vld [vmem:[#allocation11 + $0x560] sm:$0xff]
        %v945 = vld [vmem:[#allocation11 + $0x568] sm:$0xff]
        %v946 = vld [vmem:[#allocation11 + $0x570] sm:$0xff]
        %v947 = vld [vmem:[#allocation11 + $0x578] sm:$0xff]
        %v948 = vld [vmem:[#allocation11 + $0x580] sm:$0xff]
        %v949 = vld [vmem:[#allocation11 + $0x588] sm:$0xff]
        %v950 = vld [vmem:[#allocation11 + $0x590] sm:$0xff]
        %v951 = vld [vmem:[#allocation11 + $0x598] sm:$0xff]
        %v952 = vld [vmem:[#allocation11 + $0x5a0] sm:$0xff]
        %v953 = vld [vmem:[#allocation11 + $0x5a8] sm:$0xff]
        %v954 = vld [vmem:[#allocation11 + $0x5b0] sm:$0xff]
        %v955 = vld [vmem:[#allocation11 + $0x5b8] sm:$0xff]
        %v956 = vld [vmem:[#allocation11 + $0x5c0] sm:$0xff]
        %v957 = vld [vmem:[#allocation11 + $0x5c8] sm:$0xff]
        %v958 = vld [vmem:[#allocation11 + $0x5d0] sm:$0xff]
        %v959 = vld [vmem:[#allocation11 + $0x5d8] sm:$0xff]
        %v960 = vld [vmem:[#allocation11 + $0x5e0] sm:$0xff]
        %v961 = vld [vmem:[#allocation11 + $0x5e8] sm:$0xff]
        %v962 = vld [vmem:[#allocation11 + $0x5f0] sm:$0xff]
        %v963 = vld [vmem:[#allocation11 + $0x5f8] sm:$0xff]
        %v964 = vld [vmem:[#allocation13] sm:$0x3]
        %v966 = vlaneseq
        %v967 = vshrl.u32 %v966, 7
        %v968 = vsub.s32 0, %v967
        %v969 = vrot.slane %v964, %v968
        %v970 = vlaneseq
        %v971 = vshrl.u32 %v970, 7
        %v972 = vsub.s32 1, %v971
        %v973 = vrot.slane %v964, %v972
        %976 = vmatprep.subr.mxu0 %v773
        %977 = vmatpush1.msra.mxu0 %v772
        %978 = vmatprep.subr.mxu0 %v775
        %979 = vmatpush1.msra.mxu0 %v774
        %980 = vmatprep.subr.mxu0 %v777
        %981 = vmatpush1.msra.mxu0 %v776
        %982 = vmatprep.subr.mxu0 %v779
        %983 = vmatpush1.msra.mxu0 %v778
        %984 = vmatprep.subr.mxu0 %v781
        %985 = vmatpush1.msra.mxu0 %v780
        %986 = vmatprep.subr.mxu0 %v783
        %987 = vmatpush1.msra.mxu0 %v782
        %988 = vmatprep.subr.mxu0 %v785
        %989 = vmatpush1.msra.mxu0 %v784
        %990 = vmatprep.subr.mxu0 %v787
        %991 = vmatpush1.msra.mxu0 %v786
        %992 = vmatprep.subr.mxu0 %v789
        %993 = vmatpush1.msra.mxu0 %v788
        %994 = vmatprep.subr.mxu0 %v791
        %995 = vmatpush1.msra.mxu0 %v790
        %996 = vmatprep.subr.mxu0 %v793
        %997 = vmatpush1.msra.mxu0 %v792
        %998 = vmatprep.subr.mxu0 %v795
        %999 = vmatpush1.msra.mxu0 %v794
        %1000 = vmatprep.subr.mxu0 %v797
        %1001 = vmatpush1.msra.mxu0 %v796
        %1002 = vmatprep.subr.mxu0 %v799
        %1003 = vmatpush1.msra.mxu0 %v798
        %1004 = vmatprep.subr.mxu0 %v801
        %1005 = vmatpush1.msra.mxu0 %v800
        %1006 = vmatprep.subr.mxu0 %v803
        %1007 = vmatpush1.msra.mxu0 %v802
        %1008 = vmatprep.subr.mxu0 %v805
        %1009 = vmatpush1.msra.mxu0 %v804
        %1010 = vmatprep.subr.mxu0 %v807
        %1011 = vmatpush1.msra.mxu0 %v806
        %1012 = vmatprep.subr.mxu0 %v809
        %1013 = vmatpush1.msra.mxu0 %v808
        %1014 = vmatprep.subr.mxu0 %v811
        %1015 = vmatpush1.msra.mxu0 %v810
        %1016 = vmatprep.subr.mxu0 %v813
        %1017 = vmatpush1.msra.mxu0 %v812
        %1018 = vmatprep.subr.mxu0 %v815
        %1019 = vmatpush1.msra.mxu0 %v814
        %1020 = vmatprep.subr.mxu0 %v817
        %1021 = vmatpush1.msra.mxu0 %v816
        %1022 = vmatprep.subr.mxu0 %v819
        %1023 = vmatpush1.msra.mxu0 %v818
        %1024 = vmatprep.subr.mxu0 %v821
        %1025 = vmatpush1.msra.mxu0 %v820
        %1026 = vmatprep.subr.mxu0 %v823
        %1027 = vmatpush1.msra.mxu0 %v822
        %1028 = vmatprep.subr.mxu0 %v825
        %1029 = vmatpush1.msra.mxu0 %v824
        %1030 = vmatprep.subr.mxu0 %v827
        %1031 = vmatpush1.msra.mxu0 %v826
        %1032 = vmatprep.subr.mxu0 %v829
        %1033 = vmatpush1.msra.mxu0 %v828
        %1034 = vmatprep.subr.mxu0 %v831
        %1035 = vmatpush1.msra.mxu0 %v830
        %1036 = vmatprep.subr.mxu0 %v833
        %1037 = vmatpush1.msra.mxu0 %v832
        %1038 = vmatprep.subr.mxu0 %v835
        %1039 = vmatpush1.msra.mxu0 %v834
        %1040 = vmatprep.mubr.f32.mxu0 %v508
        %1041 = vmatmul.mubr.f32.gmra.mrb[0].mxu0 %v507
        %v1042 = vpop.f32.mrb[0].mxu0
        %v1043 = vadd.f32 %v969, %v1042
        %v1044 = vpop.f32.mrb[0].mxu0
        %v1045 = vadd.f32 %v973, %v1044
        %1046 = vmatprep.mubr.f32.mxu0 %v514
        %1047 = vmatmul.mubr.f32.gmra.mrb[0].mxu0 %v513
        %v1048 = vpop.f32.mrb[0].mxu0
        %v1049 = vadd.f32 %v969, %v1048
        %v1050 = vpop.f32.mrb[0].mxu0
        %v1051 = vadd.f32 %v973, %v1050
        %1052 = vmatprep.mubr.f32.mxu0 %v520
        %1053 = vmatmul.mubr.f32.gmra.mrb[0].mxu0 %v519
        %v1054 = vpop.f32.mrb[0].mxu0
        %v1055 = vadd.f32 %v969, %v1054
        %v1056 = vpop.f32.mrb[0].mxu0
        %v1057 = vadd.f32 %v973, %v1056
        %1058 = vmatprep.mubr.f32.mxu0 %v526
        %1059 = vmatmul.mubr.f32.gmra.mrb[0].mxu0 %v525
        %v1060 = vpop.f32.mrb[0].mxu0
        %v1061 = vadd.f32 %v969, %v1060
        %v1062 = vpop.f32.mrb[0].mxu0
        %v1063 = vadd.f32 %v973, %v1062
        %1064 = vmatprep.mubr.f32.mxu0 %v532
        %1065 = vmatmul.mubr.f32.gmra.mrb[0].mxu0 %v531
        %v1066 = vpop.f32.mrb[0].mxu0
        %v1067 = vadd.f32 %v969, %v1066
        %v1068 = vpop.f32.mrb[0].mxu0
        %v1069 = vadd.f32 %v973, %v1068
        %1070 = vmatprep.mubr.f32.mxu0 %v538
        %1071 = vmatmul.mubr.f32.gmra.mrb[0].mxu0 %v537
        %v1072 = vpop.f32.mrb[0].mxu0
        %v1073 = vadd.f32 %v969, %v1072
        %v1074 = vpop.f32.mrb[0].mxu0
        %v1075 = vadd.f32 %v973, %v1074
        %1076 = vmatprep.mubr.f32.mxu0 %v544
        %1077 = vmatmul.mubr.f32.gmra.mrb[0].mxu0 %v543
        %v1078 = vpop.f32.mrb[0].mxu0
        %v1079 = vadd.f32 %v969, %v1078
        %v1080 = vpop.f32.mrb[0].mxu0
        %v1081 = vadd.f32 %v973, %v1080
        %1082 = vmatprep.mubr.f32.mxu0 %v550
        %1083 = vmatmul.mubr.f32.gmra.mrb[0].mxu0 %v549
        %v1084 = vpop.f32.mrb[0].mxu0
        %v1085 = vadd.f32 %v969, %v1084
        %v1086 = vpop.f32.mrb[0].mxu0
        %v1087 = vadd.f32 %v973, %v1086
        %1088 = vmatprep.mubr.f32.mxu0 %v556
        %1089 = vmatmul.mubr.f32.gmra.mrb[0].mxu0 %v555
        %v1090 = vpop.f32.mrb[0].mxu0
        %v1091 = vadd.f32 %v969, %v1090
        %v1092 = vpop.f32.mrb[0].mxu0
        %v1093 = vadd.f32 %v973, %v1092
        %1094 = vmatprep.mubr.f32.mxu0 %v562
        %1095 = vmatmul.mubr.f32.gmra.mrb[0].mxu0 %v561
        %v1096 = vpop.f32.mrb[0].mxu0
        %v1097 = vadd.f32 %v969, %v1096
        %v1098 = vpop.f32.mrb[0].mxu0
        %v1099 = vadd.f32 %v973, %v1098
        %1100 = vmatprep.mubr.f32.mxu0 %v568
        %1101 = vmatmul.mubr.f32.gmra.mrb[0].mxu0 %v567
        %v1102 = vpop.f32.mrb[0].mxu0
        %v1103 = vadd.f32 %v969, %v1102
        %v1104 = vpop.f32.mrb[0].mxu0
        %v1105 = vadd.f32 %v973, %v1104
        %1106 = vmatprep.mubr.f32.mxu0 %v574
        %1107 = vmatmul.mubr.f32.gmra.mrb[0].mxu0 %v573
        %v1108 = vpop.f32.mrb[0].mxu0
        %v1109 = vadd.f32 %v969, %v1108
        %v1110 = vpop.f32.mrb[0].mxu0
        %v1111 = vadd.f32 %v973, %v1110
        %1112 = vmatprep.mubr.f32.mxu0 %v580
        %1113 = vmatmul.mubr.f32.gmra.mrb[0].mxu0 %v579
        %v1114 = vpop.f32.mrb[0].mxu0
        %v1115 = vadd.f32 %v969, %v1114
        %v1116 = vpop.f32.mrb[0].mxu0
        %v1117 = vadd.f32 %v973, %v1116
        %1118 = vdwg.mxu0
        %1119 = vmatprep.subr.mxu0 %v837
        %1120 = vmatpush1.msra.mxu0 %v836
        %1121 = vmatprep.subr.mxu0 %v839
        %1122 = vmatpush1.msra.mxu0 %v838
        %1123 = vmatprep.subr.mxu0 %v841
        %1124 = vmatpush1.msra.mxu0 %v840
        %1125 = vmatprep.subr.mxu0 %v843
        %1126 = vmatpush1.msra.mxu0 %v842
        %1127 = vmatprep.subr.mxu0 %v845
        %1128 = vmatpush1.msra.mxu0 %v844
        %1129 = vmatprep.subr.mxu0 %v847
        %1130 = vmatpush1.msra.mxu0 %v846
        %1131 = vmatprep.subr.mxu0 %v849
        %1132 = vmatpush1.msra.mxu0 %v848
        %1133 = vmatprep.subr.mxu0 %v851
        %1134 = vmatpush1.msra.mxu0 %v850
        %1135 = vmatprep.subr.mxu0 %v853
        %1136 = vmatpush1.msra.mxu0 %v852
        %1137 = vmatprep.subr.mxu0 %v855
        %1138 = vmatpush1.msra.mxu0 %v854
        %1139 = vmatprep.subr.mxu0 %v857
        %1140 = vmatpush1.msra.mxu0 %v856
        %1141 = vmatprep.subr.mxu0 %v859
        %1142 = vmatpush1.msra.mxu0 %v858
        %1143 = vmatprep.subr.mxu0 %v861
        %1144 = vmatpush1.msra.mxu0 %v860
        %1145 = vmatprep.subr.mxu0 %v863
        %1146 = vmatpush1.msra.mxu0 %v862
        %1147 = vmatprep.subr.mxu0 %v865
        %1148 = vmatpush1.msra.mxu0 %v864
        %1149 = vmatprep.subr.mxu0 %v867
        %1150 = vmatpush1.msra.mxu0 %v866
        %1151 = vmatprep.subr.mxu0 %v869
        %1152 = vmatpush1.msra.mxu0 %v868
        %1153 = vmatprep.subr.mxu0 %v871
        %1154 = vmatpush1.msra.mxu0 %v870
        %1155 = vmatprep.subr.mxu0 %v873
        %1156 = vmatpush1.msra.mxu0 %v872
        %1157 = vmatprep.subr.mxu0 %v875
        %1158 = vmatpush1.msra.mxu0 %v874
        %1159 = vmatprep.subr.mxu0 %v877
        %1160 = vmatpush1.msra.mxu0 %v876
        %1161 = vmatprep.subr.mxu0 %v879
        %1162 = vmatpush1.msra.mxu0 %v878
        %1163 = vmatprep.subr.mxu0 %v881
        %1164 = vmatpush1.msra.mxu0 %v880
        %1165 = vmatprep.subr.mxu0 %v883
        %1166 = vmatpush1.msra.mxu0 %v882
        %1167 = vmatprep.subr.mxu0 %v885
        %1168 = vmatpush1.msra.mxu0 %v884
        %1169 = vmatprep.subr.mxu0 %v887
        %1170 = vmatpush1.msra.mxu0 %v886
        %1171 = vmatprep.subr.mxu0 %v889
        %1172 = vmatpush1.msra.mxu0 %v888
        %1173 = vmatprep.subr.mxu0 %v891
        %1174 = vmatpush1.msra.mxu0 %v890
        %1175 = vmatprep.subr.mxu0 %v893
        %1176 = vmatpush1.msra.mxu0 %v892
        %1177 = vmatprep.subr.mxu0 %v895
        %1178 = vmatpush1.msra.mxu0 %v894
        %1179 = vmatprep.subr.mxu0 %v897
        %1180 = vmatpush1.msra.mxu0 %v896
        %1181 = vmatprep.subr.mxu0 %v899
        %1182 = vmatpush1.msra.mxu0 %v898
        %1183 = vmatprep.mubr.f32.mxu0 %v510
        %1184 = vmatmul.mubr.f32.gmra.mrb[0].mxu0 %v509
        %v1185 = vpop.f32.mrb[0].mxu0
        %v1186 = vadd.f32 %v1043, %v1185
        %v1187 = vpop.f32.mrb[0].mxu0
        %v1188 = vadd.f32 %v1045, %v1187
        %1189 = vmatprep.mubr.f32.mxu0 %v516
        %1190 = vmatmul.mubr.f32.gmra.mrb[0].mxu0 %v515
        %v1191 = vpop.f32.mrb[0].mxu0
        %v1192 = vadd.f32 %v1049, %v1191
        %v1193 = vpop.f32.mrb[0].mxu0
        %v1194 = vadd.f32 %v1051, %v1193
        %1195 = vmatprep.mubr.f32.mxu0 %v522
        %1196 = vmatmul.mubr.f32.gmra.mrb[0].mxu0 %v521
        %v1197 = vpop.f32.mrb[0].mxu0
        %v1198 = vadd.f32 %v1055, %v1197
        %v1199 = vpop.f32.mrb[0].mxu0
        %v1200 = vadd.f32 %v1057, %v1199
        %1201 = vmatprep.mubr.f32.mxu0 %v528
        %1202 = vmatmul.mubr.f32.gmra.mrb[0].mxu0 %v527
        %v1203 = vpop.f32.mrb[0].mxu0
        %v1204 = vadd.f32 %v1061, %v1203
        %v1205 = vpop.f32.mrb[0].mxu0
        %v1206 = vadd.f32 %v1063, %v1205
        %1207 = vmatprep.mubr.f32.mxu0 %v534
        %1208 = vmatmul.mubr.f32.gmra.mrb[0].mxu0 %v533
        %v1209 = vpop.f32.mrb[0].mxu0
        %v1210 = vadd.f32 %v1067, %v1209
        %v1211 = vpop.f32.mrb[0].mxu0
        %v1212 = vadd.f32 %v1069, %v1211
        %1213 = vmatprep.mubr.f32.mxu0 %v540
        %1214 = vmatmul.mubr.f32.gmra.mrb[0].mxu0 %v539
        %v1215 = vpop.f32.mrb[0].mxu0
        %v1216 = vadd.f32 %v1073, %v1215
        %v1217 = vpop.f32.mrb[0].mxu0
        %v1218 = vadd.f32 %v1075, %v1217
        %1219 = vmatprep.mubr.f32.mxu0 %v546
        %1220 = vmatmul.mubr.f32.gmra.mrb[0].mxu0 %v545
        %v1221 = vpop.f32.mrb[0].mxu0
        %v1222 = vadd.f32 %v1079, %v1221
        %v1223 = vpop.f32.mrb[0].mxu0
        %v1224 = vadd.f32 %v1081, %v1223
        %1225 = vmatprep.mubr.f32.mxu0 %v552
        %1226 = vmatmul.mubr.f32.gmra.mrb[0].mxu0 %v551
        %v1227 = vpop.f32.mrb[0].mxu0
        %v1228 = vadd.f32 %v1085, %v1227
        %v1229 = vpop.f32.mrb[0].mxu0
        %v1230 = vadd.f32 %v1087, %v1229
        %1231 = vmatprep.mubr.f32.mxu0 %v558
        %1232 = vmatmul.mubr.f32.gmra.mrb[0].mxu0 %v557
        %v1233 = vpop.f32.mrb[0].mxu0
        %v1234 = vadd.f32 %v1091, %v1233
        %v1235 = vpop.f32.mrb[0].mxu0
        %v1236 = vadd.f32 %v1093, %v1235
        %1237 = vmatprep.mubr.f32.mxu0 %v564
        %1238 = vmatmul.mubr.f32.gmra.mrb[0].mxu0 %v563
        %v1239 = vpop.f32.mrb[0].mxu0
        %v1240 = vadd.f32 %v1097, %v1239
        %v1241 = vpop.f32.mrb[0].mxu0
        %v1242 = vadd.f32 %v1099, %v1241
        %1243 = vmatprep.mubr.f32.mxu0 %v570
        %1244 = vmatmul.mubr.f32.gmra.mrb[0].mxu0 %v569
        %v1245 = vpop.f32.mrb[0].mxu0
        %v1246 = vadd.f32 %v1103, %v1245
        %v1247 = vpop.f32.mrb[0].mxu0
        %v1248 = vadd.f32 %v1105, %v1247
        %1249 = vmatprep.mubr.f32.mxu0 %v576
        %1250 = vmatmul.mubr.f32.gmra.mrb[0].mxu0 %v575
        %v1251 = vpop.f32.mrb[0].mxu0
        %v1252 = vadd.f32 %v1109, %v1251
        %v1253 = vpop.f32.mrb[0].mxu0
        %v1254 = vadd.f32 %v1111, %v1253
        %1255 = vmatprep.mubr.f32.mxu0 %v582
        %1256 = vmatmul.mubr.f32.gmra.mrb[0].mxu0 %v581
        %v1257 = vpop.f32.mrb[0].mxu0
        %v1258 = vadd.f32 %v1115, %v1257
        %v1259 = vpop.f32.mrb[0].mxu0
        %v1260 = vadd.f32 %v1117, %v1259
        %1261 = vdwg.mxu0
        %1262 = vmatprep.subr.mxu0 %v901
        %1263 = vmatpush1.msra.mxu0 %v900
        %1264 = vmatprep.subr.mxu0 %v903
        %1265 = vmatpush1.msra.mxu0 %v902
        %1266 = vmatprep.subr.mxu0 %v905
        %1267 = vmatpush1.msra.mxu0 %v904
        %1268 = vmatprep.subr.mxu0 %v907
        %1269 = vmatpush1.msra.mxu0 %v906
        %1270 = vmatprep.subr.mxu0 %v909
        %1271 = vmatpush1.msra.mxu0 %v908
        %1272 = vmatprep.subr.mxu0 %v911
        %1273 = vmatpush1.msra.mxu0 %v910
        %1274 = vmatprep.subr.mxu0 %v913
        %1275 = vmatpush1.msra.mxu0 %v912
        %1276 = vmatprep.subr.mxu0 %v915
        %1277 = vmatpush1.msra.mxu0 %v914
        %1278 = vmatprep.subr.mxu0 %v917
        %1279 = vmatpush1.msra.mxu0 %v916
        %1280 = vmatprep.subr.mxu0 %v919
        %1281 = vmatpush1.msra.mxu0 %v918
        %1282 = vmatprep.subr.mxu0 %v921
        %1283 = vmatpush1.msra.mxu0 %v920
        %1284 = vmatprep.subr.mxu0 %v923
        %1285 = vmatpush1.msra.mxu0 %v922
        %1286 = vmatprep.subr.mxu0 %v925
        %1287 = vmatpush1.msra.mxu0 %v924
        %1288 = vmatprep.subr.mxu0 %v927
        %1289 = vmatpush1.msra.mxu0 %v926
        %1290 = vmatprep.subr.mxu0 %v929
        %1291 = vmatpush1.msra.mxu0 %v928
        %1292 = vmatprep.subr.mxu0 %v931
        %1293 = vmatpush1.msra.mxu0 %v930
        %1294 = vmatprep.subr.mxu0 %v933
        %1295 = vmatpush1.msra.mxu0 %v932
        %1296 = vmatprep.subr.mxu0 %v935
        %1297 = vmatpush1.msra.mxu0 %v934
        %1298 = vmatprep.subr.mxu0 %v937
        %1299 = vmatpush1.msra.mxu0 %v936
        %1300 = vmatprep.subr.mxu0 %v939
        %1301 = vmatpush1.msra.mxu0 %v938
        %1302 = vmatprep.subr.mxu0 %v941
        %1303 = vmatpush1.msra.mxu0 %v940
        %1304 = vmatprep.subr.mxu0 %v943
        %1305 = vmatpush1.msra.mxu0 %v942
        %1306 = vmatprep.subr.mxu0 %v945
        %1307 = vmatpush1.msra.mxu0 %v944
        %1308 = vmatprep.subr.mxu0 %v947
        %1309 = vmatpush1.msra.mxu0 %v946
        %1310 = vmatprep.subr.mxu0 %v949
        %1311 = vmatpush1.msra.mxu0 %v948
        %1312 = vmatprep.subr.mxu0 %v951
        %1313 = vmatpush1.msra.mxu0 %v950
        %1314 = vmatprep.subr.mxu0 %v953
        %1315 = vmatpush1.msra.mxu0 %v952
        %1316 = vmatprep.subr.mxu0 %v955
        %1317 = vmatpush1.msra.mxu0 %v954
        %1318 = vmatprep.subr.mxu0 %v957
        %1319 = vmatpush1.msra.mxu0 %v956
        %1320 = vmatprep.subr.mxu0 %v959
        %1321 = vmatpush1.msra.mxu0 %v958
        %1322 = vmatprep.subr.mxu0 %v961
        %1323 = vmatpush1.msra.mxu0 %v960
        %1324 = vmatprep.subr.mxu0 %v963
        %1325 = vmatpush1.msra.mxu0 %v962
        %1326 = vmatprep.mubr.f32.mxu0 %v512
        %1327 = vmatmul.mubr.f32.gmra.mrb[0].mxu0 %v511
        %v1328 = vpop.f32.mrb[0].mxu0
        %v1329 = vadd.f32 %v1186, %v1328
        %v1330 = vpop.f32.mrb[0].mxu0
        %v1331 = vadd.f32 %v1188, %v1330
        %1332 = vmatprep.mubr.f32.mxu0 %v518
        %1333 = vmatmul.mubr.f32.gmra.mrb[0].mxu0 %v517
        %v1334 = vpop.f32.mrb[0].mxu0
        %v1335 = vadd.f32 %v1192, %v1334
        %v1336 = vpop.f32.mrb[0].mxu0
        %v1337 = vadd.f32 %v1194, %v1336
        %1338 = vmatprep.mubr.f32.mxu0 %v524
        %1339 = vmatmul.mubr.f32.gmra.mrb[0].mxu0 %v523
        %v1340 = vpop.f32.mrb[0].mxu0
        %v1341 = vadd.f32 %v1198, %v1340
        %v1342 = vpop.f32.mrb[0].mxu0
        %v1343 = vadd.f32 %v1200, %v1342
        %1344 = vmatprep.mubr.f32.mxu0 %v530
        %1345 = vmatmul.mubr.f32.gmra.mrb[0].mxu0 %v529
        %v1346 = vpop.f32.mrb[0].mxu0
        %v1347 = vadd.f32 %v1204, %v1346
        %v1348 = vpop.f32.mrb[0].mxu0
        %v1349 = vadd.f32 %v1206, %v1348
        %1350 = vmatprep.mubr.f32.mxu0 %v536
        %1351 = vmatmul.mubr.f32.gmra.mrb[0].mxu0 %v535
        %v1352 = vpop.f32.mrb[0].mxu0
        %v1353 = vadd.f32 %v1210, %v1352
        %v1354 = vpop.f32.mrb[0].mxu0
        %v1355 = vadd.f32 %v1212, %v1354
        %1356 = vmatprep.mubr.f32.mxu0 %v542
        %1357 = vmatmul.mubr.f32.gmra.mrb[0].mxu0 %v541
        %v1358 = vpop.f32.mrb[0].mxu0
        %v1359 = vadd.f32 %v1216, %v1358
        %v1360 = vpop.f32.mrb[0].mxu0
        %v1361 = vadd.f32 %v1218, %v1360
        %1362 = vmatprep.mubr.f32.mxu0 %v548
        %1363 = vmatmul.mubr.f32.gmra.mrb[0].mxu0 %v547
        %v1364 = vpop.f32.mrb[0].mxu0
        %v1365 = vadd.f32 %v1222, %v1364
        %v1366 = vpop.f32.mrb[0].mxu0
        %v1367 = vadd.f32 %v1224, %v1366
        %1368 = vmatprep.mubr.f32.mxu0 %v554
        %1369 = vmatmul.mubr.f32.gmra.mrb[0].mxu0 %v553
        %v1370 = vpop.f32.mrb[0].mxu0
        %v1371 = vadd.f32 %v1228, %v1370
        %v1372 = vpop.f32.mrb[0].mxu0
        %v1373 = vadd.f32 %v1230, %v1372
        %1374 = vmatprep.mubr.f32.mxu0 %v560
        %1375 = vmatmul.mubr.f32.gmra.mrb[0].mxu0 %v559
        %v1376 = vpop.f32.mrb[0].mxu0
        %v1377 = vadd.f32 %v1234, %v1376
        %v1378 = vpop.f32.mrb[0].mxu0
        %v1379 = vadd.f32 %v1236, %v1378
        %1380 = vmatprep.mubr.f32.mxu0 %v566
        %1381 = vmatmul.mubr.f32.gmra.mrb[0].mxu0 %v565
        %v1382 = vpop.f32.mrb[0].mxu0
        %v1383 = vadd.f32 %v1240, %v1382
        %v1384 = vpop.f32.mrb[0].mxu0
        %v1385 = vadd.f32 %v1242, %v1384
        %1386 = vmatprep.mubr.f32.mxu0 %v572
        %1387 = vmatmul.mubr.f32.gmra.mrb[0].mxu0 %v571
        %v1388 = vpop.f32.mrb[0].mxu0
        %v1389 = vadd.f32 %v1246, %v1388
        %v1390 = vpop.f32.mrb[0].mxu0
        %v1391 = vadd.f32 %v1248, %v1390
        %1392 = vmatprep.mubr.f32.mxu0 %v578
        %1393 = vmatmul.mubr.f32.gmra.mrb[0].mxu0 %v577
        %v1394 = vpop.f32.mrb[0].mxu0
        %v1395 = vadd.f32 %v1252, %v1394
        %v1396 = vpop.f32.mrb[0].mxu0
        %v1397 = vadd.f32 %v1254, %v1396
        %1398 = vmatprep.mubr.f32.mxu0 %v584
        %1399 = vmatmul.mubr.f32.gmra.mrb[0].mxu0 %v583
        %v1400 = vpop.f32.mrb[0].mxu0
        %v1401 = vadd.f32 %v1258, %v1400
        %v1402 = vpop.f32.mrb[0].mxu0
        %v1403 = vadd.f32 %v1260, %v1402
        %1404 = vdwg.mxu0
        %v1405 = vadd.f32 %v1329, %v1331
        %1406 = vadd.xlane.f32.xlu0 %v1405
        %v1407 = vpop.xlane.xlu0 %1406
        %v1408 = vadd.f32 %v1335, %v1337
        %1409 = vadd.xlane.f32.xlu0 %v1408
        %v1410 = vpop.xlane.xlu0 %1409
        %v1411 = vadd.f32 %v1341, %v1343
        %1412 = vadd.xlane.f32.xlu0 %v1411
        %v1413 = vpop.xlane.xlu0 %1412
        %v1414 = vadd.f32 %v1347, %v1349
        %1415 = vadd.xlane.f32.xlu0 %v1414
        %v1416 = vpop.xlane.xlu0 %1415
        %v1417 = vadd.f32 %v1353, %v1355
        %1418 = vadd.xlane.f32.xlu0 %v1417
        %v1419 = vpop.xlane.xlu0 %1418
        %v1420 = vadd.f32 %v1359, %v1361
        %1421 = vadd.xlane.f32.xlu0 %v1420
        %v1422 = vpop.xlane.xlu0 %1421
        %v1423 = vadd.f32 %v1365, %v1367
        %1424 = vadd.xlane.f32.xlu0 %v1423
        %v1425 = vpop.xlane.xlu0 %1424
        %v1426 = vadd.f32 %v1371, %v1373
        %1427 = vadd.xlane.f32.xlu0 %v1426
        %v1428 = vpop.xlane.xlu0 %1427
        %v1429 = vadd.f32 %v1377, %v1379
        %1430 = vadd.xlane.f32.xlu0 %v1429
        %v1431 = vpop.xlane.xlu0 %1430
        %v1432 = vadd.f32 %v1383, %v1385
        %1433 = vadd.xlane.f32.xlu0 %v1432
        %v1434 = vpop.xlane.xlu0 %1433
        %v1435 = vadd.f32 %v1389, %v1391
        %1436 = vadd.xlane.f32.xlu0 %v1435
        %v1437 = vpop.xlane.xlu0 %1436
        %v1438 = vadd.f32 %v1395, %v1397
        %1439 = vadd.xlane.f32.xlu0 %v1438
        %v1440 = vpop.xlane.xlu0 %1439
        %v1441 = vadd.f32 %v1401, %v1403
        %1442 = vadd.xlane.f32.xlu0 %v1441
        %v1443 = vpop.xlane.xlu0 %1442
        %v1444 = vrcp.pop 256.0
        %v1445 = vmul.f32 %v1407, %v1444
        %v1446 = vmul.f32 %v1410, %v1444
        %v1447 = vmul.f32 %v1413, %v1444
        %v1448 = vmul.f32 %v1416, %v1444
        %v1449 = vmul.f32 %v1419, %v1444
        %v1450 = vmul.f32 %v1422, %v1444
        %v1451 = vmul.f32 %v1425, %v1444
        %v1452 = vmul.f32 %v1428, %v1444
        %v1453 = vmul.f32 %v1431, %v1444
        %v1454 = vmul.f32 %v1434, %v1444
        %v1455 = vmul.f32 %v1437, %v1444
        %v1456 = vmul.f32 %v1440, %v1444
        %v1457 = vmul.f32 %v1443, %v1444
        %v1458 = vsub.f32 %v1329, %v1445
        %v1459 = vsub.f32 %v1331, %v1445
        %v1460 = vsub.f32 %v1335, %v1446
        %v1461 = vsub.f32 %v1337, %v1446
        %v1462 = vsub.f32 %v1341, %v1447
        %v1463 = vsub.f32 %v1343, %v1447
        %v1464 = vsub.f32 %v1347, %v1448
        %v1465 = vsub.f32 %v1349, %v1448
        %v1466 = vsub.f32 %v1353, %v1449
        %v1467 = vsub.f32 %v1355, %v1449
        %v1468 = vsub.f32 %v1359, %v1450
        %v1469 = vsub.f32 %v1361, %v1450
        %v1470 = vsub.f32 %v1365, %v1451
        %v1471 = vsub.f32 %v1367, %v1451
        %v1472 = vsub.f32 %v1371, %v1452
        %v1473 = vsub.f32 %v1373, %v1452
        %v1474 = vsub.f32 %v1377, %v1453
        %v1475 = vsub.f32 %v1379, %v1453
        %v1476 = vsub.f32 %v1383, %v1454
        %v1477 = vsub.f32 %v1385, %v1454
        %v1478 = vsub.f32 %v1389, %v1455
        %v1479 = vsub.f32 %v1391, %v1455
        %v1480 = vsub.f32 %v1395, %v1456
        %v1481 = vsub.f32 %v1397, %v1456
        %v1482 = vsub.f32 %v1401, %v1457
        %v1483 = vsub.f32 %v1403, %v1457
        %v1484 = vmul.f32 %v1458, %v1458
        %v1485 = vmul.f32 %v1459, %v1459
        %v1486 = vmul.f32 %v1460, %v1460
        %v1487 = vmul.f32 %v1461, %v1461
        %v1488 = vmul.f32 %v1462, %v1462
        %v1489 = vmul.f32 %v1463, %v1463
        %v1490 = vmul.f32 %v1464, %v1464
        %v1491 = vmul.f32 %v1465, %v1465
        %v1492 = vmul.f32 %v1466, %v1466
        %v1493 = vmul.f32 %v1467, %v1467
        %v1494 = vmul.f32 %v1468, %v1468
        %v1495 = vmul.f32 %v1469, %v1469
        %v1496 = vmul.f32 %v1470, %v1470
        %v1497 = vmul.f32 %v1471, %v1471
        %v1498 = vmul.f32 %v1472, %v1472
        %v1499 = vmul.f32 %v1473, %v1473
        %v1500 = vmul.f32 %v1474, %v1474
        %v1501 = vmul.f32 %v1475, %v1475
        %v1502 = vmul.f32 %v1476, %v1476
        %v1503 = vmul.f32 %v1477, %v1477
        %v1504 = vmul.f32 %v1478, %v1478
        %v1505 = vmul.f32 %v1479, %v1479
        %v1506 = vmul.f32 %v1480, %v1480
        %v1507 = vmul.f32 %v1481, %v1481
        %v1508 = vmul.f32 %v1482, %v1482
        %v1509 = vmul.f32 %v1483, %v1483
        %v1510 = vadd.f32 %v1484, %v1485
        %1511 = vadd.xlane.f32.xlu0 %v1510
        %v1512 = vpop.xlane.xlu0 %1511
        %v1513 = vadd.f32 %v1486, %v1487
        %1514 = vadd.xlane.f32.xlu0 %v1513
        %v1515 = vpop.xlane.xlu0 %1514
        %v1516 = vadd.f32 %v1488, %v1489
        %1517 = vadd.xlane.f32.xlu0 %v1516
        %v1518 = vpop.xlane.xlu0 %1517
        %v1519 = vadd.f32 %v1490, %v1491
        %1520 = vadd.xlane.f32.xlu0 %v1519
        %v1521 = vpop.xlane.xlu0 %1520
        %v1522 = vadd.f32 %v1492, %v1493
        %1523 = vadd.xlane.f32.xlu0 %v1522
        %v1524 = vpop.xlane.xlu0 %1523
        %v1525 = vadd.f32 %v1494, %v1495
        %1526 = vadd.xlane.f32.xlu0 %v1525
        %v1527 = vpop.xlane.xlu0 %1526
        %v1528 = vadd.f32 %v1496, %v1497
        %1529 = vadd.xlane.f32.xlu0 %v1528
        %v1530 = vpop.xlane.xlu0 %1529
        %v1531 = vadd.f32 %v1498, %v1499
        %1532 = vadd.xlane.f32.xlu0 %v1531
        %v1533 = vpop.xlane.xlu0 %1532
        %v1534 = vadd.f32 %v1500, %v1501
        %1535 = vadd.xlane.f32.xlu0 %v1534
        %v1536 = vpop.xlane.xlu0 %1535
        %v1537 = vadd.f32 %v1502, %v1503
        %1538 = vadd.xlane.f32.xlu0 %v1537
        %v1539 = vpop.xlane.xlu0 %1538
        %v1540 = vadd.f32 %v1504, %v1505
        %1541 = vadd.xlane.f32.xlu0 %v1540
        %v1542 = vpop.xlane.xlu0 %1541
        %v1543 = vadd.f32 %v1506, %v1507
        %1544 = vadd.xlane.f32.xlu0 %v1543
        %v1545 = vpop.xlane.xlu0 %1544
        %v1546 = vadd.f32 %v1508, %v1509
        %1547 = vadd.xlane.f32.xlu0 %v1546
        %v1548 = vpop.xlane.xlu0 %1547
        %v1549 = vmul.f32 %v1512, %v1444
        %v1550 = vmul.f32 %v1515, %v1444
        %v1551 = vmul.f32 %v1518, %v1444
        %v1552 = vmul.f32 %v1521, %v1444
        %v1553 = vmul.f32 %v1524, %v1444
        %v1554 = vmul.f32 %v1527, %v1444
        %v1555 = vmul.f32 %v1530, %v1444
        %v1556 = vmul.f32 %v1533, %v1444
        %v1557 = vmul.f32 %v1536, %v1444
        %v1558 = vmul.f32 %v1539, %v1444
        %v1559 = vmul.f32 %v1542, %v1444
        %v1560 = vmul.f32 %v1545, %v1444
        %v1561 = vmul.f32 %v1548, %v1444
        %v1562 = vadd.f32 %v1549, 1e-05
        %v1563 = vadd.f32 %v1550, 1e-05
        %v1564 = vadd.f32 %v1551, 1e-05
        %v1565 = vadd.f32 %v1552, 1e-05
        %v1566 = vadd.f32 %v1553, 1e-05
        %v1567 = vadd.f32 %v1554, 1e-05
        %v1568 = vadd.f32 %v1555, 1e-05
        %v1569 = vadd.f32 %v1556, 1e-05
        %v1570 = vadd.f32 %v1557, 1e-05
        %v1571 = vadd.f32 %v1558, 1e-05
        %v1572 = vadd.f32 %v1559, 1e-05
        %v1573 = vadd.f32 %v1560, 1e-05
        %v1574 = vadd.f32 %v1561, 1e-05
        %v1575 = vrsqrt.pop %v1562
        %v1576 = vrsqrt.pop %v1563
        %v1577 = vrsqrt.pop %v1564
        %v1578 = vrsqrt.pop %v1565
        %v1579 = vrsqrt.pop %v1566
        %v1580 = vrsqrt.pop %v1567
        %v1581 = vrsqrt.pop %v1568
        %v1582 = vrsqrt.pop %v1569
        %v1583 = vrsqrt.pop %v1570
        %v1584 = vrsqrt.pop %v1571
        %v1585 = vrsqrt.pop %v1572
        %v1586 = vrsqrt.pop %v1573
        %v1587 = vrsqrt.pop %v1574
        %v1588 = vmul.f32 %v1458, %v1575
        %v1589 = vmul.f32 %v1459, %v1575
        %v1590 = vmul.f32 %v1460, %v1576
        %v1591 = vmul.f32 %v1461, %v1576
        %v1592 = vmul.f32 %v1462, %v1577
        %v1593 = vmul.f32 %v1463, %v1577
        %v1594 = vmul.f32 %v1464, %v1578
        %v1595 = vmul.f32 %v1465, %v1578
        %v1596 = vmul.f32 %v1466, %v1579
        %v1597 = vmul.f32 %v1467, %v1579
        %v1598 = vmul.f32 %v1468, %v1580
        %v1599 = vmul.f32 %v1469, %v1580
        %v1600 = vmul.f32 %v1470, %v1581
        %v1601 = vmul.f32 %v1471, %v1581
        %v1602 = vmul.f32 %v1472, %v1582
        %v1603 = vmul.f32 %v1473, %v1582
        %v1604 = vmul.f32 %v1474, %v1583
        %v1605 = vmul.f32 %v1475, %v1583
        %v1606 = vmul.f32 %v1476, %v1584
        %v1607 = vmul.f32 %v1477, %v1584
        %v1608 = vmul.f32 %v1478, %v1585
        %v1609 = vmul.f32 %v1479, %v1585
        %v1610 = vmul.f32 %v1480, %v1586
        %v1611 = vmul.f32 %v1481, %v1586
        %v1612 = vmul.f32 %v1482, %v1587
        %v1613 = vmul.f32 %v1483, %v1587
        %v1614 = vld [vmem:[#allocation14] sm:$0x3]
        %v1616 = vlaneseq
        %v1617 = vshrl.u32 %v1616, 7
        %v1618 = vsub.s32 0, %v1617
        %v1619 = vrot.slane %v1614, %v1618
        %v1620 = vlaneseq
        %v1621 = vshrl.u32 %v1620, 7
        %v1622 = vsub.s32 1, %v1621
        %v1623 = vrot.slane %v1614, %v1622
        %v1626 = vmul.f32 %v1588, %v1619
        %v1627 = vmul.f32 %v1589, %v1623
        %v1628 = vmul.f32 %v1590, %v1619
        %v1629 = vmul.f32 %v1591, %v1623
        %v1630 = vmul.f32 %v1592, %v1619
        %v1631 = vmul.f32 %v1593, %v1623
        %v1632 = vmul.f32 %v1594, %v1619
        %v1633 = vmul.f32 %v1595, %v1623
        %v1634 = vmul.f32 %v1596, %v1619
        %v1635 = vmul.f32 %v1597, %v1623
        %v1636 = vmul.f32 %v1598, %v1619
        %v1637 = vmul.f32 %v1599, %v1623
        %v1638 = vmul.f32 %v1600, %v1619
        %v1639 = vmul.f32 %v1601, %v1623
        %v1640 = vmul.f32 %v1602, %v1619
        %v1641 = vmul.f32 %v1603, %v1623
        %v1642 = vmul.f32 %v1604, %v1619
        %v1643 = vmul.f32 %v1605, %v1623
        %v1644 = vmul.f32 %v1606, %v1619
        %v1645 = vmul.f32 %v1607, %v1623
        %v1646 = vmul.f32 %v1608, %v1619
        %v1647 = vmul.f32 %v1609, %v1623
        %v1648 = vmul.f32 %v1610, %v1619
        %v1649 = vmul.f32 %v1611, %v1623
        %v1650 = vmul.f32 %v1612, %v1619
        %v1651 = vmul.f32 %v1613, %v1623
        %v1652 = vld [vmem:[#allocation16] sm:$0x3]
        %v1654 = vlaneseq
        %v1655 = vshrl.u32 %v1654, 7
        %v1656 = vsub.s32 0, %v1655
        %v1657 = vrot.slane %v1652, %v1656
        %v1658 = vlaneseq
        %v1659 = vshrl.u32 %v1658, 7
        %v1660 = vsub.s32 1, %v1659
        %v1661 = vrot.slane %v1652, %v1660
        %v1664 = vadd.f32 %v1626, %v1657
        %v1665 = vadd.f32 %v1627, %v1661
        %v1666 = vadd.f32 %v1628, %v1657
        %v1667 = vadd.f32 %v1629, %v1661
        %v1668 = vadd.f32 %v1630, %v1657
        %v1669 = vadd.f32 %v1631, %v1661
        %v1670 = vadd.f32 %v1632, %v1657
        %v1671 = vadd.f32 %v1633, %v1661
        %v1672 = vadd.f32 %v1634, %v1657
        %v1673 = vadd.f32 %v1635, %v1661
        %v1674 = vadd.f32 %v1636, %v1657
        %v1675 = vadd.f32 %v1637, %v1661
        %v1676 = vadd.f32 %v1638, %v1657
        %v1677 = vadd.f32 %v1639, %v1661
        %v1678 = vadd.f32 %v1640, %v1657
        %v1679 = vadd.f32 %v1641, %v1661
        %v1680 = vadd.f32 %v1642, %v1657
        %v1681 = vadd.f32 %v1643, %v1661
        %v1682 = vadd.f32 %v1644, %v1657
        %v1683 = vadd.f32 %v1645, %v1661
        %v1684 = vadd.f32 %v1646, %v1657
        %v1685 = vadd.f32 %v1647, %v1661
        %v1686 = vadd.f32 %v1648, %v1657
        %v1687 = vadd.f32 %v1649, %v1661
        %v1688 = vadd.f32 %v1650, %v1657
        %v1689 = vadd.f32 %v1651, %v1661
        %v1690 = vxor.u32 %v1664, 2147483648
        %v1691 = vxor.u32 %v1665, 2147483648
        %v1692 = vxor.u32 %v1666, 2147483648
        %v1693 = vxor.u32 %v1667, 2147483648
        %v1694 = vxor.u32 %v1668, 2147483648
        %v1695 = vxor.u32 %v1669, 2147483648
        %v1696 = vxor.u32 %v1670, 2147483648
        %v1697 = vxor.u32 %v1671, 2147483648
        %v1698 = vxor.u32 %v1672, 2147483648
        %v1699 = vxor.u32 %v1673, 2147483648
        %v1700 = vxor.u32 %v1674, 2147483648
        %v1701 = vxor.u32 %v1675, 2147483648
        %v1702 = vxor.u32 %v1676, 2147483648
        %v1703 = vxor.u32 %v1677, 2147483648
        %v1704 = vxor.u32 %v1678, 2147483648
        %v1705 = vxor.u32 %v1679, 2147483648
        %v1706 = vxor.u32 %v1680, 2147483648
        %v1707 = vxor.u32 %v1681, 2147483648
        %v1708 = vxor.u32 %v1682, 2147483648
        %v1709 = vxor.u32 %v1683, 2147483648
        %v1710 = vxor.u32 %v1684, 2147483648
        %v1711 = vxor.u32 %v1685, 2147483648
        %v1712 = vxor.u32 %v1686, 2147483648
        %v1713 = vxor.u32 %v1687, 2147483648
        %v1714 = vxor.u32 %v1688, 2147483648
        %v1715 = vxor.u32 %v1689, 2147483648
        %v1716 = vmul.f32 %v1690, 1.442695
        %v1717 = vpow.pop %v1716
        %v1718 = vmul.f32 %v1691, 1.442695
        %v1719 = vpow.pop %v1718
        %v1720 = vmul.f32 %v1692, 1.442695
        %v1721 = vpow.pop %v1720
        %v1722 = vmul.f32 %v1693, 1.442695
        %v1723 = vpow.pop %v1722
        %v1724 = vmul.f32 %v1694, 1.442695
        %v1725 = vpow.pop %v1724
        %v1726 = vmul.f32 %v1695, 1.442695
        %v1727 = vpow.pop %v1726
        %v1728 = vmul.f32 %v1696, 1.442695
        %v1729 = vpow.pop %v1728
        %v1730 = vmul.f32 %v1697, 1.442695
        %v1731 = vpow.pop %v1730
        %v1732 = vmul.f32 %v1698, 1.442695
        %v1733 = vpow.pop %v1732
        %v1734 = vmul.f32 %v1699, 1.442695
        %v1735 = vpow.pop %v1734
        %v1736 = vmul.f32 %v1700, 1.442695
        %v1737 = vpow.pop %v1736
        %v1738 = vmul.f32 %v1701, 1.442695
        %v1739 = vpow.pop %v1738
        %v1740 = vmul.f32 %v1702, 1.442695
        %v1741 = vpow.pop %v1740
        %v1742 = vmul.f32 %v1703, 1.442695
        %v1743 = vpow.pop %v1742
        %v1744 = vmul.f32 %v1704, 1.442695
        %v1745 = vpow.pop %v1744
        %v1746 = vmul.f32 %v1705, 1.442695
        %v1747 = vpow.pop %v1746
        %v1748 = vmul.f32 %v1706, 1.442695
        %v1749 = vpow.pop %v1748
        %v1750 = vmul.f32 %v1707, 1.442695
        %v1751 = vpow.pop %v1750
        %v1752 = vmul.f32 %v1708, 1.442695
        %v1753 = vpow.pop %v1752
        %v1754 = vmul.f32 %v1709, 1.442695
        %v1755 = vpow.pop %v1754
        %v1756 = vmul.f32 %v1710, 1.442695
        %v1757 = vpow.pop %v1756
        %v1758 = vmul.f32 %v1711, 1.442695
        %v1759 = vpow.pop %v1758
        %v1760 = vmul.f32 %v1712, 1.442695
        %v1761 = vpow.pop %v1760
        %v1762 = vmul.f32 %v1713, 1.442695
        %v1763 = vpow.pop %v1762
        %v1764 = vmul.f32 %v1714, 1.442695
        %v1765 = vpow.pop %v1764
        %v1766 = vmul.f32 %v1715, 1.442695
        %v1767 = vpow.pop %v1766
        %v1768 = vadd.f32 %v1717, 1.0
        %v1769 = vadd.f32 %v1719, 1.0
        %v1770 = vadd.f32 %v1721, 1.0
        %v1771 = vadd.f32 %v1723, 1.0
        %v1772 = vadd.f32 %v1725, 1.0
        %v1773 = vadd.f32 %v1727, 1.0
        %v1774 = vadd.f32 %v1729, 1.0
        %v1775 = vadd.f32 %v1731, 1.0
        %v1776 = vadd.f32 %v1733, 1.0
        %v1777 = vadd.f32 %v1735, 1.0
        %v1778 = vadd.f32 %v1737, 1.0
        %v1779 = vadd.f32 %v1739, 1.0
        %v1780 = vadd.f32 %v1741, 1.0
        %v1781 = vadd.f32 %v1743, 1.0
        %v1782 = vadd.f32 %v1745, 1.0
        %v1783 = vadd.f32 %v1747, 1.0
        %v1784 = vadd.f32 %v1749, 1.0
        %v1785 = vadd.f32 %v1751, 1.0
        %v1786 = vadd.f32 %v1753, 1.0
        %v1787 = vadd.f32 %v1755, 1.0
        %v1788 = vadd.f32 %v1757, 1.0
        %v1789 = vadd.f32 %v1759, 1.0
        %v1790 = vadd.f32 %v1761, 1.0
        %v1791 = vadd.f32 %v1763, 1.0
        %v1792 = vadd.f32 %v1765, 1.0
        %v1793 = vadd.f32 %v1767, 1.0
        %v1794 = vrcp.pop %v1768
        %v1795 = vmul.f32 1.0, %v1794
        %v1796 = vrcp.pop %v1769
        %v1797 = vmul.f32 1.0, %v1796
        %v1798 = vrcp.pop %v1770
        %v1799 = vmul.f32 1.0, %v1798
        %v1800 = vrcp.pop %v1771
        %v1801 = vmul.f32 1.0, %v1800
        %v1802 = vrcp.pop %v1772
        %v1803 = vmul.f32 1.0, %v1802
        %v1804 = vrcp.pop %v1773
        %v1805 = vmul.f32 1.0, %v1804
        %v1806 = vrcp.pop %v1774
        %v1807 = vmul.f32 1.0, %v1806
        %v1808 = vrcp.pop %v1775
        %v1809 = vmul.f32 1.0, %v1808
        %v1810 = vrcp.pop %v1776
        %v1811 = vmul.f32 1.0, %v1810
        %v1812 = vrcp.pop %v1777
        %v1813 = vmul.f32 1.0, %v1812
        %v1814 = vrcp.pop %v1778
        %v1815 = vmul.f32 1.0, %v1814
        %v1816 = vrcp.pop %v1779
        %v1817 = vmul.f32 1.0, %v1816
        %v1818 = vrcp.pop %v1780
        %v1819 = vmul.f32 1.0, %v1818
        %v1820 = vrcp.pop %v1781
        %v1821 = vmul.f32 1.0, %v1820
        %v1822 = vrcp.pop %v1782
        %v1823 = vmul.f32 1.0, %v1822
        %v1824 = vrcp.pop %v1783
        %v1825 = vmul.f32 1.0, %v1824
        %v1826 = vrcp.pop %v1784
        %v1827 = vmul.f32 1.0, %v1826
        %v1828 = vrcp.pop %v1785
        %v1829 = vmul.f32 1.0, %v1828
        %v1830 = vrcp.pop %v1786
        %v1831 = vmul.f32 1.0, %v1830
        %v1832 = vrcp.pop %v1787
        %v1833 = vmul.f32 1.0, %v1832
        %v1834 = vrcp.pop %v1788
        %v1835 = vmul.f32 1.0, %v1834
        %v1836 = vrcp.pop %v1789
        %v1837 = vmul.f32 1.0, %v1836
        %v1838 = vrcp.pop %v1790
        %v1839 = vmul.f32 1.0, %v1838
        %v1840 = vrcp.pop %v1791
        %v1841 = vmul.f32 1.0, %v1840
        %v1842 = vrcp.pop %v1792
        %v1843 = vmul.f32 1.0, %v1842
        %v1844 = vrcp.pop %v1793
        %v1845 = vmul.f32 1.0, %v1844
        %v1846 = vmul.f32 %v1795, 2.0
        %v1847 = vmul.f32 %v1797, 2.0
        %v1848 = vmul.f32 %v1799, 2.0
        %v1849 = vmul.f32 %v1801, 2.0
        %v1850 = vmul.f32 %v1803, 2.0
        %v1851 = vmul.f32 %v1805, 2.0
        %v1852 = vmul.f32 %v1807, 2.0
        %v1853 = vmul.f32 %v1809, 2.0
        %v1854 = vmul.f32 %v1811, 2.0
        %v1855 = vmul.f32 %v1813, 2.0
        %v1856 = vmul.f32 %v1815, 2.0
        %v1857 = vmul.f32 %v1817, 2.0
        %v1858 = vmul.f32 %v1819, 2.0
        %v1859 = vmul.f32 %v1821, 2.0
        %v1860 = vmul.f32 %v1823, 2.0
        %v1861 = vmul.f32 %v1825, 2.0
        %v1862 = vmul.f32 %v1827, 2.0
        %v1863 = vmul.f32 %v1829, 2.0
        %v1864 = vmul.f32 %v1831, 2.0
        %v1865 = vmul.f32 %v1833, 2.0
        %v1866 = vmul.f32 %v1835, 2.0
        %v1867 = vmul.f32 %v1837, 2.0
        %v1868 = vmul.f32 %v1839, 2.0
        %v1869 = vmul.f32 %v1841, 2.0
        %v1870 = vmul.f32 %v1843, 2.0
        %v1871 = vmul.f32 %v1845, 2.0
        %v1872 = vld [vmem:[#allocation10] sm:$0xff]
        %v1873 = vld [vmem:[#allocation10 + $0x8] sm:$0xff]
        %v1874 = vld [vmem:[#allocation10 + $0x10] sm:$0xff]
        %v1875 = vld [vmem:[#allocation10 + $0x18] sm:$0xff]
        %v1876 = vld [vmem:[#allocation10 + $0x20] sm:$0xff]
        %v1877 = vld [vmem:[#allocation10 + $0x28] sm:$0xff]
        %v1878 = vld [vmem:[#allocation10 + $0x30] sm:$0xff]
        %v1879 = vld [vmem:[#allocation10 + $0x38] sm:$0xff]
        %v1880 = vld [vmem:[#allocation10 + $0x40] sm:$0xff]
        %v1881 = vld [vmem:[#allocation10 + $0x48] sm:$0xff]
        %v1882 = vld [vmem:[#allocation10 + $0x50] sm:$0xff]
        %v1883 = vld [vmem:[#allocation10 + $0x58] sm:$0xff]
        %v1884 = vld [vmem:[#allocation10 + $0x60] sm:$0xff]
        %v1885 = vld [vmem:[#allocation10 + $0x68] sm:$0xff]
        %v1886 = vld [vmem:[#allocation10 + $0x70] sm:$0xff]
        %v1887 = vld [vmem:[#allocation10 + $0x78] sm:$0xff]
        %v1888 = vld [vmem:[#allocation10 + $0x80] sm:$0xff]
        %v1889 = vld [vmem:[#allocation10 + $0x88] sm:$0xff]
        %v1890 = vld [vmem:[#allocation10 + $0x90] sm:$0xff]
        %v1891 = vld [vmem:[#allocation10 + $0x98] sm:$0xff]
        %v1892 = vld [vmem:[#allocation10 + $0xa0] sm:$0xff]
        %v1893 = vld [vmem:[#allocation10 + $0xa8] sm:$0xff]
        %v1894 = vld [vmem:[#allocation10 + $0xb0] sm:$0xff]
        %v1895 = vld [vmem:[#allocation10 + $0xb8] sm:$0xff]
        %v1896 = vld [vmem:[#allocation10 + $0xc0] sm:$0xff]
        %v1897 = vld [vmem:[#allocation10 + $0xc8] sm:$0xff]
        %v1898 = vld [vmem:[#allocation10 + $0xd0] sm:$0xff]
        %v1899 = vld [vmem:[#allocation10 + $0xd8] sm:$0xff]
        %v1900 = vld [vmem:[#allocation10 + $0xe0] sm:$0xff]
        %v1901 = vld [vmem:[#allocation10 + $0xe8] sm:$0xff]
        %v1902 = vld [vmem:[#allocation10 + $0xf0] sm:$0xff]
        %v1903 = vld [vmem:[#allocation10 + $0xf8] sm:$0xff]
        %1904 = vmatprep.subr.mxu0 %v1873
        %1905 = vmatpush1.msra.mxu0 %v1872
        %1906 = vmatprep.subr.mxu0 %v1875
        %1907 = vmatpush1.msra.mxu0 %v1874
        %1908 = vmatprep.subr.mxu0 %v1877
        %1909 = vmatpush1.msra.mxu0 %v1876
        %1910 = vmatprep.subr.mxu0 %v1879
        %1911 = vmatpush1.msra.mxu0 %v1878
        %1912 = vmatprep.subr.mxu0 %v1881
        %1913 = vmatpush1.msra.mxu0 %v1880
        %1914 = vmatprep.subr.mxu0 %v1883
        %1915 = vmatpush1.msra.mxu0 %v1882
        %1916 = vmatprep.subr.mxu0 %v1885
        %1917 = vmatpush1.msra.mxu0 %v1884
        %1918 = vmatprep.subr.mxu0 %v1887
        %1919 = vmatpush1.msra.mxu0 %v1886
        %1920 = vmatprep.subr.mxu0 %v1889
        %1921 = vmatpush1.msra.mxu0 %v1888
        %1922 = vmatprep.subr.mxu0 %v1891
        %1923 = vmatpush1.msra.mxu0 %v1890
        %1924 = vmatprep.subr.mxu0 %v1893
        %1925 = vmatpush1.msra.mxu0 %v1892
        %1926 = vmatprep.subr.mxu0 %v1895
        %1927 = vmatpush1.msra.mxu0 %v1894
        %1928 = vmatprep.subr.mxu0 %v1897
        %1929 = vmatpush1.msra.mxu0 %v1896
        %1930 = vmatprep.subr.mxu0 %v1899
        %1931 = vmatpush1.msra.mxu0 %v1898
        %1932 = vmatprep.subr.mxu0 %v1901
        %1933 = vmatpush1.msra.mxu0 %v1900
        %1934 = vmatprep.subr.mxu0 %v1903
        %1935 = vmatpush1.msra.mxu0 %v1902
        %1936 = vmatprep.subr.mxu0 0.0
        %1937 = vmatpush1.msra.mxu0 0.0
        %1938 = vmatprep.subr.mxu0 0.0
        %1939 = vmatpush1.msra.mxu0 0.0
        %1940 = vmatprep.subr.mxu0 0.0
        %1941 = vmatpush1.msra.mxu0 0.0
        %1942 = vmatprep.subr.mxu0 0.0
        %1943 = vmatpush1.msra.mxu0 0.0
        %1944 = vmatprep.subr.mxu0 0.0
        %1945 = vmatpush1.msra.mxu0 0.0
        %1946 = vmatprep.subr.mxu0 0.0
        %1947 = vmatpush1.msra.mxu0 0.0
        %1948 = vmatprep.subr.mxu0 0.0
        %1949 = vmatpush1.msra.mxu0 0.0
        %1950 = vmatprep.subr.mxu0 0.0
        %1951 = vmatpush1.msra.mxu0 0.0
        %1952 = vmatprep.subr.mxu0 0.0
        %1953 = vmatpush1.msra.mxu0 0.0
        %1954 = vmatprep.subr.mxu0 0.0
        %1955 = vmatpush1.msra.mxu0 0.0
        %1956 = vmatprep.subr.mxu0 0.0
        %1957 = vmatpush1.msra.mxu0 0.0
        %1958 = vmatprep.subr.mxu0 0.0
        %1959 = vmatpush1.msra.mxu0 0.0
        %1960 = vmatprep.subr.mxu0 0.0
        %1961 = vmatpush1.msra.mxu0 0.0
        %1962 = vmatprep.subr.mxu0 0.0
        %1963 = vmatpush1.msra.mxu0 0.0
        %1964 = vmatprep.subr.mxu0 0.0
        %1965 = vmatpush1.msra.mxu0 0.0
        %1966 = vmatprep.subr.mxu0 0.0
        %1967 = vmatpush1.msra.mxu0 0.0
        %1968 = vmatprep.mubr.f32.mxu0 0.0
        %1969 = vmatmul.mubr.f32.gmra.mrb[0].mxu0 %v494
        %v1970 = vpop.f32.mrb[0].mxu0
        %v1971 = vadd.f32 %v622, %v1970
        %v1972 = vpop.f32.mrb[0].mxu0
        %v1973 = vadd.f32 %v626, %v1972
        %1974 = vmatprep.mubr.f32.mxu0 0.0
        %1975 = vmatmul.mubr.f32.gmra.mrb[0].mxu0 %v495
        %v1976 = vpop.f32.mrb[0].mxu0
        %v1977 = vadd.f32 %v622, %v1976
        %v1978 = vpop.f32.mrb[0].mxu0
        %v1979 = vadd.f32 %v626, %v1978
        %1980 = vmatprep.mubr.f32.mxu0 0.0
        %1981 = vmatmul.mubr.f32.gmra.mrb[0].mxu0 %v496
        %v1982 = vpop.f32.mrb[0].mxu0
        %v1983 = vadd.f32 %v622, %v1982
        %v1984 = vpop.f32.mrb[0].mxu0
        %v1985 = vadd.f32 %v626, %v1984
        %1986 = vmatprep.mubr.f32.mxu0 0.0
        %1987 = vmatmul.mubr.f32.gmra.mrb[0].mxu0 %v497
        %v1988 = vpop.f32.mrb[0].mxu0
        %v1989 = vadd.f32 %v622, %v1988
        %v1990 = vpop.f32.mrb[0].mxu0
        %v1991 = vadd.f32 %v626, %v1990
        %1992 = vmatprep.mubr.f32.mxu0 0.0
        %1993 = vmatmul.mubr.f32.gmra.mrb[0].mxu0 %v498
        %v1994 = vpop.f32.mrb[0].mxu0
        %v1995 = vadd.f32 %v622, %v1994
        %v1996 = vpop.f32.mrb[0].mxu0
        %v1997 = vadd.f32 %v626, %v1996
        %1998 = vmatprep.mubr.f32.mxu0 0.0
        %1999 = vmatmul.mubr.f32.gmra.mrb[0].mxu0 %v499
        %v2000 = vpop.f32.mrb[0].mxu0
        %v2001 = vadd.f32 %v622, %v2000
        %v2002 = vpop.f32.mrb[0].mxu0
        %v2003 = vadd.f32 %v626, %v2002
        %2004 = vmatprep.mubr.f32.mxu0 0.0
        %2005 = vmatmul.mubr.f32.gmra.mrb[0].mxu0 %v500
        %v2006 = vpop.f32.mrb[0].mxu0
        %v2007 = vadd.f32 %v622, %v2006
        %v2008 = vpop.f32.mrb[0].mxu0
        %v2009 = vadd.f32 %v626, %v2008
        %2010 = vmatprep.mubr.f32.mxu0 0.0
        %2011 = vmatmul.mubr.f32.gmra.mrb[0].mxu0 %v501
        %v2012 = vpop.f32.mrb[0].mxu0
        %v2013 = vadd.f32 %v622, %v2012
        %v2014 = vpop.f32.mrb[0].mxu0
        %v2015 = vadd.f32 %v626, %v2014
        %2016 = vmatprep.mubr.f32.mxu0 0.0
        %2017 = vmatmul.mubr.f32.gmra.mrb[0].mxu0 %v502
        %v2018 = vpop.f32.mrb[0].mxu0
        %v2019 = vadd.f32 %v622, %v2018
        %v2020 = vpop.f32.mrb[0].mxu0
        %v2021 = vadd.f32 %v626, %v2020
        %2022 = vmatprep.mubr.f32.mxu0 0.0
        %2023 = vmatmul.mubr.f32.gmra.mrb[0].mxu0 %v503
        %v2024 = vpop.f32.mrb[0].mxu0
        %v2025 = vadd.f32 %v622, %v2024
        %v2026 = vpop.f32.mrb[0].mxu0
        %v2027 = vadd.f32 %v626, %v2026
        %2028 = vmatprep.mubr.f32.mxu0 0.0
        %2029 = vmatmul.mubr.f32.gmra.mrb[0].mxu0 %v504
        %v2030 = vpop.f32.mrb[0].mxu0
        %v2031 = vadd.f32 %v622, %v2030
        %v2032 = vpop.f32.mrb[0].mxu0
        %v2033 = vadd.f32 %v626, %v2032
        %2034 = vmatprep.mubr.f32.mxu0 0.0
        %2035 = vmatmul.mubr.f32.gmra.mrb[0].mxu0 %v505
        %v2036 = vpop.f32.mrb[0].mxu0
        %v2037 = vadd.f32 %v622, %v2036
        %v2038 = vpop.f32.mrb[0].mxu0
        %v2039 = vadd.f32 %v626, %v2038
        %2040 = vmatprep.mubr.f32.mxu0 0.0
        %2041 = vmatmul.mubr.f32.gmra.mrb[0].mxu0 %v506
        %v2042 = vpop.f32.mrb[0].mxu0
        %v2043 = vadd.f32 %v622, %v2042
        %v2044 = vpop.f32.mrb[0].mxu0
        %v2045 = vadd.f32 %v626, %v2044
        %2046 = vdwg.mxu0
        %v2047 = vmul.f32 %v1846, %v1971
        %v2048 = vmul.f32 %v1847, %v1973
        %v2049 = vmul.f32 %v1848, %v1977
        %v2050 = vmul.f32 %v1849, %v1979
        %v2051 = vmul.f32 %v1850, %v1983
        %v2052 = vmul.f32 %v1851, %v1985
        %v2053 = vmul.f32 %v1852, %v1989
        %v2054 = vmul.f32 %v1853, %v1991
        %v2055 = vmul.f32 %v1854, %v1995
        %v2056 = vmul.f32 %v1855, %v1997
        %v2057 = vmul.f32 %v1856, %v2001
        %v2058 = vmul.f32 %v1857, %v2003
        %v2059 = vmul.f32 %v1858, %v2007
        %v2060 = vmul.f32 %v1859, %v2009
        %v2061 = vmul.f32 %v1860, %v2013
        %v2062 = vmul.f32 %v1861, %v2015
        %v2063 = vmul.f32 %v1862, %v2019
        %v2064 = vmul.f32 %v1863, %v2021
        %v2065 = vmul.f32 %v1864, %v2025
        %v2066 = vmul.f32 %v1865, %v2027
        %v2067 = vmul.f32 %v1866, %v2031
        %v2068 = vmul.f32 %v1867, %v2033
        %v2069 = vmul.f32 %v1868, %v2037
        %v2070 = vmul.f32 %v1869, %v2039
        %v2071 = vmul.f32 %v1870, %v2043
        %v2072 = vmul.f32 %v1871, %v2045
        %v2073 = vadd.f32 %v696, %v2047
        %v2074 = vadd.f32 %v698, %v2048
        %v2075 = vadd.f32 %v702, %v2049
        %v2076 = vadd.f32 %v704, %v2050
        %v2077 = vadd.f32 %v708, %v2051
        %v2078 = vadd.f32 %v710, %v2052
        %v2079 = vadd.f32 %v714, %v2053
        %v2080 = vadd.f32 %v716, %v2054
        %v2081 = vadd.f32 %v720, %v2055
        %v2082 = vadd.f32 %v722, %v2056
        %v2083 = vadd.f32 %v726, %v2057
        %v2084 = vadd.f32 %v728, %v2058
        %v2085 = vadd.f32 %v732, %v2059
        %v2086 = vadd.f32 %v734, %v2060
        %v2087 = vadd.f32 %v738, %v2061
        %v2088 = vadd.f32 %v740, %v2062
        %v2089 = vadd.f32 %v744, %v2063
        %v2090 = vadd.f32 %v746, %v2064
        %v2091 = vadd.f32 %v750, %v2065
        %v2092 = vadd.f32 %v752, %v2066
        %v2093 = vadd.f32 %v756, %v2067
        %v2094 = vadd.f32 %v758, %v2068
        %v2095 = vadd.f32 %v762, %v2069
        %v2096 = vadd.f32 %v764, %v2070
        %v2097 = vadd.f32 %v768, %v2071
        %v2098 = vadd.f32 %v770, %v2072
        %s2099 = scalar_lea.vmem [#allocation11], 1536
        %v2100 = vld [vmem:[%s2099] sm:$0xff]
        %v2101 = vld [vmem:[%s2099 + $0x8] sm:$0xff]
        %v2102 = vld [vmem:[%s2099 + $0x10] sm:$0xff]
        %v2103 = vld [vmem:[%s2099 + $0x18] sm:$0xff]
        %v2104 = vld [vmem:[%s2099 + $0x20] sm:$0xff]
        %v2105 = vld [vmem:[%s2099 + $0x28] sm:$0xff]
        %v2106 = vld [vmem:[%s2099 + $0x30] sm:$0xff]
        %v2107 = vld [vmem:[%s2099 + $0x38] sm:$0xff]
        %v2108 = vld [vmem:[%s2099 + $0x40] sm:$0xff]
        %v2109 = vld [vmem:[%s2099 + $0x48] sm:$0xff]
        %v2110 = vld [vmem:[%s2099 + $0x50] sm:$0xff]
        %v2111 = vld [vmem:[%s2099 + $0x58] sm:$0xff]
        %v2112 = vld [vmem:[%s2099 + $0x60] sm:$0xff]
        %v2113 = vld [vmem:[%s2099 + $0x68] sm:$0xff]
        %v2114 = vld [vmem:[%s2099 + $0x70] sm:$0xff]
        %v2115 = vld [vmem:[%s2099 + $0x78] sm:$0xff]
        %v2116 = vld [vmem:[%s2099 + $0x80] sm:$0xff]
        %v2117 = vld [vmem:[%s2099 + $0x88] sm:$0xff]
        %v2118 = vld [vmem:[%s2099 + $0x90] sm:$0xff]
        %v2119 = vld [vmem:[%s2099 + $0x98] sm:$0xff]
        %v2120 = vld [vmem:[%s2099 + $0xa0] sm:$0xff]
        %v2121 = vld [vmem:[%s2099 + $0xa8] sm:$0xff]
        %v2122 = vld [vmem:[%s2099 + $0xb0] sm:$0xff]
        %v2123 = vld [vmem:[%s2099 + $0xb8] sm:$0xff]
        %v2124 = vld [vmem:[%s2099 + $0xc0] sm:$0xff]
        %v2125 = vld [vmem:[%s2099 + $0xc8] sm:$0xff]
        %v2126 = vld [vmem:[%s2099 + $0xd0] sm:$0xff]
        %v2127 = vld [vmem:[%s2099 + $0xd8] sm:$0xff]
        %v2128 = vld [vmem:[%s2099 + $0xe0] sm:$0xff]
        %v2129 = vld [vmem:[%s2099 + $0xe8] sm:$0xff]
        %v2130 = vld [vmem:[%s2099 + $0xf0] sm:$0xff]
        %v2131 = vld [vmem:[%s2099 + $0xf8] sm:$0xff]
        %v2132 = vld [vmem:[%s2099 + $0x100] sm:$0xff]
        %v2133 = vld [vmem:[%s2099 + $0x108] sm:$0xff]
        %v2134 = vld [vmem:[%s2099 + $0x110] sm:$0xff]
        %v2135 = vld [vmem:[%s2099 + $0x118] sm:$0xff]
        %v2136 = vld [vmem:[%s2099 + $0x120] sm:$0xff]
        %v2137 = vld [vmem:[%s2099 + $0x128] sm:$0xff]
        %v2138 = vld [vmem:[%s2099 + $0x130] sm:$0xff]
        %v2139 = vld [vmem:[%s2099 + $0x138] sm:$0xff]
        %v2140 = vld [vmem:[%s2099 + $0x140] sm:$0xff]
        %v2141 = vld [vmem:[%s2099 + $0x148] sm:$0xff]
        %v2142 = vld [vmem:[%s2099 + $0x150] sm:$0xff]
        %v2143 = vld [vmem:[%s2099 + $0x158] sm:$0xff]
        %v2144 = vld [vmem:[%s2099 + $0x160] sm:$0xff]
        %v2145 = vld [vmem:[%s2099 + $0x168] sm:$0xff]
        %v2146 = vld [vmem:[%s2099 + $0x170] sm:$0xff]
        %v2147 = vld [vmem:[%s2099 + $0x178] sm:$0xff]
        %v2148 = vld [vmem:[%s2099 + $0x180] sm:$0xff]
        %v2149 = vld [vmem:[%s2099 + $0x188] sm:$0xff]
        %v2150 = vld [vmem:[%s2099 + $0x190] sm:$0xff]
        %v2151 = vld [vmem:[%s2099 + $0x198] sm:$0xff]
        %v2152 = vld [vmem:[%s2099 + $0x1a0] sm:$0xff]
        %v2153 = vld [vmem:[%s2099 + $0x1a8] sm:$0xff]
        %v2154 = vld [vmem:[%s2099 + $0x1b0] sm:$0xff]
        %v2155 = vld [vmem:[%s2099 + $0x1b8] sm:$0xff]
        %v2156 = vld [vmem:[%s2099 + $0x1c0] sm:$0xff]
        %v2157 = vld [vmem:[%s2099 + $0x1c8] sm:$0xff]
        %v2158 = vld [vmem:[%s2099 + $0x1d0] sm:$0xff]
        %v2159 = vld [vmem:[%s2099 + $0x1d8] sm:$0xff]
        %v2160 = vld [vmem:[%s2099 + $0x1e0] sm:$0xff]
        %v2161 = vld [vmem:[%s2099 + $0x1e8] sm:$0xff]
        %v2162 = vld [vmem:[%s2099 + $0x1f0] sm:$0xff]
        %v2163 = vld [vmem:[%s2099 + $0x1f8] sm:$0xff]
        %v2164 = vld [vmem:[%s2099 + $0x200] sm:$0xff]
        %v2165 = vld [vmem:[%s2099 + $0x208] sm:$0xff]
        %v2166 = vld [vmem:[%s2099 + $0x210] sm:$0xff]
        %v2167 = vld [vmem:[%s2099 + $0x218] sm:$0xff]
        %v2168 = vld [vmem:[%s2099 + $0x220] sm:$0xff]
        %v2169 = vld [vmem:[%s2099 + $0x228] sm:$0xff]
        %v2170 = vld [vmem:[%s2099 + $0x230] sm:$0xff]
        %v2171 = vld [vmem:[%s2099 + $0x238] sm:$0xff]
        %v2172 = vld [vmem:[%s2099 + $0x240] sm:$0xff]
        %v2173 = vld [vmem:[%s2099 + $0x248] sm:$0xff]
        %v2174 = vld [vmem:[%s2099 + $0x250] sm:$0xff]
        %v2175 = vld [vmem:[%s2099 + $0x258] sm:$0xff]
        %v2176 = vld [vmem:[%s2099 + $0x260] sm:$0xff]
        %v2177 = vld [vmem:[%s2099 + $0x268] sm:$0xff]
        %v2178 = vld [vmem:[%s2099 + $0x270] sm:$0xff]
        %v2179 = vld [vmem:[%s2099 + $0x278] sm:$0xff]
        %v2180 = vld [vmem:[%s2099 + $0x280] sm:$0xff]
        %v2181 = vld [vmem:[%s2099 + $0x288] sm:$0xff]
        %v2182 = vld [vmem:[%s2099 + $0x290] sm:$0xff]
        %v2183 = vld [vmem:[%s2099 + $0x298] sm:$0xff]
        %v2184 = vld [vmem:[%s2099 + $0x2a0] sm:$0xff]
        %v2185 = vld [vmem:[%s2099 + $0x2a8] sm:$0xff]
        %v2186 = vld [vmem:[%s2099 + $0x2b0] sm:$0xff]
        %v2187 = vld [vmem:[%s2099 + $0x2b8] sm:$0xff]
        %v2188 = vld [vmem:[%s2099 + $0x2c0] sm:$0xff]
        %v2189 = vld [vmem:[%s2099 + $0x2c8] sm:$0xff]
        %v2190 = vld [vmem:[%s2099 + $0x2d0] sm:$0xff]
        %v2191 = vld [vmem:[%s2099 + $0x2d8] sm:$0xff]
        %v2192 = vld [vmem:[%s2099 + $0x2e0] sm:$0xff]
        %v2193 = vld [vmem:[%s2099 + $0x2e8] sm:$0xff]
        %v2194 = vld [vmem:[%s2099 + $0x2f0] sm:$0xff]
        %v2195 = vld [vmem:[%s2099 + $0x2f8] sm:$0xff]
        %v2196 = vld [vmem:[%s2099 + $0x300] sm:$0xff]
        %v2197 = vld [vmem:[%s2099 + $0x308] sm:$0xff]
        %v2198 = vld [vmem:[%s2099 + $0x310] sm:$0xff]
        %v2199 = vld [vmem:[%s2099 + $0x318] sm:$0xff]
        %v2200 = vld [vmem:[%s2099 + $0x320] sm:$0xff]
        %v2201 = vld [vmem:[%s2099 + $0x328] sm:$0xff]
        %v2202 = vld [vmem:[%s2099 + $0x330] sm:$0xff]
        %v2203 = vld [vmem:[%s2099 + $0x338] sm:$0xff]
        %v2204 = vld [vmem:[%s2099 + $0x340] sm:$0xff]
        %v2205 = vld [vmem:[%s2099 + $0x348] sm:$0xff]
        %v2206 = vld [vmem:[%s2099 + $0x350] sm:$0xff]
        %v2207 = vld [vmem:[%s2099 + $0x358] sm:$0xff]
        %v2208 = vld [vmem:[%s2099 + $0x360] sm:$0xff]
        %v2209 = vld [vmem:[%s2099 + $0x368] sm:$0xff]
        %v2210 = vld [vmem:[%s2099 + $0x370] sm:$0xff]
        %v2211 = vld [vmem:[%s2099 + $0x378] sm:$0xff]
        %v2212 = vld [vmem:[%s2099 + $0x380] sm:$0xff]
        %v2213 = vld [vmem:[%s2099 + $0x388] sm:$0xff]
        %v2214 = vld [vmem:[%s2099 + $0x390] sm:$0xff]
        %v2215 = vld [vmem:[%s2099 + $0x398] sm:$0xff]
        %v2216 = vld [vmem:[%s2099 + $0x3a0] sm:$0xff]
        %v2217 = vld [vmem:[%s2099 + $0x3a8] sm:$0xff]
        %v2218 = vld [vmem:[%s2099 + $0x3b0] sm:$0xff]
        %v2219 = vld [vmem:[%s2099 + $0x3b8] sm:$0xff]
        %v2220 = vld [vmem:[%s2099 + $0x3c0] sm:$0xff]
        %v2221 = vld [vmem:[%s2099 + $0x3c8] sm:$0xff]
        %v2222 = vld [vmem:[%s2099 + $0x3d0] sm:$0xff]
        %v2223 = vld [vmem:[%s2099 + $0x3d8] sm:$0xff]
        %v2224 = vld [vmem:[%s2099 + $0x3e0] sm:$0xff]
        %v2225 = vld [vmem:[%s2099 + $0x3e8] sm:$0xff]
        %v2226 = vld [vmem:[%s2099 + $0x3f0] sm:$0xff]
        %v2227 = vld [vmem:[%s2099 + $0x3f8] sm:$0xff]
        %v2228 = vld [vmem:[%s2099 + $0x400] sm:$0xff]
        %v2229 = vld [vmem:[%s2099 + $0x408] sm:$0xff]
        %v2230 = vld [vmem:[%s2099 + $0x410] sm:$0xff]
        %v2231 = vld [vmem:[%s2099 + $0x418] sm:$0xff]
        %v2232 = vld [vmem:[%s2099 + $0x420] sm:$0xff]
        %v2233 = vld [vmem:[%s2099 + $0x428] sm:$0xff]
        %v2234 = vld [vmem:[%s2099 + $0x430] sm:$0xff]
        %v2235 = vld [vmem:[%s2099 + $0x438] sm:$0xff]
        %v2236 = vld [vmem:[%s2099 + $0x440] sm:$0xff]
        %v2237 = vld [vmem:[%s2099 + $0x448] sm:$0xff]
        %v2238 = vld [vmem:[%s2099 + $0x450] sm:$0xff]
        %v2239 = vld [vmem:[%s2099 + $0x458] sm:$0xff]
        %v2240 = vld [vmem:[%s2099 + $0x460] sm:$0xff]
        %v2241 = vld [vmem:[%s2099 + $0x468] sm:$0xff]
        %v2242 = vld [vmem:[%s2099 + $0x470] sm:$0xff]
        %v2243 = vld [vmem:[%s2099 + $0x478] sm:$0xff]
        %v2244 = vld [vmem:[%s2099 + $0x480] sm:$0xff]
        %v2245 = vld [vmem:[%s2099 + $0x488] sm:$0xff]
        %v2246 = vld [vmem:[%s2099 + $0x490] sm:$0xff]
        %v2247 = vld [vmem:[%s2099 + $0x498] sm:$0xff]
        %v2248 = vld [vmem:[%s2099 + $0x4a0] sm:$0xff]
        %v2249 = vld [vmem:[%s2099 + $0x4a8] sm:$0xff]
        %v2250 = vld [vmem:[%s2099 + $0x4b0] sm:$0xff]
        %v2251 = vld [vmem:[%s2099 + $0x4b8] sm:$0xff]
        %v2252 = vld [vmem:[%s2099 + $0x4c0] sm:$0xff]
        %v2253 = vld [vmem:[%s2099 + $0x4c8] sm:$0xff]
        %v2254 = vld [vmem:[%s2099 + $0x4d0] sm:$0xff]
        %v2255 = vld [vmem:[%s2099 + $0x4d8] sm:$0xff]
        %v2256 = vld [vmem:[%s2099 + $0x4e0] sm:$0xff]
        %v2257 = vld [vmem:[%s2099 + $0x4e8] sm:$0xff]
        %v2258 = vld [vmem:[%s2099 + $0x4f0] sm:$0xff]
        %v2259 = vld [vmem:[%s2099 + $0x4f8] sm:$0xff]
        %v2260 = vld [vmem:[%s2099 + $0x500] sm:$0xff]
        %v2261 = vld [vmem:[%s2099 + $0x508] sm:$0xff]
        %v2262 = vld [vmem:[%s2099 + $0x510] sm:$0xff]
        %v2263 = vld [vmem:[%s2099 + $0x518] sm:$0xff]
        %v2264 = vld [vmem:[%s2099 + $0x520] sm:$0xff]
        %v2265 = vld [vmem:[%s2099 + $0x528] sm:$0xff]
        %v2266 = vld [vmem:[%s2099 + $0x530] sm:$0xff]
        %v2267 = vld [vmem:[%s2099 + $0x538] sm:$0xff]
        %v2268 = vld [vmem:[%s2099 + $0x540] sm:$0xff]
        %v2269 = vld [vmem:[%s2099 + $0x548] sm:$0xff]
        %v2270 = vld [vmem:[%s2099 + $0x550] sm:$0xff]
        %v2271 = vld [vmem:[%s2099 + $0x558] sm:$0xff]
        %v2272 = vld [vmem:[%s2099 + $0x560] sm:$0xff]
        %v2273 = vld [vmem:[%s2099 + $0x568] sm:$0xff]
        %v2274 = vld [vmem:[%s2099 + $0x570] sm:$0xff]
        %v2275 = vld [vmem:[%s2099 + $0x578] sm:$0xff]
        %v2276 = vld [vmem:[%s2099 + $0x580] sm:$0xff]
        %v2277 = vld [vmem:[%s2099 + $0x588] sm:$0xff]
        %v2278 = vld [vmem:[%s2099 + $0x590] sm:$0xff]
        %v2279 = vld [vmem:[%s2099 + $0x598] sm:$0xff]
        %v2280 = vld [vmem:[%s2099 + $0x5a0] sm:$0xff]
        %v2281 = vld [vmem:[%s2099 + $0x5a8] sm:$0xff]
        %v2282 = vld [vmem:[%s2099 + $0x5b0] sm:$0xff]
        %v2283 = vld [vmem:[%s2099 + $0x5b8] sm:$0xff]
        %v2284 = vld [vmem:[%s2099 + $0x5c0] sm:$0xff]
        %v2285 = vld [vmem:[%s2099 + $0x5c8] sm:$0xff]
        %v2286 = vld [vmem:[%s2099 + $0x5d0] sm:$0xff]
        %v2287 = vld [vmem:[%s2099 + $0x5d8] sm:$0xff]
        %v2288 = vld [vmem:[%s2099 + $0x5e0] sm:$0xff]
        %v2289 = vld [vmem:[%s2099 + $0x5e8] sm:$0xff]
        %v2290 = vld [vmem:[%s2099 + $0x5f0] sm:$0xff]
        %v2291 = vld [vmem:[%s2099 + $0x5f8] sm:$0xff]
        %s2292 = scalar_lea.vmem [#allocation13], 2
        %v2293 = vld [vmem:[%s2292] sm:$0x3]
        %v2295 = vlaneseq
        %v2296 = vshrl.u32 %v2295, 7
        %v2297 = vsub.s32 0, %v2296
        %v2298 = vrot.slane %v2293, %v2297
        %v2299 = vlaneseq
        %v2300 = vshrl.u32 %v2299, 7
        %v2301 = vsub.s32 1, %v2300
        %v2302 = vrot.slane %v2293, %v2301
        %2305 = vmatprep.subr.mxu0 %v2101
        %2306 = vmatpush1.msra.mxu0 %v2100
        %2307 = vmatprep.subr.mxu0 %v2103
        %2308 = vmatpush1.msra.mxu0 %v2102
        %2309 = vmatprep.subr.mxu0 %v2105
        %2310 = vmatpush1.msra.mxu0 %v2104
        %2311 = vmatprep.subr.mxu0 %v2107
        %2312 = vmatpush1.msra.mxu0 %v2106
        %2313 = vmatprep.subr.mxu0 %v2109
        %2314 = vmatpush1.msra.mxu0 %v2108
        %2315 = vmatprep.subr.mxu0 %v2111
        %2316 = vmatpush1.msra.mxu0 %v2110
        %2317 = vmatprep.subr.mxu0 %v2113
        %2318 = vmatpush1.msra.mxu0 %v2112
        %2319 = vmatprep.subr.mxu0 %v2115
        %2320 = vmatpush1.msra.mxu0 %v2114
        %2321 = vmatprep.subr.mxu0 %v2117
        %2322 = vmatpush1.msra.mxu0 %v2116
        %2323 = vmatprep.subr.mxu0 %v2119
        %2324 = vmatpush1.msra.mxu0 %v2118
        %2325 = vmatprep.subr.mxu0 %v2121
        %2326 = vmatpush1.msra.mxu0 %v2120
        %2327 = vmatprep.subr.mxu0 %v2123
        %2328 = vmatpush1.msra.mxu0 %v2122
        %2329 = vmatprep.subr.mxu0 %v2125
        %2330 = vmatpush1.msra.mxu0 %v2124
        %2331 = vmatprep.subr.mxu0 %v2127
        %2332 = vmatpush1.msra.mxu0 %v2126
        %2333 = vmatprep.subr.mxu0 %v2129
        %2334 = vmatpush1.msra.mxu0 %v2128
        %2335 = vmatprep.subr.mxu0 %v2131
        %2336 = vmatpush1.msra.mxu0 %v2130
        %2337 = vmatprep.subr.mxu0 %v2133
        %2338 = vmatpush1.msra.mxu0 %v2132
        %2339 = vmatprep.subr.mxu0 %v2135
        %2340 = vmatpush1.msra.mxu0 %v2134
        %2341 = vmatprep.subr.mxu0 %v2137
        %2342 = vmatpush1.msra.mxu0 %v2136
        %2343 = vmatprep.subr.mxu0 %v2139
        %2344 = vmatpush1.msra.mxu0 %v2138
        %2345 = vmatprep.subr.mxu0 %v2141
        %2346 = vmatpush1.msra.mxu0 %v2140
        %2347 = vmatprep.subr.mxu0 %v2143
        %2348 = vmatpush1.msra.mxu0 %v2142
        %2349 = vmatprep.subr.mxu0 %v2145
        %2350 = vmatpush1.msra.mxu0 %v2144
        %2351 = vmatprep.subr.mxu0 %v2147
        %2352 = vmatpush1.msra.mxu0 %v2146
        %2353 = vmatprep.subr.mxu0 %v2149
        %2354 = vmatpush1.msra.mxu0 %v2148
        %2355 = vmatprep.subr.mxu0 %v2151
        %2356 = vmatpush1.msra.mxu0 %v2150
        %2357 = vmatprep.subr.mxu0 %v2153
        %2358 = vmatpush1.msra.mxu0 %v2152
        %2359 = vmatprep.subr.mxu0 %v2155
        %2360 = vmatpush1.msra.mxu0 %v2154
        %2361 = vmatprep.subr.mxu0 %v2157
        %2362 = vmatpush1.msra.mxu0 %v2156
        %2363 = vmatprep.subr.mxu0 %v2159
        %2364 = vmatpush1.msra.mxu0 %v2158
        %2365 = vmatprep.subr.mxu0 %v2161
        %2366 = vmatpush1.msra.mxu0 %v2160
        %2367 = vmatprep.subr.mxu0 %v2163
        %2368 = vmatpush1.msra.mxu0 %v2162
        %2369 = vmatprep.mubr.f32.mxu0 %v508
        %2370 = vmatmul.mubr.f32.gmra.mrb[0].mxu0 %v507
        %v2371 = vpop.f32.mrb[0].mxu0
        %v2372 = vadd.f32 %v2298, %v2371
        %v2373 = vpop.f32.mrb[0].mxu0
        %v2374 = vadd.f32 %v2302, %v2373
        %2375 = vmatprep.mubr.f32.mxu0 %v514
        %2376 = vmatmul.mubr.f32.gmra.mrb[0].mxu0 %v513
        %v2377 = vpop.f32.mrb[0].mxu0
        %v2378 = vadd.f32 %v2298, %v2377
        %v2379 = vpop.f32.mrb[0].mxu0
        %v2380 = vadd.f32 %v2302, %v2379
        %2381 = vmatprep.mubr.f32.mxu0 %v520
        %2382 = vmatmul.mubr.f32.gmra.mrb[0].mxu0 %v519
        %v2383 = vpop.f32.mrb[0].mxu0
        %v2384 = vadd.f32 %v2298, %v2383
        %v2385 = vpop.f32.mrb[0].mxu0
        %v2386 = vadd.f32 %v2302, %v2385
        %2387 = vmatprep.mubr.f32.mxu0 %v526
        %2388 = vmatmul.mubr.f32.gmra.mrb[0].mxu0 %v525
        %v2389 = vpop.f32.mrb[0].mxu0
        %v2390 = vadd.f32 %v2298, %v2389
        %v2391 = vpop.f32.mrb[0].mxu0
        %v2392 = vadd.f32 %v2302, %v2391
        %2393 = vmatprep.mubr.f32.mxu0 %v532
        %2394 = vmatmul.mubr.f32.gmra.mrb[0].mxu0 %v531
        %v2395 = vpop.f32.mrb[0].mxu0
        %v2396 = vadd.f32 %v2298, %v2395
        %v2397 = vpop.f32.mrb[0].mxu0
        %v2398 = vadd.f32 %v2302, %v2397
        %2399 = vmatprep.mubr.f32.mxu0 %v538
        %2400 = vmatmul.mubr.f32.gmra.mrb[0].mxu0 %v537
        %v2401 = vpop.f32.mrb[0].mxu0
        %v2402 = vadd.f32 %v2298, %v2401
        %v2403 = vpop.f32.mrb[0].mxu0
        %v2404 = vadd.f32 %v2302, %v2403
        %2405 = vmatprep.mubr.f32.mxu0 %v544
        %2406 = vmatmul.mubr.f32.gmra.mrb[0].mxu0 %v543
        %v2407 = vpop.f32.mrb[0].mxu0
        %v2408 = vadd.f32 %v2298, %v2407
        %v2409 = vpop.f32.mrb[0].mxu0
        %v2410 = vadd.f32 %v2302, %v2409
        %2411 = vmatprep.mubr.f32.mxu0 %v550
        %2412 = vmatmul.mubr.f32.gmra.mrb[0].mxu0 %v549
        %v2413 = vpop.f32.mrb[0].mxu0
        %v2414 = vadd.f32 %v2298, %v2413
        %v2415 = vpop.f32.mrb[0].mxu0
        %v2416 = vadd.f32 %v2302, %v2415
        %2417 = vmatprep.mubr.f32.mxu0 %v556
        %2418 = vmatmul.mubr.f32.gmra.mrb[0].mxu0 %v555
        %v2419 = vpop.f32.mrb[0].mxu0
        %v2420 = vadd.f32 %v2298, %v2419
        %v2421 = vpop.f32.mrb[0].mxu0
        %v2422 = vadd.f32 %v2302, %v2421
        %2423 = vmatprep.mubr.f32.mxu0 %v562
        %2424 = vmatmul.mubr.f32.gmra.mrb[0].mxu0 %v561
        %v2425 = vpop.f32.mrb[0].mxu0
        %v2426 = vadd.f32 %v2298, %v2425
        %v2427 = vpop.f32.mrb[0].mxu0
        %v2428 = vadd.f32 %v2302, %v2427
        %2429 = vmatprep.mubr.f32.mxu0 %v568
        %2430 = vmatmul.mubr.f32.gmra.mrb[0].mxu0 %v567
        %v2431 = vpop.f32.mrb[0].mxu0
        %v2432 = vadd.f32 %v2298, %v2431
        %v2433 = vpop.f32.mrb[0].mxu0
        %v2434 = vadd.f32 %v2302, %v2433
        %2435 = vmatprep.mubr.f32.mxu0 %v574
        %2436 = vmatmul.mubr.f32.gmra.mrb[0].mxu0 %v573
        %v2437 = vpop.f32.mrb[0].mxu0
        %v2438 = vadd.f32 %v2298, %v2437
        %v2439 = vpop.f32.mrb[0].mxu0
        %v2440 = vadd.f32 %v2302, %v2439
        %2441 = vmatprep.mubr.f32.mxu0 %v580
        %2442 = vmatmul.mubr.f32.gmra.mrb[0].mxu0 %v579
        %v2443 = vpop.f32.mrb[0].mxu0
        %v2444 = vadd.f32 %v2298, %v2443
        %v2445 = vpop.f32.mrb[0].mxu0
        %v2446 = vadd.f32 %v2302, %v2445
        %2447 = vdwg.mxu0
        %2448 = vmatprep.subr.mxu0 %v2165
        %2449 = vmatpush1.msra.mxu0 %v2164
        %2450 = vmatprep.subr.mxu0 %v2167
        %2451 = vmatpush1.msra.mxu0 %v2166
        %2452 = vmatprep.subr.mxu0 %v2169
        %2453 = vmatpush1.msra.mxu0 %v2168
        %2454 = vmatprep.subr.mxu0 %v2171
        %2455 = vmatpush1.msra.mxu0 %v2170
        %2456 = vmatprep.subr.mxu0 %v2173
        %2457 = vmatpush1.msra.mxu0 %v2172
        %2458 = vmatprep.subr.mxu0 %v2175
        %2459 = vmatpush1.msra.mxu0 %v2174
        %2460 = vmatprep.subr.mxu0 %v2177
        %2461 = vmatpush1.msra.mxu0 %v2176
        %2462 = vmatprep.subr.mxu0 %v2179
        %2463 = vmatpush1.msra.mxu0 %v2178
        %2464 = vmatprep.subr.mxu0 %v2181
        %2465 = vmatpush1.msra.mxu0 %v2180
        %2466 = vmatprep.subr.mxu0 %v2183
        %2467 = vmatpush1.msra.mxu0 %v2182
        %2468 = vmatprep.subr.mxu0 %v2185
        %2469 = vmatpush1.msra.mxu0 %v2184
        %2470 = vmatprep.subr.mxu0 %v2187
        %2471 = vmatpush1.msra.mxu0 %v2186
        %2472 = vmatprep.subr.mxu0 %v2189
        %2473 = vmatpush1.msra.mxu0 %v2188
        %2474 = vmatprep.subr.mxu0 %v2191
        %2475 = vmatpush1.msra.mxu0 %v2190
        %2476 = vmatprep.subr.mxu0 %v2193
        %2477 = vmatpush1.msra.mxu0 %v2192
        %2478 = vmatprep.subr.mxu0 %v2195
        %2479 = vmatpush1.msra.mxu0 %v2194
        %2480 = vmatprep.subr.mxu0 %v2197
        %2481 = vmatpush1.msra.mxu0 %v2196
        %2482 = vmatprep.subr.mxu0 %v2199
        %2483 = vmatpush1.msra.mxu0 %v2198
        %2484 = vmatprep.subr.mxu0 %v2201
        %2485 = vmatpush1.msra.mxu0 %v2200
        %2486 = vmatprep.subr.mxu0 %v2203
        %2487 = vmatpush1.msra.mxu0 %v2202
        %2488 = vmatprep.subr.mxu0 %v2205
        %2489 = vmatpush1.msra.mxu0 %v2204
        %2490 = vmatprep.subr.mxu0 %v2207
        %2491 = vmatpush1.msra.mxu0 %v2206
        %2492 = vmatprep.subr.mxu0 %v2209
        %2493 = vmatpush1.msra.mxu0 %v2208
        %2494 = vmatprep.subr.mxu0 %v2211
        %2495 = vmatpush1.msra.mxu0 %v2210
        %2496 = vmatprep.subr.mxu0 %v2213
        %2497 = vmatpush1.msra.mxu0 %v2212
        %2498 = vmatprep.subr.mxu0 %v2215
        %2499 = vmatpush1.msra.mxu0 %v2214
        %2500 = vmatprep.subr.mxu0 %v2217
        %2501 = vmatpush1.msra.mxu0 %v2216
        %2502 = vmatprep.subr.mxu0 %v2219
        %2503 = vmatpush1.msra.mxu0 %v2218
        %2504 = vmatprep.subr.mxu0 %v2221
        %2505 = vmatpush1.msra.mxu0 %v2220
        %2506 = vmatprep.subr.mxu0 %v2223
        %2507 = vmatpush1.msra.mxu0 %v2222
        %2508 = vmatprep.subr.mxu0 %v2225
        %2509 = vmatpush1.msra.mxu0 %v2224
        %2510 = vmatprep.subr.mxu0 %v2227
        %2511 = vmatpush1.msra.mxu0 %v2226
        %2512 = vmatprep.mubr.f32.mxu0 %v510
        %2513 = vmatmul.mubr.f32.gmra.mrb[0].mxu0 %v509
        %v2514 = vpop.f32.mrb[0].mxu0
        %v2515 = vadd.f32 %v2372, %v2514
        %v2516 = vpop.f32.mrb[0].mxu0
        %v2517 = vadd.f32 %v2374, %v2516
        %2518 = vmatprep.mubr.f32.mxu0 %v516
        %2519 = vmatmul.mubr.f32.gmra.mrb[0].mxu0 %v515
        %v2520 = vpop.f32.mrb[0].mxu0
        %v2521 = vadd.f32 %v2378, %v2520
        %v2522 = vpop.f32.mrb[0].mxu0
        %v2523 = vadd.f32 %v2380, %v2522
        %2524 = vmatprep.mubr.f32.mxu0 %v522
        %2525 = vmatmul.mubr.f32.gmra.mrb[0].mxu0 %v521
        %v2526 = vpop.f32.mrb[0].mxu0
        %v2527 = vadd.f32 %v2384, %v2526
        %v2528 = vpop.f32.mrb[0].mxu0
        %v2529 = vadd.f32 %v2386, %v2528
        %2530 = vmatprep.mubr.f32.mxu0 %v528
        %2531 = vmatmul.mubr.f32.gmra.mrb[0].mxu0 %v527
        %v2532 = vpop.f32.mrb[0].mxu0
        %v2533 = vadd.f32 %v2390, %v2532
        %v2534 = vpop.f32.mrb[0].mxu0
        %v2535 = vadd.f32 %v2392, %v2534
        %2536 = vmatprep.mubr.f32.mxu0 %v534
        %2537 = vmatmul.mubr.f32.gmra.mrb[0].mxu0 %v533
        %v2538 = vpop.f32.mrb[0].mxu0
        %v2539 = vadd.f32 %v2396, %v2538
        %v2540 = vpop.f32.mrb[0].mxu0
        %v2541 = vadd.f32 %v2398, %v2540
        %2542 = vmatprep.mubr.f32.mxu0 %v540
        %2543 = vmatmul.mubr.f32.gmra.mrb[0].mxu0 %v539
        %v2544 = vpop.f32.mrb[0].mxu0
        %v2545 = vadd.f32 %v2402, %v2544
        %v2546 = vpop.f32.mrb[0].mxu0
        %v2547 = vadd.f32 %v2404, %v2546
        %2548 = vmatprep.mubr.f32.mxu0 %v546
        %2549 = vmatmul.mubr.f32.gmra.mrb[0].mxu0 %v545
        %v2550 = vpop.f32.mrb[0].mxu0
        %v2551 = vadd.f32 %v2408, %v2550
        %v2552 = vpop.f32.mrb[0].mxu0
        %v2553 = vadd.f32 %v2410, %v2552
        %2554 = vmatprep.mubr.f32.mxu0 %v552
        %2555 = vmatmul.mubr.f32.gmra.mrb[0].mxu0 %v551
        %v2556 = vpop.f32.mrb[0].mxu0
        %v2557 = vadd.f32 %v2414, %v2556
        %v2558 = vpop.f32.mrb[0].mxu0
        %v2559 = vadd.f32 %v2416, %v2558
        %2560 = vmatprep.mubr.f32.mxu0 %v558
        %2561 = vmatmul.mubr.f32.gmra.mrb[0].mxu0 %v557
        %v2562 = vpop.f32.mrb[0].mxu0
        %v2563 = vadd.f32 %v2420, %v2562
        %v2564 = vpop.f32.mrb[0].mxu0
        %v2565 = vadd.f32 %v2422, %v2564
        %2566 = vmatprep.mubr.f32.mxu0 %v564
        %2567 = vmatmul.mubr.f32.gmra.mrb[0].mxu0 %v563
        %v2568 = vpop.f32.mrb[0].mxu0
        %v2569 = vadd.f32 %v2426, %v2568
        %v2570 = vpop.f32.mrb[0].mxu0
        %v2571 = vadd.f32 %v2428, %v2570
        %2572 = vmatprep.mubr.f32.mxu0 %v570
        %2573 = vmatmul.mubr.f32.gmra.mrb[0].mxu0 %v569
        %v2574 = vpop.f32.mrb[0].mxu0
        %v2575 = vadd.f32 %v2432, %v2574
        %v2576 = vpop.f32.mrb[0].mxu0
        %v2577 = vadd.f32 %v2434, %v2576
        %2578 = vmatprep.mubr.f32.mxu0 %v576
        %2579 = vmatmul.mubr.f32.gmra.mrb[0].mxu0 %v575
        %v2580 = vpop.f32.mrb[0].mxu0
        %v2581 = vadd.f32 %v2438, %v2580
        %v2582 = vpop.f32.mrb[0].mxu0
        %v2583 = vadd.f32 %v2440, %v2582
        %2584 = vmatprep.mubr.f32.mxu0 %v582
        %2585 = vmatmul.mubr.f32.gmra.mrb[0].mxu0 %v581
        %v2586 = vpop.f32.mrb[0].mxu0
        %v2587 = vadd.f32 %v2444, %v2586
        %v2588 = vpop.f32.mrb[0].mxu0
        %v2589 = vadd.f32 %v2446, %v2588
        %2590 = vdwg.mxu0
        %2591 = vmatprep.subr.mxu0 %v2229
        %2592 = vmatpush1.msra.mxu0 %v2228
        %2593 = vmatprep.subr.mxu0 %v2231
        %2594 = vmatpush1.msra.mxu0 %v2230
        %2595 = vmatprep.subr.mxu0 %v2233
        %2596 = vmatpush1.msra.mxu0 %v2232
        %2597 = vmatprep.subr.mxu0 %v2235
        %2598 = vmatpush1.msra.mxu0 %v2234
        %2599 = vmatprep.subr.mxu0 %v2237
        %2600 = vmatpush1.msra.mxu0 %v2236
        %2601 = vmatprep.subr.mxu0 %v2239
        %2602 = vmatpush1.msra.mxu0 %v2238
        %2603 = vmatprep.subr.mxu0 %v2241
        %2604 = vmatpush1.msra.mxu0 %v2240
        %2605 = vmatprep.subr.mxu0 %v2243
        %2606 = vmatpush1.msra.mxu0 %v2242
        %2607 = vmatprep.subr.mxu0 %v2245
        %2608 = vmatpush1.msra.mxu0 %v2244
        %2609 = vmatprep.subr.mxu0 %v2247
        %2610 = vmatpush1.msra.mxu0 %v2246
        %2611 = vmatprep.subr.mxu0 %v2249
        %2612 = vmatpush1.msra.mxu0 %v2248
        %2613 = vmatprep.subr.mxu0 %v2251
        %2614 = vmatpush1.msra.mxu0 %v2250
        %2615 = vmatprep.subr.mxu0 %v2253
        %2616 = vmatpush1.msra.mxu0 %v2252
        %2617 = vmatprep.subr.mxu0 %v2255
        %2618 = vmatpush1.msra.mxu0 %v2254
        %2619 = vmatprep.subr.mxu0 %v2257
        %2620 = vmatpush1.msra.mxu0 %v2256
        %2621 = vmatprep.subr.mxu0 %v2259
        %2622 = vmatpush1.msra.mxu0 %v2258
        %2623 = vmatprep.subr.mxu0 %v2261
        %2624 = vmatpush1.msra.mxu0 %v2260
        %2625 = vmatprep.subr.mxu0 %v2263
        %2626 = vmatpush1.msra.mxu0 %v2262
        %2627 = vmatprep.subr.mxu0 %v2265
        %2628 = vmatpush1.msra.mxu0 %v2264
        %2629 = vmatprep.subr.mxu0 %v2267
        %2630 = vmatpush1.msra.mxu0 %v2266
        %2631 = vmatprep.subr.mxu0 %v2269
        %2632 = vmatpush1.msra.mxu0 %v2268
        %2633 = vmatprep.subr.mxu0 %v2271
        %2634 = vmatpush1.msra.mxu0 %v2270
        %2635 = vmatprep.subr.mxu0 %v2273
        %2636 = vmatpush1.msra.mxu0 %v2272
        %2637 = vmatprep.subr.mxu0 %v2275
        %2638 = vmatpush1.msra.mxu0 %v2274
        %2639 = vmatprep.subr.mxu0 %v2277
        %2640 = vmatpush1.msra.mxu0 %v2276
        %2641 = vmatprep.subr.mxu0 %v2279
        %2642 = vmatpush1.msra.mxu0 %v2278
        %2643 = vmatprep.subr.mxu0 %v2281
        %2644 = vmatpush1.msra.mxu0 %v2280
        %2645 = vmatprep.subr.mxu0 %v2283
        %2646 = vmatpush1.msra.mxu0 %v2282
        %2647 = vmatprep.subr.mxu0 %v2285
        %2648 = vmatpush1.msra.mxu0 %v2284
        %2649 = vmatprep.subr.mxu0 %v2287
        %2650 = vmatpush1.msra.mxu0 %v2286
        %2651 = vmatprep.subr.mxu0 %v2289
        %2652 = vmatpush1.msra.mxu0 %v2288
        %2653 = vmatprep.subr.mxu0 %v2291
        %2654 = vmatpush1.msra.mxu0 %v2290
        %2655 = vmatprep.mubr.f32.mxu0 %v512
        %2656 = vmatmul.mubr.f32.gmra.mrb[0].mxu0 %v511
        %v2657 = vpop.f32.mrb[0].mxu0
        %v2658 = vadd.f32 %v2515, %v2657
        %v2659 = vpop.f32.mrb[0].mxu0
        %v2660 = vadd.f32 %v2517, %v2659
        %2661 = vmatprep.mubr.f32.mxu0 %v518
        %2662 = vmatmul.mubr.f32.gmra.mrb[0].mxu0 %v517
        %v2663 = vpop.f32.mrb[0].mxu0
        %v2664 = vadd.f32 %v2521, %v2663
        %v2665 = vpop.f32.mrb[0].mxu0
        %v2666 = vadd.f32 %v2523, %v2665
        %2667 = vmatprep.mubr.f32.mxu0 %v524
        %2668 = vmatmul.mubr.f32.gmra.mrb[0].mxu0 %v523
        %v2669 = vpop.f32.mrb[0].mxu0
        %v2670 = vadd.f32 %v2527, %v2669
        %v2671 = vpop.f32.mrb[0].mxu0
        %v2672 = vadd.f32 %v2529, %v2671
        %2673 = vmatprep.mubr.f32.mxu0 %v530
        %2674 = vmatmul.mubr.f32.gmra.mrb[0].mxu0 %v529
        %v2675 = vpop.f32.mrb[0].mxu0
        %v2676 = vadd.f32 %v2533, %v2675
        %v2677 = vpop.f32.mrb[0].mxu0
        %v2678 = vadd.f32 %v2535, %v2677
        %2679 = vmatprep.mubr.f32.mxu0 %v536
        %2680 = vmatmul.mubr.f32.gmra.mrb[0].mxu0 %v535
        %v2681 = vpop.f32.mrb[0].mxu0
        %v2682 = vadd.f32 %v2539, %v2681
        %v2683 = vpop.f32.mrb[0].mxu0
        %v2684 = vadd.f32 %v2541, %v2683
        %2685 = vmatprep.mubr.f32.mxu0 %v542
        %2686 = vmatmul.mubr.f32.gmra.mrb[0].mxu0 %v541
        %v2687 = vpop.f32.mrb[0].mxu0
        %v2688 = vadd.f32 %v2545, %v2687
        %v2689 = vpop.f32.mrb[0].mxu0
        %v2690 = vadd.f32 %v2547, %v2689
        %2691 = vmatprep.mubr.f32.mxu0 %v548
        %2692 = vmatmul.mubr.f32.gmra.mrb[0].mxu0 %v547
        %v2693 = vpop.f32.mrb[0].mxu0
        %v2694 = vadd.f32 %v2551, %v2693
        %v2695 = vpop.f32.mrb[0].mxu0
        %v2696 = vadd.f32 %v2553, %v2695
        %2697 = vmatprep.mubr.f32.mxu0 %v554
        %2698 = vmatmul.mubr.f32.gmra.mrb[0].mxu0 %v553
        %v2699 = vpop.f32.mrb[0].mxu0
        %v2700 = vadd.f32 %v2557, %v2699
        %v2701 = vpop.f32.mrb[0].mxu0
        %v2702 = vadd.f32 %v2559, %v2701
        %2703 = vmatprep.mubr.f32.mxu0 %v560
        %2704 = vmatmul.mubr.f32.gmra.mrb[0].mxu0 %v559
        %v2705 = vpop.f32.mrb[0].mxu0
        %v2706 = vadd.f32 %v2563, %v2705
        %v2707 = vpop.f32.mrb[0].mxu0
        %v2708 = vadd.f32 %v2565, %v2707
        %2709 = vmatprep.mubr.f32.mxu0 %v566
        %2710 = vmatmul.mubr.f32.gmra.mrb[0].mxu0 %v565
        %v2711 = vpop.f32.mrb[0].mxu0
        %v2712 = vadd.f32 %v2569, %v2711
        %v2713 = vpop.f32.mrb[0].mxu0
        %v2714 = vadd.f32 %v2571, %v2713
        %2715 = vmatprep.mubr.f32.mxu0 %v572
        %2716 = vmatmul.mubr.f32.gmra.mrb[0].mxu0 %v571
        %v2717 = vpop.f32.mrb[0].mxu0
        %v2718 = vadd.f32 %v2575, %v2717
        %v2719 = vpop.f32.mrb[0].mxu0
        %v2720 = vadd.f32 %v2577, %v2719
        %2721 = vmatprep.mubr.f32.mxu0 %v578
        %2722 = vmatmul.mubr.f32.gmra.mrb[0].mxu0 %v577
        %v2723 = vpop.f32.mrb[0].mxu0
        %v2724 = vadd.f32 %v2581, %v2723
        %v2725 = vpop.f32.mrb[0].mxu0
        %v2726 = vadd.f32 %v2583, %v2725
        %2727 = vmatprep.mubr.f32.mxu0 %v584
        %2728 = vmatmul.mubr.f32.gmra.mrb[0].mxu0 %v583
        %v2729 = vpop.f32.mrb[0].mxu0
        %v2730 = vadd.f32 %v2587, %v2729
        %v2731 = vpop.f32.mrb[0].mxu0
        %v2732 = vadd.f32 %v2589, %v2731
        %2733 = vdwg.mxu0
        %v2734 = vadd.f32 %v2658, %v2660
        %2735 = vadd.xlane.f32.xlu0 %v2734
        %v2736 = vpop.xlane.xlu0 %2735
        %v2737 = vadd.f32 %v2664, %v2666
        %2738 = vadd.xlane.f32.xlu0 %v2737
        %v2739 = vpop.xlane.xlu0 %2738
        %v2740 = vadd.f32 %v2670, %v2672
        %2741 = vadd.xlane.f32.xlu0 %v2740
        %v2742 = vpop.xlane.xlu0 %2741
        %v2743 = vadd.f32 %v2676, %v2678
        %2744 = vadd.xlane.f32.xlu0 %v2743
        %v2745 = vpop.xlane.xlu0 %2744
        %v2746 = vadd.f32 %v2682, %v2684
        %2747 = vadd.xlane.f32.xlu0 %v2746
        %v2748 = vpop.xlane.xlu0 %2747
        %v2749 = vadd.f32 %v2688, %v2690
        %2750 = vadd.xlane.f32.xlu0 %v2749
        %v2751 = vpop.xlane.xlu0 %2750
        %v2752 = vadd.f32 %v2694, %v2696
        %2753 = vadd.xlane.f32.xlu0 %v2752
        %v2754 = vpop.xlane.xlu0 %2753
        %v2755 = vadd.f32 %v2700, %v2702
        %2756 = vadd.xlane.f32.xlu0 %v2755
        %v2757 = vpop.xlane.xlu0 %2756
        %v2758 = vadd.f32 %v2706, %v2708
        %2759 = vadd.xlane.f32.xlu0 %v2758
        %v2760 = vpop.xlane.xlu0 %2759
        %v2761 = vadd.f32 %v2712, %v2714
        %2762 = vadd.xlane.f32.xlu0 %v2761
        %v2763 = vpop.xlane.xlu0 %2762
        %v2764 = vadd.f32 %v2718, %v2720
        %2765 = vadd.xlane.f32.xlu0 %v2764
        %v2766 = vpop.xlane.xlu0 %2765
        %v2767 = vadd.f32 %v2724, %v2726
        %2768 = vadd.xlane.f32.xlu0 %v2767
        %v2769 = vpop.xlane.xlu0 %2768
        %v2770 = vadd.f32 %v2730, %v2732
        %2771 = vadd.xlane.f32.xlu0 %v2770
        %v2772 = vpop.xlane.xlu0 %2771
        %v2773 = vmul.f32 %v2736, %v1444
        %v2774 = vmul.f32 %v2739, %v1444
        %v2775 = vmul.f32 %v2742, %v1444
        %v2776 = vmul.f32 %v2745, %v1444
        %v2777 = vmul.f32 %v2748, %v1444
        %v2778 = vmul.f32 %v2751, %v1444
        %v2779 = vmul.f32 %v2754, %v1444
        %v2780 = vmul.f32 %v2757, %v1444
        %v2781 = vmul.f32 %v2760, %v1444
        %v2782 = vmul.f32 %v2763, %v1444
        %v2783 = vmul.f32 %v2766, %v1444
        %v2784 = vmul.f32 %v2769, %v1444
        %v2785 = vmul.f32 %v2772, %v1444
        %v2786 = vsub.f32 %v2658, %v2773
        %v2787 = vsub.f32 %v2660, %v2773
        %v2788 = vsub.f32 %v2664, %v2774
        %v2789 = vsub.f32 %v2666, %v2774
        %v2790 = vsub.f32 %v2670, %v2775
        %v2791 = vsub.f32 %v2672, %v2775
        %v2792 = vsub.f32 %v2676, %v2776
        %v2793 = vsub.f32 %v2678, %v2776
        %v2794 = vsub.f32 %v2682, %v2777
        %v2795 = vsub.f32 %v2684, %v2777
        %v2796 = vsub.f32 %v2688, %v2778
        %v2797 = vsub.f32 %v2690, %v2778
        %v2798 = vsub.f32 %v2694, %v2779
        %v2799 = vsub.f32 %v2696, %v2779
        %v2800 = vsub.f32 %v2700, %v2780
        %v2801 = vsub.f32 %v2702, %v2780
        %v2802 = vsub.f32 %v2706, %v2781
        %v2803 = vsub.f32 %v2708, %v2781
        %v2804 = vsub.f32 %v2712, %v2782
        %v2805 = vsub.f32 %v2714, %v2782
        %v2806 = vsub.f32 %v2718, %v2783
        %v2807 = vsub.f32 %v2720, %v2783
        %v2808 = vsub.f32 %v2724, %v2784
        %v2809 = vsub.f32 %v2726, %v2784
        %v2810 = vsub.f32 %v2730, %v2785
        %v2811 = vsub.f32 %v2732, %v2785
        %v2812 = vmul.f32 %v2786, %v2786
        %v2813 = vmul.f32 %v2787, %v2787
        %v2814 = vmul.f32 %v2788, %v2788
        %v2815 = vmul.f32 %v2789, %v2789
        %v2816 = vmul.f32 %v2790, %v2790
        %v2817 = vmul.f32 %v2791, %v2791
        %v2818 = vmul.f32 %v2792, %v2792
        %v2819 = vmul.f32 %v2793, %v2793
        %v2820 = vmul.f32 %v2794, %v2794
        %v2821 = vmul.f32 %v2795, %v2795
        %v2822 = vmul.f32 %v2796, %v2796
        %v2823 = vmul.f32 %v2797, %v2797
        %v2824 = vmul.f32 %v2798, %v2798
        %v2825 = vmul.f32 %v2799, %v2799
        %v2826 = vmul.f32 %v2800, %v2800
        %v2827 = vmul.f32 %v2801, %v2801
        %v2828 = vmul.f32 %v2802, %v2802
        %v2829 = vmul.f32 %v2803, %v2803
        %v2830 = vmul.f32 %v2804, %v2804
        %v2831 = vmul.f32 %v2805, %v2805
        %v2832 = vmul.f32 %v2806, %v2806
        %v2833 = vmul.f32 %v2807, %v2807
        %v2834 = vmul.f32 %v2808, %v2808
        %v2835 = vmul.f32 %v2809, %v2809
        %v2836 = vmul.f32 %v2810, %v2810
        %v2837 = vmul.f32 %v2811, %v2811
        %v2838 = vadd.f32 %v2812, %v2813
        %2839 = vadd.xlane.f32.xlu0 %v2838
        %v2840 = vpop.xlane.xlu0 %2839
        %v2841 = vadd.f32 %v2814, %v2815
        %2842 = vadd.xlane.f32.xlu0 %v2841
        %v2843 = vpop.xlane.xlu0 %2842
        %v2844 = vadd.f32 %v2816, %v2817
        %2845 = vadd.xlane.f32.xlu0 %v2844
        %v2846 = vpop.xlane.xlu0 %2845
        %v2847 = vadd.f32 %v2818, %v2819
        %2848 = vadd.xlane.f32.xlu0 %v2847
        %v2849 = vpop.xlane.xlu0 %2848
        %v2850 = vadd.f32 %v2820, %v2821
        %2851 = vadd.xlane.f32.xlu0 %v2850
        %v2852 = vpop.xlane.xlu0 %2851
        %v2853 = vadd.f32 %v2822, %v2823
        %2854 = vadd.xlane.f32.xlu0 %v2853
        %v2855 = vpop.xlane.xlu0 %2854
        %v2856 = vadd.f32 %v2824, %v2825
        %2857 = vadd.xlane.f32.xlu0 %v2856
        %v2858 = vpop.xlane.xlu0 %2857
        %v2859 = vadd.f32 %v2826, %v2827
        %2860 = vadd.xlane.f32.xlu0 %v2859
        %v2861 = vpop.xlane.xlu0 %2860
        %v2862 = vadd.f32 %v2828, %v2829
        %2863 = vadd.xlane.f32.xlu0 %v2862
        %v2864 = vpop.xlane.xlu0 %2863
        %v2865 = vadd.f32 %v2830, %v2831
        %2866 = vadd.xlane.f32.xlu0 %v2865
        %v2867 = vpop.xlane.xlu0 %2866
        %v2868 = vadd.f32 %v2832, %v2833
        %2869 = vadd.xlane.f32.xlu0 %v2868
        %v2870 = vpop.xlane.xlu0 %2869
        %v2871 = vadd.f32 %v2834, %v2835
        %2872 = vadd.xlane.f32.xlu0 %v2871
        %v2873 = vpop.xlane.xlu0 %2872
        %v2874 = vadd.f32 %v2836, %v2837
        %2875 = vadd.xlane.f32.xlu0 %v2874
        %v2876 = vpop.xlane.xlu0 %2875
        %v2877 = vmul.f32 %v2840, %v1444
        %v2878 = vmul.f32 %v2843, %v1444
        %v2879 = vmul.f32 %v2846, %v1444
        %v2880 = vmul.f32 %v2849, %v1444
        %v2881 = vmul.f32 %v2852, %v1444
        %v2882 = vmul.f32 %v2855, %v1444
        %v2883 = vmul.f32 %v2858, %v1444
        %v2884 = vmul.f32 %v2861, %v1444
        %v2885 = vmul.f32 %v2864, %v1444
        %v2886 = vmul.f32 %v2867, %v1444
        %v2887 = vmul.f32 %v2870, %v1444
        %v2888 = vmul.f32 %v2873, %v1444
        %v2889 = vmul.f32 %v2876, %v1444
        %v2890 = vadd.f32 %v2877, 1e-05
        %v2891 = vadd.f32 %v2878, 1e-05
        %v2892 = vadd.f32 %v2879, 1e-05
        %v2893 = vadd.f32 %v2880, 1e-05
        %v2894 = vadd.f32 %v2881, 1e-05
        %v2895 = vadd.f32 %v2882, 1e-05
        %v2896 = vadd.f32 %v2883, 1e-05
        %v2897 = vadd.f32 %v2884, 1e-05
        %v2898 = vadd.f32 %v2885, 1e-05
        %v2899 = vadd.f32 %v2886, 1e-05
        %v2900 = vadd.f32 %v2887, 1e-05
        %v2901 = vadd.f32 %v2888, 1e-05
        %v2902 = vadd.f32 %v2889, 1e-05
        %v2903 = vrsqrt.pop %v2890
        %v2904 = vrsqrt.pop %v2891
        %v2905 = vrsqrt.pop %v2892
        %v2906 = vrsqrt.pop %v2893
        %v2907 = vrsqrt.pop %v2894
        %v2908 = vrsqrt.pop %v2895
        %v2909 = vrsqrt.pop %v2896
        %v2910 = vrsqrt.pop %v2897
        %v2911 = vrsqrt.pop %v2898
        %v2912 = vrsqrt.pop %v2899
        %v2913 = vrsqrt.pop %v2900
        %v2914 = vrsqrt.pop %v2901
        %v2915 = vrsqrt.pop %v2902
        %v2916 = vmul.f32 %v2786, %v2903
        %v2917 = vmul.f32 %v2787, %v2903
        %v2918 = vmul.f32 %v2788, %v2904
        %v2919 = vmul.f32 %v2789, %v2904
        %v2920 = vmul.f32 %v2790, %v2905
        %v2921 = vmul.f32 %v2791, %v2905
        %v2922 = vmul.f32 %v2792, %v2906
        %v2923 = vmul.f32 %v2793, %v2906
        %v2924 = vmul.f32 %v2794, %v2907
        %v2925 = vmul.f32 %v2795, %v2907
        %v2926 = vmul.f32 %v2796, %v2908
        %v2927 = vmul.f32 %v2797, %v2908
        %v2928 = vmul.f32 %v2798, %v2909
        %v2929 = vmul.f32 %v2799, %v2909
        %v2930 = vmul.f32 %v2800, %v2910
        %v2931 = vmul.f32 %v2801, %v2910
        %v2932 = vmul.f32 %v2802, %v2911
        %v2933 = vmul.f32 %v2803, %v2911
        %v2934 = vmul.f32 %v2804, %v2912
        %v2935 = vmul.f32 %v2805, %v2912
        %v2936 = vmul.f32 %v2806, %v2913
        %v2937 = vmul.f32 %v2807, %v2913
        %v2938 = vmul.f32 %v2808, %v2914
        %v2939 = vmul.f32 %v2809, %v2914
        %v2940 = vmul.f32 %v2810, %v2915
        %v2941 = vmul.f32 %v2811, %v2915
        %s2942 = scalar_lea.vmem [#allocation14], 2
        %v2943 = vld [vmem:[%s2942] sm:$0x3]
        %v2945 = vlaneseq
        %v2946 = vshrl.u32 %v2945, 7
        %v2947 = vsub.s32 0, %v2946
        %v2948 = vrot.slane %v2943, %v2947
        %v2949 = vlaneseq
        %v2950 = vshrl.u32 %v2949, 7
        %v2951 = vsub.s32 1, %v2950
        %v2952 = vrot.slane %v2943, %v2951
        %v2955 = vmul.f32 %v2916, %v2948
        %v2956 = vmul.f32 %v2917, %v2952
        %v2957 = vmul.f32 %v2918, %v2948
        %v2958 = vmul.f32 %v2919, %v2952
        %v2959 = vmul.f32 %v2920, %v2948
        %v2960 = vmul.f32 %v2921, %v2952
        %v2961 = vmul.f32 %v2922, %v2948
        %v2962 = vmul.f32 %v2923, %v2952
        %v2963 = vmul.f32 %v2924, %v2948
        %v2964 = vmul.f32 %v2925, %v2952
        %v2965 = vmul.f32 %v2926, %v2948
        %v2966 = vmul.f32 %v2927, %v2952
        %v2967 = vmul.f32 %v2928, %v2948
        %v2968 = vmul.f32 %v2929, %v2952
        %v2969 = vmul.f32 %v2930, %v2948
        %v2970 = vmul.f32 %v2931, %v2952
        %v2971 = vmul.f32 %v2932, %v2948
        %v2972 = vmul.f32 %v2933, %v2952
        %v2973 = vmul.f32 %v2934, %v2948
        %v2974 = vmul.f32 %v2935, %v2952
        %v2975 = vmul.f32 %v2936, %v2948
        %v2976 = vmul.f32 %v2937, %v2952
        %v2977 = vmul.f32 %v2938, %v2948
        %v2978 = vmul.f32 %v2939, %v2952
        %v2979 = vmul.f32 %v2940, %v2948
        %v2980 = vmul.f32 %v2941, %v2952
        %s2981 = scalar_lea.vmem [#allocation16], 2
        %v2982 = vld [vmem:[%s2981] sm:$0x3]
        %v2984 = vlaneseq
        %v2985 = vshrl.u32 %v2984, 7
        %v2986 = vsub.s32 0, %v2985
        %v2987 = vrot.slane %v2982, %v2986
        %v2988 = vlaneseq
        %v2989 = vshrl.u32 %v2988, 7
        %v2990 = vsub.s32 1, %v2989
        %v2991 = vrot.slane %v2982, %v2990
        %v2994 = vadd.f32 %v2955, %v2987
        %v2995 = vadd.f32 %v2956, %v2991
        %v2996 = vadd.f32 %v2957, %v2987
        %v2997 = vadd.f32 %v2958, %v2991
        %v2998 = vadd.f32 %v2959, %v2987
        %v2999 = vadd.f32 %v2960, %v2991
        %v3000 = vadd.f32 %v2961, %v2987
        %v3001 = vadd.f32 %v2962, %v2991
        %v3002 = vadd.f32 %v2963, %v2987
        %v3003 = vadd.f32 %v2964, %v2991
        %v3004 = vadd.f32 %v2965, %v2987
        %v3005 = vadd.f32 %v2966, %v2991
        %v3006 = vadd.f32 %v2967, %v2987
        %v3007 = vadd.f32 %v2968, %v2991
        %v3008 = vadd.f32 %v2969, %v2987
        %v3009 = vadd.f32 %v2970, %v2991
        %v3010 = vadd.f32 %v2971, %v2987
        %v3011 = vadd.f32 %v2972, %v2991
        %v3012 = vadd.f32 %v2973, %v2987
        %v3013 = vadd.f32 %v2974, %v2991
        %v3014 = vadd.f32 %v2975, %v2987
        %v3015 = vadd.f32 %v2976, %v2991
        %v3016 = vadd.f32 %v2977, %v2987
        %v3017 = vadd.f32 %v2978, %v2991
        %v3018 = vadd.f32 %v2979, %v2987
        %v3019 = vadd.f32 %v2980, %v2991
        %v3020 = vxor.u32 %v2994, 2147483648
        %v3021 = vxor.u32 %v2995, 2147483648
        %v3022 = vxor.u32 %v2996, 2147483648
        %v3023 = vxor.u32 %v2997, 2147483648
        %v3024 = vxor.u32 %v2998, 2147483648
        %v3025 = vxor.u32 %v2999, 2147483648
        %v3026 = vxor.u32 %v3000, 2147483648
        %v3027 = vxor.u32 %v3001, 2147483648
        %v3028 = vxor.u32 %v3002, 2147483648
        %v3029 = vxor.u32 %v3003, 2147483648
        %v3030 = vxor.u32 %v3004, 2147483648
        %v3031 = vxor.u32 %v3005, 2147483648
        %v3032 = vxor.u32 %v3006, 2147483648
        %v3033 = vxor.u32 %v3007, 2147483648
        %v3034 = vxor.u32 %v3008, 2147483648
        %v3035 = vxor.u32 %v3009, 2147483648
        %v3036 = vxor.u32 %v3010, 2147483648
        %v3037 = vxor.u32 %v3011, 2147483648
        %v3038 = vxor.u32 %v3012, 2147483648
        %v3039 = vxor.u32 %v3013, 2147483648
        %v3040 = vxor.u32 %v3014, 2147483648
        %v3041 = vxor.u32 %v3015, 2147483648
        %v3042 = vxor.u32 %v3016, 2147483648
        %v3043 = vxor.u32 %v3017, 2147483648
        %v3044 = vxor.u32 %v3018, 2147483648
        %v3045 = vxor.u32 %v3019, 2147483648
        %v3046 = vmul.f32 %v3020, 1.442695
        %v3047 = vpow.pop %v3046
        %v3048 = vmul.f32 %v3021, 1.442695
        %v3049 = vpow.pop %v3048
        %v3050 = vmul.f32 %v3022, 1.442695
        %v3051 = vpow.pop %v3050
        %v3052 = vmul.f32 %v3023, 1.442695
        %v3053 = vpow.pop %v3052
        %v3054 = vmul.f32 %v3024, 1.442695
        %v3055 = vpow.pop %v3054
        %v3056 = vmul.f32 %v3025, 1.442695
        %v3057 = vpow.pop %v3056
        %v3058 = vmul.f32 %v3026, 1.442695
        %v3059 = vpow.pop %v3058
        %v3060 = vmul.f32 %v3027, 1.442695
        %v3061 = vpow.pop %v3060
        %v3062 = vmul.f32 %v3028, 1.442695
        %v3063 = vpow.pop %v3062
        %v3064 = vmul.f32 %v3029, 1.442695
        %v3065 = vpow.pop %v3064
        %v3066 = vmul.f32 %v3030, 1.442695
        %v3067 = vpow.pop %v3066
        %v3068 = vmul.f32 %v3031, 1.442695
        %v3069 = vpow.pop %v3068
        %v3070 = vmul.f32 %v3032, 1.442695
        %v3071 = vpow.pop %v3070
        %v3072 = vmul.f32 %v3033, 1.442695
        %v3073 = vpow.pop %v3072
        %v3074 = vmul.f32 %v3034, 1.442695
        %v3075 = vpow.pop %v3074
        %v3076 = vmul.f32 %v3035, 1.442695
        %v3077 = vpow.pop %v3076
        %v3078 = vmul.f32 %v3036, 1.442695
        %v3079 = vpow.pop %v3078
        %v3080 = vmul.f32 %v3037, 1.442695
        %v3081 = vpow.pop %v3080
        %v3082 = vmul.f32 %v3038, 1.442695
        %v3083 = vpow.pop %v3082
        %v3084 = vmul.f32 %v3039, 1.442695
        %v3085 = vpow.pop %v3084
        %v3086 = vmul.f32 %v3040, 1.442695
        %v3087 = vpow.pop %v3086
        %v3088 = vmul.f32 %v3041, 1.442695
        %v3089 = vpow.pop %v3088
        %v3090 = vmul.f32 %v3042, 1.442695
        %v3091 = vpow.pop %v3090
        %v3092 = vmul.f32 %v3043, 1.442695
        %v3093 = vpow.pop %v3092
        %v3094 = vmul.f32 %v3044, 1.442695
        %v3095 = vpow.pop %v3094
        %v3096 = vmul.f32 %v3045, 1.442695
        %v3097 = vpow.pop %v3096
        %v3098 = vadd.f32 %v3047, 1.0
        %v3099 = vadd.f32 %v3049, 1.0
        %v3100 = vadd.f32 %v3051, 1.0
        %v3101 = vadd.f32 %v3053, 1.0
        %v3102 = vadd.f32 %v3055, 1.0
        %v3103 = vadd.f32 %v3057, 1.0
        %v3104 = vadd.f32 %v3059, 1.0
        %v3105 = vadd.f32 %v3061, 1.0
        %v3106 = vadd.f32 %v3063, 1.0
        %v3107 = vadd.f32 %v3065, 1.0
        %v3108 = vadd.f32 %v3067, 1.0
        %v3109 = vadd.f32 %v3069, 1.0
        %v3110 = vadd.f32 %v3071, 1.0
        %v3111 = vadd.f32 %v3073, 1.0
        %v3112 = vadd.f32 %v3075, 1.0
        %v3113 = vadd.f32 %v3077, 1.0
        %v3114 = vadd.f32 %v3079, 1.0
        %v3115 = vadd.f32 %v3081, 1.0
        %v3116 = vadd.f32 %v3083, 1.0
        %v3117 = vadd.f32 %v3085, 1.0
        %v3118 = vadd.f32 %v3087, 1.0
        %v3119 = vadd.f32 %v3089, 1.0
        %v3120 = vadd.f32 %v3091, 1.0
        %v3121 = vadd.f32 %v3093, 1.0
        %v3122 = vadd.f32 %v3095, 1.0
        %v3123 = vadd.f32 %v3097, 1.0
        %v3124 = vrcp.pop %v3098
        %v3125 = vmul.f32 1.0, %v3124
        %v3126 = vrcp.pop %v3099
        %v3127 = vmul.f32 1.0, %v3126
        %v3128 = vrcp.pop %v3100
        %v3129 = vmul.f32 1.0, %v3128
        %v3130 = vrcp.pop %v3101
        %v3131 = vmul.f32 1.0, %v3130
        %v3132 = vrcp.pop %v3102
        %v3133 = vmul.f32 1.0, %v3132
        %v3134 = vrcp.pop %v3103
        %v3135 = vmul.f32 1.0, %v3134
        %v3136 = vrcp.pop %v3104
        %v3137 = vmul.f32 1.0, %v3136
        %v3138 = vrcp.pop %v3105
        %v3139 = vmul.f32 1.0, %v3138
        %v3140 = vrcp.pop %v3106
        %v3141 = vmul.f32 1.0, %v3140
        %v3142 = vrcp.pop %v3107
        %v3143 = vmul.f32 1.0, %v3142
        %v3144 = vrcp.pop %v3108
        %v3145 = vmul.f32 1.0, %v3144
        %v3146 = vrcp.pop %v3109
        %v3147 = vmul.f32 1.0, %v3146
        %v3148 = vrcp.pop %v3110
        %v3149 = vmul.f32 1.0, %v3148
        %v3150 = vrcp.pop %v3111
        %v3151 = vmul.f32 1.0, %v3150
        %v3152 = vrcp.pop %v3112
        %v3153 = vmul.f32 1.0, %v3152
        %v3154 = vrcp.pop %v3113
        %v3155 = vmul.f32 1.0, %v3154
        %v3156 = vrcp.pop %v3114
        %v3157 = vmul.f32 1.0, %v3156
        %v3158 = vrcp.pop %v3115
        %v3159 = vmul.f32 1.0, %v3158
        %v3160 = vrcp.pop %v3116
        %v3161 = vmul.f32 1.0, %v3160
        %v3162 = vrcp.pop %v3117
        %v3163 = vmul.f32 1.0, %v3162
        %v3164 = vrcp.pop %v3118
        %v3165 = vmul.f32 1.0, %v3164
        %v3166 = vrcp.pop %v3119
        %v3167 = vmul.f32 1.0, %v3166
        %v3168 = vrcp.pop %v3120
        %v3169 = vmul.f32 1.0, %v3168
        %v3170 = vrcp.pop %v3121
        %v3171 = vmul.f32 1.0, %v3170
        %v3172 = vrcp.pop %v3122
        %v3173 = vmul.f32 1.0, %v3172
        %v3174 = vrcp.pop %v3123
        %v3175 = vmul.f32 1.0, %v3174
        %v3176 = vmul.f32 %v3125, 2.0
        %v3177 = vmul.f32 %v3127, 2.0
        %v3178 = vmul.f32 %v3129, 2.0
        %v3179 = vmul.f32 %v3131, 2.0
        %v3180 = vmul.f32 %v3133, 2.0
        %v3181 = vmul.f32 %v3135, 2.0
        %v3182 = vmul.f32 %v3137, 2.0
        %v3183 = vmul.f32 %v3139, 2.0
        %v3184 = vmul.f32 %v3141, 2.0
        %v3185 = vmul.f32 %v3143, 2.0
        %v3186 = vmul.f32 %v3145, 2.0
        %v3187 = vmul.f32 %v3147, 2.0
        %v3188 = vmul.f32 %v3149, 2.0
        %v3189 = vmul.f32 %v3151, 2.0
        %v3190 = vmul.f32 %v3153, 2.0
        %v3191 = vmul.f32 %v3155, 2.0
        %v3192 = vmul.f32 %v3157, 2.0
        %v3193 = vmul.f32 %v3159, 2.0
        %v3194 = vmul.f32 %v3161, 2.0
        %v3195 = vmul.f32 %v3163, 2.0
        %v3196 = vmul.f32 %v3165, 2.0
        %v3197 = vmul.f32 %v3167, 2.0
        %v3198 = vmul.f32 %v3169, 2.0
        %v3199 = vmul.f32 %v3171, 2.0
        %v3200 = vmul.f32 %v3173, 2.0
        %v3201 = vmul.f32 %v3175, 2.0
        %s3202 = scalar_lea.vmem [#allocation10], 256
        %v3203 = vld [vmem:[%s3202] sm:$0xff]
        %v3204 = vld [vmem:[%s3202 + $0x8] sm:$0xff]
        %v3205 = vld [vmem:[%s3202 + $0x10] sm:$0xff]
        %v3206 = vld [vmem:[%s3202 + $0x18] sm:$0xff]
        %v3207 = vld [vmem:[%s3202 + $0x20] sm:$0xff]
        %v3208 = vld [vmem:[%s3202 + $0x28] sm:$0xff]
        %v3209 = vld [vmem:[%s3202 + $0x30] sm:$0xff]
        %v3210 = vld [vmem:[%s3202 + $0x38] sm:$0xff]
        %v3211 = vld [vmem:[%s3202 + $0x40] sm:$0xff]
        %v3212 = vld [vmem:[%s3202 + $0x48] sm:$0xff]
        %v3213 = vld [vmem:[%s3202 + $0x50] sm:$0xff]
        %v3214 = vld [vmem:[%s3202 + $0x58] sm:$0xff]
        %v3215 = vld [vmem:[%s3202 + $0x60] sm:$0xff]
        %v3216 = vld [vmem:[%s3202 + $0x68] sm:$0xff]
        %v3217 = vld [vmem:[%s3202 + $0x70] sm:$0xff]
        %v3218 = vld [vmem:[%s3202 + $0x78] sm:$0xff]
        %v3219 = vld [vmem:[%s3202 + $0x80] sm:$0xff]
        %v3220 = vld [vmem:[%s3202 + $0x88] sm:$0xff]
        %v3221 = vld [vmem:[%s3202 + $0x90] sm:$0xff]
        %v3222 = vld [vmem:[%s3202 + $0x98] sm:$0xff]
        %v3223 = vld [vmem:[%s3202 + $0xa0] sm:$0xff]
        %v3224 = vld [vmem:[%s3202 + $0xa8] sm:$0xff]
        %v3225 = vld [vmem:[%s3202 + $0xb0] sm:$0xff]
        %v3226 = vld [vmem:[%s3202 + $0xb8] sm:$0xff]
        %v3227 = vld [vmem:[%s3202 + $0xc0] sm:$0xff]
        %v3228 = vld [vmem:[%s3202 + $0xc8] sm:$0xff]
        %v3229 = vld [vmem:[%s3202 + $0xd0] sm:$0xff]
        %v3230 = vld [vmem:[%s3202 + $0xd8] sm:$0xff]
        %v3231 = vld [vmem:[%s3202 + $0xe0] sm:$0xff]
        %v3232 = vld [vmem:[%s3202 + $0xe8] sm:$0xff]
        %v3233 = vld [vmem:[%s3202 + $0xf0] sm:$0xff]
        %v3234 = vld [vmem:[%s3202 + $0xf8] sm:$0xff]
        %3235 = vmatprep.subr.mxu0 %v3204
        %3236 = vmatpush1.msra.mxu0 %v3203
        %3237 = vmatprep.subr.mxu0 %v3206
        %3238 = vmatpush1.msra.mxu0 %v3205
        %3239 = vmatprep.subr.mxu0 %v3208
        %3240 = vmatpush1.msra.mxu0 %v3207
        %3241 = vmatprep.subr.mxu0 %v3210
        %3242 = vmatpush1.msra.mxu0 %v3209
        %3243 = vmatprep.subr.mxu0 %v3212
        %3244 = vmatpush1.msra.mxu0 %v3211
        %3245 = vmatprep.subr.mxu0 %v3214
        %3246 = vmatpush1.msra.mxu0 %v3213
        %3247 = vmatprep.subr.mxu0 %v3216
        %3248 = vmatpush1.msra.mxu0 %v3215
        %3249 = vmatprep.subr.mxu0 %v3218
        %3250 = vmatpush1.msra.mxu0 %v3217
        %3251 = vmatprep.subr.mxu0 %v3220
        %3252 = vmatpush1.msra.mxu0 %v3219
        %3253 = vmatprep.subr.mxu0 %v3222
        %3254 = vmatpush1.msra.mxu0 %v3221
        %3255 = vmatprep.subr.mxu0 %v3224
        %3256 = vmatpush1.msra.mxu0 %v3223
        %3257 = vmatprep.subr.mxu0 %v3226
        %3258 = vmatpush1.msra.mxu0 %v3225
        %3259 = vmatprep.subr.mxu0 %v3228
        %3260 = vmatpush1.msra.mxu0 %v3227
        %3261 = vmatprep.subr.mxu0 %v3230
        %3262 = vmatpush1.msra.mxu0 %v3229
        %3263 = vmatprep.subr.mxu0 %v3232
        %3264 = vmatpush1.msra.mxu0 %v3231
        %3265 = vmatprep.subr.mxu0 %v3234
        %3266 = vmatpush1.msra.mxu0 %v3233
        %3267 = vmatprep.subr.mxu0 0.0
        %3268 = vmatpush1.msra.mxu0 0.0
        %3269 = vmatprep.subr.mxu0 0.0
        %3270 = vmatpush1.msra.mxu0 0.0
        %3271 = vmatprep.subr.mxu0 0.0
        %3272 = vmatpush1.msra.mxu0 0.0
        %3273 = vmatprep.subr.mxu0 0.0
        %3274 = vmatpush1.msra.mxu0 0.0
        %3275 = vmatprep.subr.mxu0 0.0
        %3276 = vmatpush1.msra.mxu0 0.0
        %3277 = vmatprep.subr.mxu0 0.0
        %3278 = vmatpush1.msra.mxu0 0.0
        %3279 = vmatprep.subr.mxu0 0.0
        %3280 = vmatpush1.msra.mxu0 0.0
        %3281 = vmatprep.subr.mxu0 0.0
        %3282 = vmatpush1.msra.mxu0 0.0
        %3283 = vmatprep.subr.mxu0 0.0
        %3284 = vmatpush1.msra.mxu0 0.0
        %3285 = vmatprep.subr.mxu0 0.0
        %3286 = vmatpush1.msra.mxu0 0.0
        %3287 = vmatprep.subr.mxu0 0.0
        %3288 = vmatpush1.msra.mxu0 0.0
        %3289 = vmatprep.subr.mxu0 0.0
        %3290 = vmatpush1.msra.mxu0 0.0
        %3291 = vmatprep.subr.mxu0 0.0
        %3292 = vmatpush1.msra.mxu0 0.0
        %3293 = vmatprep.subr.mxu0 0.0
        %3294 = vmatpush1.msra.mxu0 0.0
        %3295 = vmatprep.subr.mxu0 0.0
        %3296 = vmatpush1.msra.mxu0 0.0
        %3297 = vmatprep.subr.mxu0 0.0
        %3298 = vmatpush1.msra.mxu0 0.0
        %3299 = vmatprep.mubr.f32.mxu0 0.0
        %3300 = vmatmul.mubr.f32.gmra.mrb[0].mxu0 %v494
        %v3301 = vpop.f32.mrb[0].mxu0
        %v3302 = vadd.f32 %v622, %v3301
        %v3303 = vpop.f32.mrb[0].mxu0
        %v3304 = vadd.f32 %v626, %v3303
        %3305 = vmatprep.mubr.f32.mxu0 0.0
        %3306 = vmatmul.mubr.f32.gmra.mrb[0].mxu0 %v495
        %v3307 = vpop.f32.mrb[0].mxu0
        %v3308 = vadd.f32 %v622, %v3307
        %v3309 = vpop.f32.mrb[0].mxu0
        %v3310 = vadd.f32 %v626, %v3309
        %3311 = vmatprep.mubr.f32.mxu0 0.0
        %3312 = vmatmul.mubr.f32.gmra.mrb[0].mxu0 %v496
        %v3313 = vpop.f32.mrb[0].mxu0
        %v3314 = vadd.f32 %v622, %v3313
        %v3315 = vpop.f32.mrb[0].mxu0
        %v3316 = vadd.f32 %v626, %v3315
        %3317 = vmatprep.mubr.f32.mxu0 0.0
        %3318 = vmatmul.mubr.f32.gmra.mrb[0].mxu0 %v497
        %v3319 = vpop.f32.mrb[0].mxu0
        %v3320 = vadd.f32 %v622, %v3319
        %v3321 = vpop.f32.mrb[0].mxu0
        %v3322 = vadd.f32 %v626, %v3321
        %3323 = vmatprep.mubr.f32.mxu0 0.0
        %3324 = vmatmul.mubr.f32.gmra.mrb[0].mxu0 %v498
        %v3325 = vpop.f32.mrb[0].mxu0
        %v3326 = vadd.f32 %v622, %v3325
        %v3327 = vpop.f32.mrb[0].mxu0
        %v3328 = vadd.f32 %v626, %v3327
        %3329 = vmatprep.mubr.f32.mxu0 0.0
        %3330 = vmatmul.mubr.f32.gmra.mrb[0].mxu0 %v499
        %v3331 = vpop.f32.mrb[0].mxu0
        %v3332 = vadd.f32 %v622, %v3331
        %v3333 = vpop.f32.mrb[0].mxu0
        %v3334 = vadd.f32 %v626, %v3333
        %3335 = vmatprep.mubr.f32.mxu0 0.0
        %3336 = vmatmul.mubr.f32.gmra.mrb[0].mxu0 %v500
        %v3337 = vpop.f32.mrb[0].mxu0
        %v3338 = vadd.f32 %v622, %v3337
        %v3339 = vpop.f32.mrb[0].mxu0
        %v3340 = vadd.f32 %v626, %v3339
        %3341 = vmatprep.mubr.f32.mxu0 0.0
        %3342 = vmatmul.mubr.f32.gmra.mrb[0].mxu0 %v501
        %v3343 = vpop.f32.mrb[0].mxu0
        %v3344 = vadd.f32 %v622, %v3343
        %v3345 = vpop.f32.mrb[0].mxu0
        %v3346 = vadd.f32 %v626, %v3345
        %3347 = vmatprep.mubr.f32.mxu0 0.0
        %3348 = vmatmul.mubr.f32.gmra.mrb[0].mxu0 %v502
        %v3349 = vpop.f32.mrb[0].mxu0
        %v3350 = vadd.f32 %v622, %v3349
        %v3351 = vpop.f32.mrb[0].mxu0
        %v3352 = vadd.f32 %v626, %v3351
        %3353 = vmatprep.mubr.f32.mxu0 0.0
        %3354 = vmatmul.mubr.f32.gmra.mrb[0].mxu0 %v503
        %v3355 = vpop.f32.mrb[0].mxu0
        %v3356 = vadd.f32 %v622, %v3355
        %v3357 = vpop.f32.mrb[0].mxu0
        %v3358 = vadd.f32 %v626, %v3357
        %3359 = vmatprep.mubr.f32.mxu0 0.0
        %3360 = vmatmul.mubr.f32.gmra.mrb[0].mxu0 %v504
        %v3361 = vpop.f32.mrb[0].mxu0
        %v3362 = vadd.f32 %v622, %v3361
        %v3363 = vpop.f32.mrb[0].mxu0
        %v3364 = vadd.f32 %v626, %v3363
        %3365 = vmatprep.mubr.f32.mxu0 0.0
        %3366 = vmatmul.mubr.f32.gmra.mrb[0].mxu0 %v505
        %v3367 = vpop.f32.mrb[0].mxu0
        %v3368 = vadd.f32 %v622, %v3367
        %v3369 = vpop.f32.mrb[0].mxu0
        %v3370 = vadd.f32 %v626, %v3369
        %3371 = vmatprep.mubr.f32.mxu0 0.0
        %3372 = vmatmul.mubr.f32.gmra.mrb[0].mxu0 %v506
        %v3373 = vpop.f32.mrb[0].mxu0
        %v3374 = vadd.f32 %v622, %v3373
        %v3375 = vpop.f32.mrb[0].mxu0
        %v3376 = vadd.f32 %v626, %v3375
        %3377 = vdwg.mxu0
        %v3378 = vmul.f32 %v3176, %v3302
        %v3379 = vmul.f32 %v3177, %v3304
        %v3380 = vmul.f32 %v3178, %v3308
        %v3381 = vmul.f32 %v3179, %v3310
        %v3382 = vmul.f32 %v3180, %v3314
        %v3383 = vmul.f32 %v3181, %v3316
        %v3384 = vmul.f32 %v3182, %v3320
        %v3385 = vmul.f32 %v3183, %v3322
        %v3386 = vmul.f32 %v3184, %v3326
        %v3387 = vmul.f32 %v3185, %v3328
        %v3388 = vmul.f32 %v3186, %v3332
        %v3389 = vmul.f32 %v3187, %v3334
        %v3390 = vmul.f32 %v3188, %v3338
        %v3391 = vmul.f32 %v3189, %v3340
        %v3392 = vmul.f32 %v3190, %v3344
        %v3393 = vmul.f32 %v3191, %v3346
        %v3394 = vmul.f32 %v3192, %v3350
        %v3395 = vmul.f32 %v3193, %v3352
        %v3396 = vmul.f32 %v3194, %v3356
        %v3397 = vmul.f32 %v3195, %v3358
        %v3398 = vmul.f32 %v3196, %v3362
        %v3399 = vmul.f32 %v3197, %v3364
        %v3400 = vmul.f32 %v3198, %v3368
        %v3401 = vmul.f32 %v3199, %v3370
        %v3402 = vmul.f32 %v3200, %v3374
        %v3403 = vmul.f32 %v3201, %v3376
        %v3404 = vadd.f32 %v2073, %v3378
        %v3405 = vadd.f32 %v2074, %v3379
        %v3406 = vadd.f32 %v2075, %v3380
        %v3407 = vadd.f32 %v2076, %v3381
        %v3408 = vadd.f32 %v2077, %v3382
        %v3409 = vadd.f32 %v2078, %v3383
        %v3410 = vadd.f32 %v2079, %v3384
        %v3411 = vadd.f32 %v2080, %v3385
        %v3412 = vadd.f32 %v2081, %v3386
        %v3413 = vadd.f32 %v2082, %v3387
        %v3414 = vadd.f32 %v2083, %v3388
        %v3415 = vadd.f32 %v2084, %v3389
        %v3416 = vadd.f32 %v2085, %v3390
        %v3417 = vadd.f32 %v2086, %v3391
        %v3418 = vadd.f32 %v2087, %v3392
        %v3419 = vadd.f32 %v2088, %v3393
        %v3420 = vadd.f32 %v2089, %v3394
        %v3421 = vadd.f32 %v2090, %v3395
        %v3422 = vadd.f32 %v2091, %v3396
        %v3423 = vadd.f32 %v2092, %v3397
        %v3424 = vadd.f32 %v2093, %v3398
        %v3425 = vadd.f32 %v2094, %v3399
        %v3426 = vadd.f32 %v2095, %v3400
        %v3427 = vadd.f32 %v2096, %v3401
        %v3428 = vadd.f32 %v2097, %v3402
        %v3429 = vadd.f32 %v2098, %v3403
        %s3430 = scalar_lea.vmem [#allocation11], 3072
        %v3431 = vld [vmem:[%s3430] sm:$0xff]
        %v3432 = vld [vmem:[%s3430 + $0x8] sm:$0xff]
        %v3433 = vld [vmem:[%s3430 + $0x10] sm:$0xff]
        %v3434 = vld [vmem:[%s3430 + $0x18] sm:$0xff]
        %v3435 = vld [vmem:[%s3430 + $0x20] sm:$0xff]
        %v3436 = vld [vmem:[%s3430 + $0x28] sm:$0xff]
        %v3437 = vld [vmem:[%s3430 + $0x30] sm:$0xff]
        %v3438 = vld [vmem:[%s3430 + $0x38] sm:$0xff]
        %v3439 = vld [vmem:[%s3430 + $0x40] sm:$0xff]
        %v3440 = vld [vmem:[%s3430 + $0x48] sm:$0xff]
        %v3441 = vld [vmem:[%s3430 + $0x50] sm:$0xff]
        %v3442 = vld [vmem:[%s3430 + $0x58] sm:$0xff]
        %v3443 = vld [vmem:[%s3430 + $0x60] sm:$0xff]
        %v3444 = vld [vmem:[%s3430 + $0x68] sm:$0xff]
        %v3445 = vld [vmem:[%s3430 + $0x70] sm:$0xff]
        %v3446 = vld [vmem:[%s3430 + $0x78] sm:$0xff]
        %v3447 = vld [vmem:[%s3430 + $0x80] sm:$0xff]
        %v3448 = vld [vmem:[%s3430 + $0x88] sm:$0xff]
        %v3449 = vld [vmem:[%s3430 + $0x90] sm:$0xff]
        %v3450 = vld [vmem:[%s3430 + $0x98] sm:$0xff]
        %v3451 = vld [vmem:[%s3430 + $0xa0] sm:$0xff]
        %v3452 = vld [vmem:[%s3430 + $0xa8] sm:$0xff]
        %v3453 = vld [vmem:[%s3430 + $0xb0] sm:$0xff]
        %v3454 = vld [vmem:[%s3430 + $0xb8] sm:$0xff]
        %v3455 = vld [vmem:[%s3430 + $0xc0] sm:$0xff]
        %v3456 = vld [vmem:[%s3430 + $0xc8] sm:$0xff]
        %v3457 = vld [vmem:[%s3430 + $0xd0] sm:$0xff]
        %v3458 = vld [vmem:[%s3430 + $0xd8] sm:$0xff]
        %v3459 = vld [vmem:[%s3430 + $0xe0] sm:$0xff]
        %v3460 = vld [vmem:[%s3430 + $0xe8] sm:$0xff]
        %v3461 = vld [vmem:[%s3430 + $0xf0] sm:$0xff]
        %v3462 = vld [vmem:[%s3430 + $0xf8] sm:$0xff]
        %v3463 = vld [vmem:[%s3430 + $0x100] sm:$0xff]
        %v3464 = vld [vmem:[%s3430 + $0x108] sm:$0xff]
        %v3465 = vld [vmem:[%s3430 + $0x110] sm:$0xff]
        %v3466 = vld [vmem:[%s3430 + $0x118] sm:$0xff]
        %v3467 = vld [vmem:[%s3430 + $0x120] sm:$0xff]
        %v3468 = vld [vmem:[%s3430 + $0x128] sm:$0xff]
        %v3469 = vld [vmem:[%s3430 + $0x130] sm:$0xff]
        %v3470 = vld [vmem:[%s3430 + $0x138] sm:$0xff]
        %v3471 = vld [vmem:[%s3430 + $0x140] sm:$0xff]
        %v3472 = vld [vmem:[%s3430 + $0x148] sm:$0xff]
        %v3473 = vld [vmem:[%s3430 + $0x150] sm:$0xff]
        %v3474 = vld [vmem:[%s3430 + $0x158] sm:$0xff]
        %v3475 = vld [vmem:[%s3430 + $0x160] sm:$0xff]
        %v3476 = vld [vmem:[%s3430 + $0x168] sm:$0xff]
        %v3477 = vld [vmem:[%s3430 + $0x170] sm:$0xff]
        %v3478 = vld [vmem:[%s3430 + $0x178] sm:$0xff]
        %v3479 = vld [vmem:[%s3430 + $0x180] sm:$0xff]
        %v3480 = vld [vmem:[%s3430 + $0x188] sm:$0xff]
        %v3481 = vld [vmem:[%s3430 + $0x190] sm:$0xff]
        %v3482 = vld [vmem:[%s3430 + $0x198] sm:$0xff]
        %v3483 = vld [vmem:[%s3430 + $0x1a0] sm:$0xff]
        %v3484 = vld [vmem:[%s3430 + $0x1a8] sm:$0xff]
        %v3485 = vld [vmem:[%s3430 + $0x1b0] sm:$0xff]
        %v3486 = vld [vmem:[%s3430 + $0x1b8] sm:$0xff]
        %v3487 = vld [vmem:[%s3430 + $0x1c0] sm:$0xff]
        %v3488 = vld [vmem:[%s3430 + $0x1c8] sm:$0xff]
        %v3489 = vld [vmem:[%s3430 + $0x1d0] sm:$0xff]
        %v3490 = vld [vmem:[%s3430 + $0x1d8] sm:$0xff]
        %v3491 = vld [vmem:[%s3430 + $0x1e0] sm:$0xff]
        %v3492 = vld [vmem:[%s3430 + $0x1e8] sm:$0xff]
        %v3493 = vld [vmem:[%s3430 + $0x1f0] sm:$0xff]
        %v3494 = vld [vmem:[%s3430 + $0x1f8] sm:$0xff]
        %v3495 = vld [vmem:[%s3430 + $0x200] sm:$0xff]
        %v3496 = vld [vmem:[%s3430 + $0x208] sm:$0xff]
        %v3497 = vld [vmem:[%s3430 + $0x210] sm:$0xff]
        %v3498 = vld [vmem:[%s3430 + $0x218] sm:$0xff]
        %v3499 = vld [vmem:[%s3430 + $0x220] sm:$0xff]
        %v3500 = vld [vmem:[%s3430 + $0x228] sm:$0xff]
        %v3501 = vld [vmem:[%s3430 + $0x230] sm:$0xff]
        %v3502 = vld [vmem:[%s3430 + $0x238] sm:$0xff]
        %v3503 = vld [vmem:[%s3430 + $0x240] sm:$0xff]
        %v3504 = vld [vmem:[%s3430 + $0x248] sm:$0xff]
        %v3505 = vld [vmem:[%s3430 + $0x250] sm:$0xff]
        %v3506 = vld [vmem:[%s3430 + $0x258] sm:$0xff]
        %v3507 = vld [vmem:[%s3430 + $0x260] sm:$0xff]
        %v3508 = vld [vmem:[%s3430 + $0x268] sm:$0xff]
        %v3509 = vld [vmem:[%s3430 + $0x270] sm:$0xff]
        %v3510 = vld [vmem:[%s3430 + $0x278] sm:$0xff]
        %v3511 = vld [vmem:[%s3430 + $0x280] sm:$0xff]
        %v3512 = vld [vmem:[%s3430 + $0x288] sm:$0xff]
        %v3513 = vld [vmem:[%s3430 + $0x290] sm:$0xff]
        %v3514 = vld [vmem:[%s3430 + $0x298] sm:$0xff]
        %v3515 = vld [vmem:[%s3430 + $0x2a0] sm:$0xff]
        %v3516 = vld [vmem:[%s3430 + $0x2a8] sm:$0xff]
        %v3517 = vld [vmem:[%s3430 + $0x2b0] sm:$0xff]
        %v3518 = vld [vmem:[%s3430 + $0x2b8] sm:$0xff]
        %v3519 = vld [vmem:[%s3430 + $0x2c0] sm:$0xff]
        %v3520 = vld [vmem:[%s3430 + $0x2c8] sm:$0xff]
        %v3521 = vld [vmem:[%s3430 + $0x2d0] sm:$0xff]
        %v3522 = vld [vmem:[%s3430 + $0x2d8] sm:$0xff]
        %v3523 = vld [vmem:[%s3430 + $0x2e0] sm:$0xff]
        %v3524 = vld [vmem:[%s3430 + $0x2e8] sm:$0xff]
        %v3525 = vld [vmem:[%s3430 + $0x2f0] sm:$0xff]
        %v3526 = vld [vmem:[%s3430 + $0x2f8] sm:$0xff]
        %v3527 = vld [vmem:[%s3430 + $0x300] sm:$0xff]
        %v3528 = vld [vmem:[%s3430 + $0x308] sm:$0xff]
        %v3529 = vld [vmem:[%s3430 + $0x310] sm:$0xff]
        %v3530 = vld [vmem:[%s3430 + $0x318] sm:$0xff]
        %v3531 = vld [vmem:[%s3430 + $0x320] sm:$0xff]
        %v3532 = vld [vmem:[%s3430 + $0x328] sm:$0xff]
        %v3533 = vld [vmem:[%s3430 + $0x330] sm:$0xff]
        %v3534 = vld [vmem:[%s3430 + $0x338] sm:$0xff]
        %v3535 = vld [vmem:[%s3430 + $0x340] sm:$0xff]
        %v3536 = vld [vmem:[%s3430 + $0x348] sm:$0xff]
        %v3537 = vld [vmem:[%s3430 + $0x350] sm:$0xff]
        %v3538 = vld [vmem:[%s3430 + $0x358] sm:$0xff]
        %v3539 = vld [vmem:[%s3430 + $0x360] sm:$0xff]
        %v3540 = vld [vmem:[%s3430 + $0x368] sm:$0xff]
        %v3541 = vld [vmem:[%s3430 + $0x370] sm:$0xff]
        %v3542 = vld [vmem:[%s3430 + $0x378] sm:$0xff]
        %v3543 = vld [vmem:[%s3430 + $0x380] sm:$0xff]
        %v3544 = vld [vmem:[%s3430 + $0x388] sm:$0xff]
        %v3545 = vld [vmem:[%s3430 + $0x390] sm:$0xff]
        %v3546 = vld [vmem:[%s3430 + $0x398] sm:$0xff]
        %v3547 = vld [vmem:[%s3430 + $0x3a0] sm:$0xff]
        %v3548 = vld [vmem:[%s3430 + $0x3a8] sm:$0xff]
        %v3549 = vld [vmem:[%s3430 + $0x3b0] sm:$0xff]
        %v3550 = vld [vmem:[%s3430 + $0x3b8] sm:$0xff]
        %v3551 = vld [vmem:[%s3430 + $0x3c0] sm:$0xff]
        %v3552 = vld [vmem:[%s3430 + $0x3c8] sm:$0xff]
        %v3553 = vld [vmem:[%s3430 + $0x3d0] sm:$0xff]
        %v3554 = vld [vmem:[%s3430 + $0x3d8] sm:$0xff]
        %v3555 = vld [vmem:[%s3430 + $0x3e0] sm:$0xff]
        %v3556 = vld [vmem:[%s3430 + $0x3e8] sm:$0xff]
        %v3557 = vld [vmem:[%s3430 + $0x3f0] sm:$0xff]
        %v3558 = vld [vmem:[%s3430 + $0x3f8] sm:$0xff]
        %v3559 = vld [vmem:[%s3430 + $0x400] sm:$0xff]
        %v3560 = vld [vmem:[%s3430 + $0x408] sm:$0xff]
        %v3561 = vld [vmem:[%s3430 + $0x410] sm:$0xff]
        %v3562 = vld [vmem:[%s3430 + $0x418] sm:$0xff]
        %v3563 = vld [vmem:[%s3430 + $0x420] sm:$0xff]
        %v3564 = vld [vmem:[%s3430 + $0x428] sm:$0xff]
        %v3565 = vld [vmem:[%s3430 + $0x430] sm:$0xff]
        %v3566 = vld [vmem:[%s3430 + $0x438] sm:$0xff]
        %v3567 = vld [vmem:[%s3430 + $0x440] sm:$0xff]
        %v3568 = vld [vmem:[%s3430 + $0x448] sm:$0xff]
        %v3569 = vld [vmem:[%s3430 + $0x450] sm:$0xff]
        %v3570 = vld [vmem:[%s3430 + $0x458] sm:$0xff]
        %v3571 = vld [vmem:[%s3430 + $0x460] sm:$0xff]
        %v3572 = vld [vmem:[%s3430 + $0x468] sm:$0xff]
        %v3573 = vld [vmem:[%s3430 + $0x470] sm:$0xff]
        %v3574 = vld [vmem:[%s3430 + $0x478] sm:$0xff]
        %v3575 = vld [vmem:[%s3430 + $0x480] sm:$0xff]
        %v3576 = vld [vmem:[%s3430 + $0x488] sm:$0xff]
        %v3577 = vld [vmem:[%s3430 + $0x490] sm:$0xff]
        %v3578 = vld [vmem:[%s3430 + $0x498] sm:$0xff]
        %v3579 = vld [vmem:[%s3430 + $0x4a0] sm:$0xff]
        %v3580 = vld [vmem:[%s3430 + $0x4a8] sm:$0xff]
        %v3581 = vld [vmem:[%s3430 + $0x4b0] sm:$0xff]
        %v3582 = vld [vmem:[%s3430 + $0x4b8] sm:$0xff]
        %v3583 = vld [vmem:[%s3430 + $0x4c0] sm:$0xff]
        %v3584 = vld [vmem:[%s3430 + $0x4c8] sm:$0xff]
        %v3585 = vld [vmem:[%s3430 + $0x4d0] sm:$0xff]
        %v3586 = vld [vmem:[%s3430 + $0x4d8] sm:$0xff]
        %v3587 = vld [vmem:[%s3430 + $0x4e0] sm:$0xff]
        %v3588 = vld [vmem:[%s3430 + $0x4e8] sm:$0xff]
        %v3589 = vld [vmem:[%s3430 + $0x4f0] sm:$0xff]
        %v3590 = vld [vmem:[%s3430 + $0x4f8] sm:$0xff]
        %v3591 = vld [vmem:[%s3430 + $0x500] sm:$0xff]
        %v3592 = vld [vmem:[%s3430 + $0x508] sm:$0xff]
        %v3593 = vld [vmem:[%s3430 + $0x510] sm:$0xff]
        %v3594 = vld [vmem:[%s3430 + $0x518] sm:$0xff]
        %v3595 = vld [vmem:[%s3430 + $0x520] sm:$0xff]
        %v3596 = vld [vmem:[%s3430 + $0x528] sm:$0xff]
        %v3597 = vld [vmem:[%s3430 + $0x530] sm:$0xff]
        %v3598 = vld [vmem:[%s3430 + $0x538] sm:$0xff]
        %v3599 = vld [vmem:[%s3430 + $0x540] sm:$0xff]
        %v3600 = vld [vmem:[%s3430 + $0x548] sm:$0xff]
        %v3601 = vld [vmem:[%s3430 + $0x550] sm:$0xff]
        %v3602 = vld [vmem:[%s3430 + $0x558] sm:$0xff]
        %v3603 = vld [vmem:[%s3430 + $0x560] sm:$0xff]
        %v3604 = vld [vmem:[%s3430 + $0x568] sm:$0xff]
        %v3605 = vld [vmem:[%s3430 + $0x570] sm:$0xff]
        %v3606 = vld [vmem:[%s3430 + $0x578] sm:$0xff]
        %v3607 = vld [vmem:[%s3430 + $0x580] sm:$0xff]
        %v3608 = vld [vmem:[%s3430 + $0x588] sm:$0xff]
        %v3609 = vld [vmem:[%s3430 + $0x590] sm:$0xff]
        %v3610 = vld [vmem:[%s3430 + $0x598] sm:$0xff]
        %v3611 = vld [vmem:[%s3430 + $0x5a0] sm:$0xff]
        %v3612 = vld [vmem:[%s3430 + $0x5a8] sm:$0xff]
        %v3613 = vld [vmem:[%s3430 + $0x5b0] sm:$0xff]
        %v3614 = vld [vmem:[%s3430 + $0x5b8] sm:$0xff]
        %v3615 = vld [vmem:[%s3430 + $0x5c0] sm:$0xff]
        %v3616 = vld [vmem:[%s3430 + $0x5c8] sm:$0xff]
        %v3617 = vld [vmem:[%s3430 + $0x5d0] sm:$0xff]
        %v3618 = vld [vmem:[%s3430 + $0x5d8] sm:$0xff]
        %v3619 = vld [vmem:[%s3430 + $0x5e0] sm:$0xff]
        %v3620 = vld [vmem:[%s3430 + $0x5e8] sm:$0xff]
        %v3621 = vld [vmem:[%s3430 + $0x5f0] sm:$0xff]
        %v3622 = vld [vmem:[%s3430 + $0x5f8] sm:$0xff]
        %s3623 = scalar_lea.vmem [#allocation13], 4
        %v3624 = vld [vmem:[%s3623] sm:$0x3]
        %v3626 = vlaneseq
        %v3627 = vshrl.u32 %v3626, 7
        %v3628 = vsub.s32 0, %v3627
        %v3629 = vrot.slane %v3624, %v3628
        %v3630 = vlaneseq
        %v3631 = vshrl.u32 %v3630, 7
        %v3632 = vsub.s32 1, %v3631
        %v3633 = vrot.slane %v3624, %v3632
        %3636 = vmatprep.subr.mxu0 %v3432
        %3637 = vmatpush1.msra.mxu0 %v3431
        %3638 = vmatprep.subr.mxu0 %v3434
        %3639 = vmatpush1.msra.mxu0 %v3433
        %3640 = vmatprep.subr.mxu0 %v3436
        %3641 = vmatpush1.msra.mxu0 %v3435
        %3642 = vmatprep.subr.mxu0 %v3438
        %3643 = vmatpush1.msra.mxu0 %v3437
        %3644 = vmatprep.subr.mxu0 %v3440
        %3645 = vmatpush1.msra.mxu0 %v3439
        %3646 = vmatprep.subr.mxu0 %v3442
        %3647 = vmatpush1.msra.mxu0 %v3441
        %3648 = vmatprep.subr.mxu0 %v3444
        %3649 = vmatpush1.msra.mxu0 %v3443
        %3650 = vmatprep.subr.mxu0 %v3446
        %3651 = vmatpush1.msra.mxu0 %v3445
        %3652 = vmatprep.subr.mxu0 %v3448
        %3653 = vmatpush1.msra.mxu0 %v3447
        %3654 = vmatprep.subr.mxu0 %v3450
        %3655 = vmatpush1.msra.mxu0 %v3449
        %3656 = vmatprep.subr.mxu0 %v3452
        %3657 = vmatpush1.msra.mxu0 %v3451
        %3658 = vmatprep.subr.mxu0 %v3454
        %3659 = vmatpush1.msra.mxu0 %v3453
        %3660 = vmatprep.subr.mxu0 %v3456
        %3661 = vmatpush1.msra.mxu0 %v3455
        %3662 = vmatprep.subr.mxu0 %v3458
        %3663 = vmatpush1.msra.mxu0 %v3457
        %3664 = vmatprep.subr.mxu0 %v3460
        %3665 = vmatpush1.msra.mxu0 %v3459
        %3666 = vmatprep.subr.mxu0 %v3462
        %3667 = vmatpush1.msra.mxu0 %v3461
        %3668 = vmatprep.subr.mxu0 %v3464
        %3669 = vmatpush1.msra.mxu0 %v3463
        %3670 = vmatprep.subr.mxu0 %v3466
        %3671 = vmatpush1.msra.mxu0 %v3465
        %3672 = vmatprep.subr.mxu0 %v3468
        %3673 = vmatpush1.msra.mxu0 %v3467
        %3674 = vmatprep.subr.mxu0 %v3470
        %3675 = vmatpush1.msra.mxu0 %v3469
        %3676 = vmatprep.subr.mxu0 %v3472
        %3677 = vmatpush1.msra.mxu0 %v3471
        %3678 = vmatprep.subr.mxu0 %v3474
        %3679 = vmatpush1.msra.mxu0 %v3473
        %3680 = vmatprep.subr.mxu0 %v3476
        %3681 = vmatpush1.msra.mxu0 %v3475
        %3682 = vmatprep.subr.mxu0 %v3478
        %3683 = vmatpush1.msra.mxu0 %v3477
        %3684 = vmatprep.subr.mxu0 %v3480
        %3685 = vmatpush1.msra.mxu0 %v3479
        %3686 = vmatprep.subr.mxu0 %v3482
        %3687 = vmatpush1.msra.mxu0 %v3481
        %3688 = vmatprep.subr.mxu0 %v3484
        %3689 = vmatpush1.msra.mxu0 %v3483
        %3690 = vmatprep.subr.mxu0 %v3486
        %3691 = vmatpush1.msra.mxu0 %v3485
        %3692 = vmatprep.subr.mxu0 %v3488
        %3693 = vmatpush1.msra.mxu0 %v3487
        %3694 = vmatprep.subr.mxu0 %v3490
        %3695 = vmatpush1.msra.mxu0 %v3489
        %3696 = vmatprep.subr.mxu0 %v3492
        %3697 = vmatpush1.msra.mxu0 %v3491
        %3698 = vmatprep.subr.mxu0 %v3494
        %3699 = vmatpush1.msra.mxu0 %v3493
        %3700 = vmatprep.mubr.f32.mxu0 %v508
        %3701 = vmatmul.mubr.f32.gmra.mrb[0].mxu0 %v507
        %v3702 = vpop.f32.mrb[0].mxu0
        %v3703 = vadd.f32 %v3629, %v3702
        %v3704 = vpop.f32.mrb[0].mxu0
        %v3705 = vadd.f32 %v3633, %v3704
        %3706 = vmatprep.mubr.f32.mxu0 %v514
        %3707 = vmatmul.mubr.f32.gmra.mrb[0].mxu0 %v513
        %v3708 = vpop.f32.mrb[0].mxu0
        %v3709 = vadd.f32 %v3629, %v3708
        %v3710 = vpop.f32.mrb[0].mxu0
        %v3711 = vadd.f32 %v3633, %v3710
        %3712 = vmatprep.mubr.f32.mxu0 %v520
        %3713 = vmatmul.mubr.f32.gmra.mrb[0].mxu0 %v519
        %v3714 = vpop.f32.mrb[0].mxu0
        %v3715 = vadd.f32 %v3629, %v3714
        %v3716 = vpop.f32.mrb[0].mxu0
        %v3717 = vadd.f32 %v3633, %v3716
        %3718 = vmatprep.mubr.f32.mxu0 %v526
        %3719 = vmatmul.mubr.f32.gmra.mrb[0].mxu0 %v525
        %v3720 = vpop.f32.mrb[0].mxu0
        %v3721 = vadd.f32 %v3629, %v3720
        %v3722 = vpop.f32.mrb[0].mxu0
        %v3723 = vadd.f32 %v3633, %v3722
        %3724 = vmatprep.mubr.f32.mxu0 %v532
        %3725 = vmatmul.mubr.f32.gmra.mrb[0].mxu0 %v531
        %v3726 = vpop.f32.mrb[0].mxu0
        %v3727 = vadd.f32 %v3629, %v3726
        %v3728 = vpop.f32.mrb[0].mxu0
        %v3729 = vadd.f32 %v3633, %v3728
        %3730 = vmatprep.mubr.f32.mxu0 %v538
        %3731 = vmatmul.mubr.f32.gmra.mrb[0].mxu0 %v537
        %v3732 = vpop.f32.mrb[0].mxu0
        %v3733 = vadd.f32 %v3629, %v3732
        %v3734 = vpop.f32.mrb[0].mxu0
        %v3735 = vadd.f32 %v3633, %v3734
        %3736 = vmatprep.mubr.f32.mxu0 %v544
        %3737 = vmatmul.mubr.f32.gmra.mrb[0].mxu0 %v543
        %v3738 = vpop.f32.mrb[0].mxu0
        %v3739 = vadd.f32 %v3629, %v3738
        %v3740 = vpop.f32.mrb[0].mxu0
        %v3741 = vadd.f32 %v3633, %v3740
        %3742 = vmatprep.mubr.f32.mxu0 %v550
        %3743 = vmatmul.mubr.f32.gmra.mrb[0].mxu0 %v549
        %v3744 = vpop.f32.mrb[0].mxu0
        %v3745 = vadd.f32 %v3629, %v3744
        %v3746 = vpop.f32.mrb[0].mxu0
        %v3747 = vadd.f32 %v3633, %v3746
        %3748 = vmatprep.mubr.f32.mxu0 %v556
        %3749 = vmatmul.mubr.f32.gmra.mrb[0].mxu0 %v555
        %v3750 = vpop.f32.mrb[0].mxu0
        %v3751 = vadd.f32 %v3629, %v3750
        %v3752 = vpop.f32.mrb[0].mxu0
        %v3753 = vadd.f32 %v3633, %v3752
        %3754 = vmatprep.mubr.f32.mxu0 %v562
        %3755 = vmatmul.mubr.f32.gmra.mrb[0].mxu0 %v561
        %v3756 = vpop.f32.mrb[0].mxu0
        %v3757 = vadd.f32 %v3629, %v3756
        %v3758 = vpop.f32.mrb[0].mxu0
        %v3759 = vadd.f32 %v3633, %v3758
        %3760 = vmatprep.mubr.f32.mxu0 %v568
        %3761 = vmatmul.mubr.f32.gmra.mrb[0].mxu0 %v567
        %v3762 = vpop.f32.mrb[0].mxu0
        %v3763 = vadd.f32 %v3629, %v3762
        %v3764 = vpop.f32.mrb[0].mxu0
        %v3765 = vadd.f32 %v3633, %v3764
        %3766 = vmatprep.mubr.f32.mxu0 %v574
        %3767 = vmatmul.mubr.f32.gmra.mrb[0].mxu0 %v573
        %v3768 = vpop.f32.mrb[0].mxu0
        %v3769 = vadd.f32 %v3629, %v3768
        %v3770 = vpop.f32.mrb[0].mxu0
        %v3771 = vadd.f32 %v3633, %v3770
        %3772 = vmatprep.mubr.f32.mxu0 %v580
        %3773 = vmatmul.mubr.f32.gmra.mrb[0].mxu0 %v579
        %v3774 = vpop.f32.mrb[0].mxu0
        %v3775 = vadd.f32 %v3629, %v3774
        %v3776 = vpop.f32.mrb[0].mxu0
        %v3777 = vadd.f32 %v3633, %v3776
        %3778 = vdwg.mxu0
        %3779 = vmatprep.subr.mxu0 %v3496
        %3780 = vmatpush1.msra.mxu0 %v3495
        %3781 = vmatprep.subr.mxu0 %v3498
        %3782 = vmatpush1.msra.mxu0 %v3497
        %3783 = vmatprep.subr.mxu0 %v3500
        %3784 = vmatpush1.msra.mxu0 %v3499
        %3785 = vmatprep.subr.mxu0 %v3502
        %3786 = vmatpush1.msra.mxu0 %v3501
        %3787 = vmatprep.subr.mxu0 %v3504
        %3788 = vmatpush1.msra.mxu0 %v3503
        %3789 = vmatprep.subr.mxu0 %v3506
        %3790 = vmatpush1.msra.mxu0 %v3505
        %3791 = vmatprep.subr.mxu0 %v3508
        %3792 = vmatpush1.msra.mxu0 %v3507
        %3793 = vmatprep.subr.mxu0 %v3510
        %3794 = vmatpush1.msra.mxu0 %v3509
        %3795 = vmatprep.subr.mxu0 %v3512
        %3796 = vmatpush1.msra.mxu0 %v3511
        %3797 = vmatprep.subr.mxu0 %v3514
        %3798 = vmatpush1.msra.mxu0 %v3513
        %3799 = vmatprep.subr.mxu0 %v3516
        %3800 = vmatpush1.msra.mxu0 %v3515
        %3801 = vmatprep.subr.mxu0 %v3518
        %3802 = vmatpush1.msra.mxu0 %v3517
        %3803 = vmatprep.subr.mxu0 %v3520
        %3804 = vmatpush1.msra.mxu0 %v3519
        %3805 = vmatprep.subr.mxu0 %v3522
        %3806 = vmatpush1.msra.mxu0 %v3521
        %3807 = vmatprep.subr.mxu0 %v3524
        %3808 = vmatpush1.msra.mxu0 %v3523
        %3809 = vmatprep.subr.mxu0 %v3526
        %3810 = vmatpush1.msra.mxu0 %v3525
        %3811 = vmatprep.subr.mxu0 %v3528
        %3812 = vmatpush1.msra.mxu0 %v3527
        %3813 = vmatprep.subr.mxu0 %v3530
        %3814 = vmatpush1.msra.mxu0 %v3529
        %3815 = vmatprep.subr.mxu0 %v3532
        %3816 = vmatpush1.msra.mxu0 %v3531
        %3817 = vmatprep.subr.mxu0 %v3534
        %3818 = vmatpush1.msra.mxu0 %v3533
        %3819 = vmatprep.subr.mxu0 %v3536
        %3820 = vmatpush1.msra.mxu0 %v3535
        %3821 = vmatprep.subr.mxu0 %v3538
        %3822 = vmatpush1.msra.mxu0 %v3537
        %3823 = vmatprep.subr.mxu0 %v3540
        %3824 = vmatpush1.msra.mxu0 %v3539
        %3825 = vmatprep.subr.mxu0 %v3542
        %3826 = vmatpush1.msra.mxu0 %v3541
        %3827 = vmatprep.subr.mxu0 %v3544
        %3828 = vmatpush1.msra.mxu0 %v3543
        %3829 = vmatprep.subr.mxu0 %v3546
        %3830 = vmatpush1.msra.mxu0 %v3545
        %3831 = vmatprep.subr.mxu0 %v3548
        %3832 = vmatpush1.msra.mxu0 %v3547
        %3833 = vmatprep.subr.mxu0 %v3550
        %3834 = vmatpush1.msra.mxu0 %v3549
        %3835 = vmatprep.subr.mxu0 %v3552
        %3836 = vmatpush1.msra.mxu0 %v3551
        %3837 = vmatprep.subr.mxu0 %v3554
        %3838 = vmatpush1.msra.mxu0 %v3553
        %3839 = vmatprep.subr.mxu0 %v3556
        %3840 = vmatpush1.msra.mxu0 %v3555
        %3841 = vmatprep.subr.mxu0 %v3558
        %3842 = vmatpush1.msra.mxu0 %v3557
        %3843 = vmatprep.mubr.f32.mxu0 %v510
        %3844 = vmatmul.mubr.f32.gmra.mrb[0].mxu0 %v509
        %v3845 = vpop.f32.mrb[0].mxu0
        %v3846 = vadd.f32 %v3703, %v3845
        %v3847 = vpop.f32.mrb[0].mxu0
        %v3848 = vadd.f32 %v3705, %v3847
        %3849 = vmatprep.mubr.f32.mxu0 %v516
        %3850 = vmatmul.mubr.f32.gmra.mrb[0].mxu0 %v515
        %v3851 = vpop.f32.mrb[0].mxu0
        %v3852 = vadd.f32 %v3709, %v3851
        %v3853 = vpop.f32.mrb[0].mxu0
        %v3854 = vadd.f32 %v3711, %v3853
        %3855 = vmatprep.mubr.f32.mxu0 %v522
        %3856 = vmatmul.mubr.f32.gmra.mrb[0].mxu0 %v521
        %v3857 = vpop.f32.mrb[0].mxu0
        %v3858 = vadd.f32 %v3715, %v3857
        %v3859 = vpop.f32.mrb[0].mxu0
        %v3860 = vadd.f32 %v3717, %v3859
        %3861 = vmatprep.mubr.f32.mxu0 %v528
        %3862 = vmatmul.mubr.f32.gmra.mrb[0].mxu0 %v527
        %v3863 = vpop.f32.mrb[0].mxu0
        %v3864 = vadd.f32 %v3721, %v3863
        %v3865 = vpop.f32.mrb[0].mxu0
        %v3866 = vadd.f32 %v3723, %v3865
        %3867 = vmatprep.mubr.f32.mxu0 %v534
        %3868 = vmatmul.mubr.f32.gmra.mrb[0].mxu0 %v533
        %v3869 = vpop.f32.mrb[0].mxu0
        %v3870 = vadd.f32 %v3727, %v3869
        %v3871 = vpop.f32.mrb[0].mxu0
        %v3872 = vadd.f32 %v3729, %v3871
        %3873 = vmatprep.mubr.f32.mxu0 %v540
        %3874 = vmatmul.mubr.f32.gmra.mrb[0].mxu0 %v539
        %v3875 = vpop.f32.mrb[0].mxu0
        %v3876 = vadd.f32 %v3733, %v3875
        %v3877 = vpop.f32.mrb[0].mxu0
        %v3878 = vadd.f32 %v3735, %v3877
        %3879 = vmatprep.mubr.f32.mxu0 %v546
        %3880 = vmatmul.mubr.f32.gmra.mrb[0].mxu0 %v545
        %v3881 = vpop.f32.mrb[0].mxu0
        %v3882 = vadd.f32 %v3739, %v3881
        %v3883 = vpop.f32.mrb[0].mxu0
        %v3884 = vadd.f32 %v3741, %v3883
        %3885 = vmatprep.mubr.f32.mxu0 %v552
        %3886 = vmatmul.mubr.f32.gmra.mrb[0].mxu0 %v551
        %v3887 = vpop.f32.mrb[0].mxu0
        %v3888 = vadd.f32 %v3745, %v3887
        %v3889 = vpop.f32.mrb[0].mxu0
        %v3890 = vadd.f32 %v3747, %v3889
        %3891 = vmatprep.mubr.f32.mxu0 %v558
        %3892 = vmatmul.mubr.f32.gmra.mrb[0].mxu0 %v557
        %v3893 = vpop.f32.mrb[0].mxu0
        %v3894 = vadd.f32 %v3751, %v3893
        %v3895 = vpop.f32.mrb[0].mxu0
        %v3896 = vadd.f32 %v3753, %v3895
        %3897 = vmatprep.mubr.f32.mxu0 %v564
        %3898 = vmatmul.mubr.f32.gmra.mrb[0].mxu0 %v563
        %v3899 = vpop.f32.mrb[0].mxu0
        %v3900 = vadd.f32 %v3757, %v3899
        %v3901 = vpop.f32.mrb[0].mxu0
        %v3902 = vadd.f32 %v3759, %v3901
        %3903 = vmatprep.mubr.f32.mxu0 %v570
        %3904 = vmatmul.mubr.f32.gmra.mrb[0].mxu0 %v569
        %v3905 = vpop.f32.mrb[0].mxu0
        %v3906 = vadd.f32 %v3763, %v3905
        %v3907 = vpop.f32.mrb[0].mxu0
        %v3908 = vadd.f32 %v3765, %v3907
        %3909 = vmatprep.mubr.f32.mxu0 %v576
        %3910 = vmatmul.mubr.f32.gmra.mrb[0].mxu0 %v575
        %v3911 = vpop.f32.mrb[0].mxu0
        %v3912 = vadd.f32 %v3769, %v3911
        %v3913 = vpop.f32.mrb[0].mxu0
        %v3914 = vadd.f32 %v3771, %v3913
        %3915 = vmatprep.mubr.f32.mxu0 %v582
        %3916 = vmatmul.mubr.f32.gmra.mrb[0].mxu0 %v581
        %v3917 = vpop.f32.mrb[0].mxu0
        %v3918 = vadd.f32 %v3775, %v3917
        %v3919 = vpop.f32.mrb[0].mxu0
        %v3920 = vadd.f32 %v3777, %v3919
        %3921 = vdwg.mxu0
        %3922 = vmatprep.subr.mxu0 %v3560
        %3923 = vmatpush1.msra.mxu0 %v3559
        %3924 = vmatprep.subr.mxu0 %v3562
        %3925 = vmatpush1.msra.mxu0 %v3561
        %3926 = vmatprep.subr.mxu0 %v3564
        %3927 = vmatpush1.msra.mxu0 %v3563
        %3928 = vmatprep.subr.mxu0 %v3566
        %3929 = vmatpush1.msra.mxu0 %v3565
        %3930 = vmatprep.subr.mxu0 %v3568
        %3931 = vmatpush1.msra.mxu0 %v3567
        %3932 = vmatprep.subr.mxu0 %v3570
        %3933 = vmatpush1.msra.mxu0 %v3569
        %3934 = vmatprep.subr.mxu0 %v3572
        %3935 = vmatpush1.msra.mxu0 %v3571
        %3936 = vmatprep.subr.mxu0 %v3574
        %3937 = vmatpush1.msra.mxu0 %v3573
        %3938 = vmatprep.subr.mxu0 %v3576
        %3939 = vmatpush1.msra.mxu0 %v3575
        %3940 = vmatprep.subr.mxu0 %v3578
        %3941 = vmatpush1.msra.mxu0 %v3577
        %3942 = vmatprep.subr.mxu0 %v3580
        %3943 = vmatpush1.msra.mxu0 %v3579
        %3944 = vmatprep.subr.mxu0 %v3582
        %3945 = vmatpush1.msra.mxu0 %v3581
        %3946 = vmatprep.subr.mxu0 %v3584
        %3947 = vmatpush1.msra.mxu0 %v3583
        %3948 = vmatprep.subr.mxu0 %v3586
        %3949 = vmatpush1.msra.mxu0 %v3585
        %3950 = vmatprep.subr.mxu0 %v3588
        %3951 = vmatpush1.msra.mxu0 %v3587
        %3952 = vmatprep.subr.mxu0 %v3590
        %3953 = vmatpush1.msra.mxu0 %v3589
        %3954 = vmatprep.subr.mxu0 %v3592
        %3955 = vmatpush1.msra.mxu0 %v3591
        %3956 = vmatprep.subr.mxu0 %v3594
        %3957 = vmatpush1.msra.mxu0 %v3593
        %3958 = vmatprep.subr.mxu0 %v3596
        %3959 = vmatpush1.msra.mxu0 %v3595
        %3960 = vmatprep.subr.mxu0 %v3598
        %3961 = vmatpush1.msra.mxu0 %v3597
        %3962 = vmatprep.subr.mxu0 %v3600
        %3963 = vmatpush1.msra.mxu0 %v3599
        %3964 = vmatprep.subr.mxu0 %v3602
        %3965 = vmatpush1.msra.mxu0 %v3601
        %3966 = vmatprep.subr.mxu0 %v3604
        %3967 = vmatpush1.msra.mxu0 %v3603
        %3968 = vmatprep.subr.mxu0 %v3606
        %3969 = vmatpush1.msra.mxu0 %v3605
        %3970 = vmatprep.subr.mxu0 %v3608
        %3971 = vmatpush1.msra.mxu0 %v3607
        %3972 = vmatprep.subr.mxu0 %v3610
        %3973 = vmatpush1.msra.mxu0 %v3609
        %3974 = vmatprep.subr.mxu0 %v3612
        %3975 = vmatpush1.msra.mxu0 %v3611
        %3976 = vmatprep.subr.mxu0 %v3614
        %3977 = vmatpush1.msra.mxu0 %v3613
        %3978 = vmatprep.subr.mxu0 %v3616
        %3979 = vmatpush1.msra.mxu0 %v3615
        %3980 = vmatprep.subr.mxu0 %v3618
        %3981 = vmatpush1.msra.mxu0 %v3617
        %3982 = vmatprep.subr.mxu0 %v3620
        %3983 = vmatpush1.msra.mxu0 %v3619
        %3984 = vmatprep.subr.mxu0 %v3622
        %3985 = vmatpush1.msra.mxu0 %v3621
        %3986 = vmatprep.mubr.f32.mxu0 %v512
        %3987 = vmatmul.mubr.f32.gmra.mrb[0].mxu0 %v511
        %v3988 = vpop.f32.mrb[0].mxu0
        %v3989 = vadd.f32 %v3846, %v3988
        %v3990 = vpop.f32.mrb[0].mxu0
        %v3991 = vadd.f32 %v3848, %v3990
        %3992 = vmatprep.mubr.f32.mxu0 %v518
        %3993 = vmatmul.mubr.f32.gmra.mrb[0].mxu0 %v517
        %v3994 = vpop.f32.mrb[0].mxu0
        %v3995 = vadd.f32 %v3852, %v3994
        %v3996 = vpop.f32.mrb[0].mxu0
        %v3997 = vadd.f32 %v3854, %v3996
        %3998 = vmatprep.mubr.f32.mxu0 %v524
        %3999 = vmatmul.mubr.f32.gmra.mrb[0].mxu0 %v523
        %v4000 = vpop.f32.mrb[0].mxu0
        %v4001 = vadd.f32 %v3858, %v4000
        %v4002 = vpop.f32.mrb[0].mxu0
        %v4003 = vadd.f32 %v3860, %v4002
        %4004 = vmatprep.mubr.f32.mxu0 %v530
        %4005 = vmatmul.mubr.f32.gmra.mrb[0].mxu0 %v529
        %v4006 = vpop.f32.mrb[0].mxu0
        %v4007 = vadd.f32 %v3864, %v4006
        %v4008 = vpop.f32.mrb[0].mxu0
        %v4009 = vadd.f32 %v3866, %v4008
        %4010 = vmatprep.mubr.f32.mxu0 %v536
        %4011 = vmatmul.mubr.f32.gmra.mrb[0].mxu0 %v535
        %v4012 = vpop.f32.mrb[0].mxu0
        %v4013 = vadd.f32 %v3870, %v4012
        %v4014 = vpop.f32.mrb[0].mxu0
        %v4015 = vadd.f32 %v3872, %v4014
        %4016 = vmatprep.mubr.f32.mxu0 %v542
        %4017 = vmatmul.mubr.f32.gmra.mrb[0].mxu0 %v541
        %v4018 = vpop.f32.mrb[0].mxu0
        %v4019 = vadd.f32 %v3876, %v4018
        %v4020 = vpop.f32.mrb[0].mxu0
        %v4021 = vadd.f32 %v3878, %v4020
        %4022 = vmatprep.mubr.f32.mxu0 %v548
        %4023 = vmatmul.mubr.f32.gmra.mrb[0].mxu0 %v547
        %v4024 = vpop.f32.mrb[0].mxu0
        %v4025 = vadd.f32 %v3882, %v4024
        %v4026 = vpop.f32.mrb[0].mxu0
        %v4027 = vadd.f32 %v3884, %v4026
        %4028 = vmatprep.mubr.f32.mxu0 %v554
        %4029 = vmatmul.mubr.f32.gmra.mrb[0].mxu0 %v553
        %v4030 = vpop.f32.mrb[0].mxu0
        %v4031 = vadd.f32 %v3888, %v4030
        %v4032 = vpop.f32.mrb[0].mxu0
        %v4033 = vadd.f32 %v3890, %v4032
        %4034 = vmatprep.mubr.f32.mxu0 %v560
        %4035 = vmatmul.mubr.f32.gmra.mrb[0].mxu0 %v559
        %v4036 = vpop.f32.mrb[0].mxu0
        %v4037 = vadd.f32 %v3894, %v4036
        %v4038 = vpop.f32.mrb[0].mxu0
        %v4039 = vadd.f32 %v3896, %v4038
        %4040 = vmatprep.mubr.f32.mxu0 %v566
        %4041 = vmatmul.mubr.f32.gmra.mrb[0].mxu0 %v565
        %v4042 = vpop.f32.mrb[0].mxu0
        %v4043 = vadd.f32 %v3900, %v4042
        %v4044 = vpop.f32.mrb[0].mxu0
        %v4045 = vadd.f32 %v3902, %v4044
        %4046 = vmatprep.mubr.f32.mxu0 %v572
        %4047 = vmatmul.mubr.f32.gmra.mrb[0].mxu0 %v571
        %v4048 = vpop.f32.mrb[0].mxu0
        %v4049 = vadd.f32 %v3906, %v4048
        %v4050 = vpop.f32.mrb[0].mxu0
        %v4051 = vadd.f32 %v3908, %v4050
        %4052 = vmatprep.mubr.f32.mxu0 %v578
        %4053 = vmatmul.mubr.f32.gmra.mrb[0].mxu0 %v577
        %v4054 = vpop.f32.mrb[0].mxu0
        %v4055 = vadd.f32 %v3912, %v4054
        %v4056 = vpop.f32.mrb[0].mxu0
        %v4057 = vadd.f32 %v3914, %v4056
        %4058 = vmatprep.mubr.f32.mxu0 %v584
        %4059 = vmatmul.mubr.f32.gmra.mrb[0].mxu0 %v583
        %v4060 = vpop.f32.mrb[0].mxu0
        %v4061 = vadd.f32 %v3918, %v4060
        %v4062 = vpop.f32.mrb[0].mxu0
        %v4063 = vadd.f32 %v3920, %v4062
        %4064 = vdwg.mxu0
        %v4065 = vadd.f32 %v3989, %v3991
        %4066 = vadd.xlane.f32.xlu0 %v4065
        %v4067 = vpop.xlane.xlu0 %4066
        %v4068 = vadd.f32 %v3995, %v3997
        %4069 = vadd.xlane.f32.xlu0 %v4068
        %v4070 = vpop.xlane.xlu0 %4069
        %v4071 = vadd.f32 %v4001, %v4003
        %4072 = vadd.xlane.f32.xlu0 %v4071
        %v4073 = vpop.xlane.xlu0 %4072
        %v4074 = vadd.f32 %v4007, %v4009
        %4075 = vadd.xlane.f32.xlu0 %v4074
        %v4076 = vpop.xlane.xlu0 %4075
        %v4077 = vadd.f32 %v4013, %v4015
        %4078 = vadd.xlane.f32.xlu0 %v4077
        %v4079 = vpop.xlane.xlu0 %4078
        %v4080 = vadd.f32 %v4019, %v4021
        %4081 = vadd.xlane.f32.xlu0 %v4080
        %v4082 = vpop.xlane.xlu0 %4081
        %v4083 = vadd.f32 %v4025, %v4027
        %4084 = vadd.xlane.f32.xlu0 %v4083
        %v4085 = vpop.xlane.xlu0 %4084
        %v4086 = vadd.f32 %v4031, %v4033
        %4087 = vadd.xlane.f32.xlu0 %v4086
        %v4088 = vpop.xlane.xlu0 %4087
        %v4089 = vadd.f32 %v4037, %v4039
        %4090 = vadd.xlane.f32.xlu0 %v4089
        %v4091 = vpop.xlane.xlu0 %4090
        %v4092 = vadd.f32 %v4043, %v4045
        %4093 = vadd.xlane.f32.xlu0 %v4092
        %v4094 = vpop.xlane.xlu0 %4093
        %v4095 = vadd.f32 %v4049, %v4051
        %4096 = vadd.xlane.f32.xlu0 %v4095
        %v4097 = vpop.xlane.xlu0 %4096
        %v4098 = vadd.f32 %v4055, %v4057
        %4099 = vadd.xlane.f32.xlu0 %v4098
        %v4100 = vpop.xlane.xlu0 %4099
        %v4101 = vadd.f32 %v4061, %v4063
        %4102 = vadd.xlane.f32.xlu0 %v4101
        %v4103 = vpop.xlane.xlu0 %4102
        %v4104 = vmul.f32 %v4067, %v1444
        %v4105 = vmul.f32 %v4070, %v1444
        %v4106 = vmul.f32 %v4073, %v1444
        %v4107 = vmul.f32 %v4076, %v1444
        %v4108 = vmul.f32 %v4079, %v1444
        %v4109 = vmul.f32 %v4082, %v1444
        %v4110 = vmul.f32 %v4085, %v1444
        %v4111 = vmul.f32 %v4088, %v1444
        %v4112 = vmul.f32 %v4091, %v1444
        %v4113 = vmul.f32 %v4094, %v1444
        %v4114 = vmul.f32 %v4097, %v1444
        %v4115 = vmul.f32 %v4100, %v1444
        %v4116 = vmul.f32 %v4103, %v1444
        %v4117 = vsub.f32 %v3989, %v4104
        %v4118 = vsub.f32 %v3991, %v4104
        %v4119 = vsub.f32 %v3995, %v4105
        %v4120 = vsub.f32 %v3997, %v4105
        %v4121 = vsub.f32 %v4001, %v4106
        %v4122 = vsub.f32 %v4003, %v4106
        %v4123 = vsub.f32 %v4007, %v4107
        %v4124 = vsub.f32 %v4009, %v4107
        %v4125 = vsub.f32 %v4013, %v4108
        %v4126 = vsub.f32 %v4015, %v4108
        %v4127 = vsub.f32 %v4019, %v4109
        %v4128 = vsub.f32 %v4021, %v4109
        %v4129 = vsub.f32 %v4025, %v4110
        %v4130 = vsub.f32 %v4027, %v4110
        %v4131 = vsub.f32 %v4031, %v4111
        %v4132 = vsub.f32 %v4033, %v4111
        %v4133 = vsub.f32 %v4037, %v4112
        %v4134 = vsub.f32 %v4039, %v4112
        %v4135 = vsub.f32 %v4043, %v4113
        %v4136 = vsub.f32 %v4045, %v4113
        %v4137 = vsub.f32 %v4049, %v4114
        %v4138 = vsub.f32 %v4051, %v4114
        %v4139 = vsub.f32 %v4055, %v4115
        %v4140 = vsub.f32 %v4057, %v4115
        %v4141 = vsub.f32 %v4061, %v4116
        %v4142 = vsub.f32 %v4063, %v4116
        %v4143 = vmul.f32 %v4117, %v4117
        %v4144 = vmul.f32 %v4118, %v4118
        %v4145 = vmul.f32 %v4119, %v4119
        %v4146 = vmul.f32 %v4120, %v4120
        %v4147 = vmul.f32 %v4121, %v4121
        %v4148 = vmul.f32 %v4122, %v4122
        %v4149 = vmul.f32 %v4123, %v4123
        %v4150 = vmul.f32 %v4124, %v4124
        %v4151 = vmul.f32 %v4125, %v4125
        %v4152 = vmul.f32 %v4126, %v4126
        %v4153 = vmul.f32 %v4127, %v4127
        %v4154 = vmul.f32 %v4128, %v4128
        %v4155 = vmul.f32 %v4129, %v4129
        %v4156 = vmul.f32 %v4130, %v4130
        %v4157 = vmul.f32 %v4131, %v4131
        %v4158 = vmul.f32 %v4132, %v4132
        %v4159 = vmul.f32 %v4133, %v4133
        %v4160 = vmul.f32 %v4134, %v4134
        %v4161 = vmul.f32 %v4135, %v4135
        %v4162 = vmul.f32 %v4136, %v4136
        %v4163 = vmul.f32 %v4137, %v4137
        %v4164 = vmul.f32 %v4138, %v4138
        %v4165 = vmul.f32 %v4139, %v4139
        %v4166 = vmul.f32 %v4140, %v4140
        %v4167 = vmul.f32 %v4141, %v4141
        %v4168 = vmul.f32 %v4142, %v4142
        %v4169 = vadd.f32 %v4143, %v4144
        %4170 = vadd.xlane.f32.xlu0 %v4169
        %v4171 = vpop.xlane.xlu0 %4170
        %v4172 = vadd.f32 %v4145, %v4146
        %4173 = vadd.xlane.f32.xlu0 %v4172
        %v4174 = vpop.xlane.xlu0 %4173
        %v4175 = vadd.f32 %v4147, %v4148
        %4176 = vadd.xlane.f32.xlu0 %v4175
        %v4177 = vpop.xlane.xlu0 %4176
        %v4178 = vadd.f32 %v4149, %v4150
        %4179 = vadd.xlane.f32.xlu0 %v4178
        %v4180 = vpop.xlane.xlu0 %4179
        %v4181 = vadd.f32 %v4151, %v4152
        %4182 = vadd.xlane.f32.xlu0 %v4181
        %v4183 = vpop.xlane.xlu0 %4182
        %v4184 = vadd.f32 %v4153, %v4154
        %4185 = vadd.xlane.f32.xlu0 %v4184
        %v4186 = vpop.xlane.xlu0 %4185
        %v4187 = vadd.f32 %v4155, %v4156
        %4188 = vadd.xlane.f32.xlu0 %v4187
        %v4189 = vpop.xlane.xlu0 %4188
        %v4190 = vadd.f32 %v4157, %v4158
        %4191 = vadd.xlane.f32.xlu0 %v4190
        %v4192 = vpop.xlane.xlu0 %4191
        %v4193 = vadd.f32 %v4159, %v4160
        %4194 = vadd.xlane.f32.xlu0 %v4193
        %v4195 = vpop.xlane.xlu0 %4194
        %v4196 = vadd.f32 %v4161, %v4162
        %4197 = vadd.xlane.f32.xlu0 %v4196
        %v4198 = vpop.xlane.xlu0 %4197
        %v4199 = vadd.f32 %v4163, %v4164
        %4200 = vadd.xlane.f32.xlu0 %v4199
        %v4201 = vpop.xlane.xlu0 %4200
        %v4202 = vadd.f32 %v4165, %v4166
        %4203 = vadd.xlane.f32.xlu0 %v4202
        %v4204 = vpop.xlane.xlu0 %4203
        %v4205 = vadd.f32 %v4167, %v4168
        %4206 = vadd.xlane.f32.xlu0 %v4205
        %v4207 = vpop.xlane.xlu0 %4206
        %v4208 = vmul.f32 %v4171, %v1444
        %v4209 = vmul.f32 %v4174, %v1444
        %v4210 = vmul.f32 %v4177, %v1444
        %v4211 = vmul.f32 %v4180, %v1444
        %v4212 = vmul.f32 %v4183, %v1444
        %v4213 = vmul.f32 %v4186, %v1444
        %v4214 = vmul.f32 %v4189, %v1444
        %v4215 = vmul.f32 %v4192, %v1444
        %v4216 = vmul.f32 %v4195, %v1444
        %v4217 = vmul.f32 %v4198, %v1444
        %v4218 = vmul.f32 %v4201, %v1444
        %v4219 = vmul.f32 %v4204, %v1444
        %v4220 = vmul.f32 %v4207, %v1444
        %v4221 = vadd.f32 %v4208, 1e-05
        %v4222 = vadd.f32 %v4209, 1e-05
        %v4223 = vadd.f32 %v4210, 1e-05
        %v4224 = vadd.f32 %v4211, 1e-05
        %v4225 = vadd.f32 %v4212, 1e-05
        %v4226 = vadd.f32 %v4213, 1e-05
        %v4227 = vadd.f32 %v4214, 1e-05
        %v4228 = vadd.f32 %v4215, 1e-05
        %v4229 = vadd.f32 %v4216, 1e-05
        %v4230 = vadd.f32 %v4217, 1e-05
        %v4231 = vadd.f32 %v4218, 1e-05
        %v4232 = vadd.f32 %v4219, 1e-05
        %v4233 = vadd.f32 %v4220, 1e-05
        %v4234 = vrsqrt.pop %v4221
        %v4235 = vrsqrt.pop %v4222
        %v4236 = vrsqrt.pop %v4223
        %v4237 = vrsqrt.pop %v4224
        %v4238 = vrsqrt.pop %v4225
        %v4239 = vrsqrt.pop %v4226
        %v4240 = vrsqrt.pop %v4227
        %v4241 = vrsqrt.pop %v4228
        %v4242 = vrsqrt.pop %v4229
        %v4243 = vrsqrt.pop %v4230
        %v4244 = vrsqrt.pop %v4231
        %v4245 = vrsqrt.pop %v4232
        %v4246 = vrsqrt.pop %v4233
        %v4247 = vmul.f32 %v4117, %v4234
        %v4248 = vmul.f32 %v4118, %v4234
        %v4249 = vmul.f32 %v4119, %v4235
        %v4250 = vmul.f32 %v4120, %v4235
        %v4251 = vmul.f32 %v4121, %v4236
        %v4252 = vmul.f32 %v4122, %v4236
        %v4253 = vmul.f32 %v4123, %v4237
        %v4254 = vmul.f32 %v4124, %v4237
        %v4255 = vmul.f32 %v4125, %v4238
        %v4256 = vmul.f32 %v4126, %v4238
        %v4257 = vmul.f32 %v4127, %v4239
        %v4258 = vmul.f32 %v4128, %v4239
        %v4259 = vmul.f32 %v4129, %v4240
        %v4260 = vmul.f32 %v4130, %v4240
        %v4261 = vmul.f32 %v4131, %v4241
        %v4262 = vmul.f32 %v4132, %v4241
        %v4263 = vmul.f32 %v4133, %v4242
        %v4264 = vmul.f32 %v4134, %v4242
        %v4265 = vmul.f32 %v4135, %v4243
        %v4266 = vmul.f32 %v4136, %v4243
        %v4267 = vmul.f32 %v4137, %v4244
        %v4268 = vmul.f32 %v4138, %v4244
        %v4269 = vmul.f32 %v4139, %v4245
        %v4270 = vmul.f32 %v4140, %v4245
        %v4271 = vmul.f32 %v4141, %v4246
        %v4272 = vmul.f32 %v4142, %v4246
        %s4273 = scalar_lea.vmem [#allocation14], 4
        %v4274 = vld [vmem:[%s4273] sm:$0x3]
        %v4276 = vlaneseq
        %v4277 = vshrl.u32 %v4276, 7
        %v4278 = vsub.s32 0, %v4277
        %v4279 = vrot.slane %v4274, %v4278
        %v4280 = vlaneseq
        %v4281 = vshrl.u32 %v4280, 7
        %v4282 = vsub.s32 1, %v4281
        %v4283 = vrot.slane %v4274, %v4282
        %v4286 = vmul.f32 %v4247, %v4279
        %v4287 = vmul.f32 %v4248, %v4283
        %v4288 = vmul.f32 %v4249, %v4279
        %v4289 = vmul.f32 %v4250, %v4283
        %v4290 = vmul.f32 %v4251, %v4279
        %v4291 = vmul.f32 %v4252, %v4283
        %v4292 = vmul.f32 %v4253, %v4279
        %v4293 = vmul.f32 %v4254, %v4283
        %v4294 = vmul.f32 %v4255, %v4279
        %v4295 = vmul.f32 %v4256, %v4283
        %v4296 = vmul.f32 %v4257, %v4279
        %v4297 = vmul.f32 %v4258, %v4283
        %v4298 = vmul.f32 %v4259, %v4279
        %v4299 = vmul.f32 %v4260, %v4283
        %v4300 = vmul.f32 %v4261, %v4279
        %v4301 = vmul.f32 %v4262, %v4283
        %v4302 = vmul.f32 %v4263, %v4279
        %v4303 = vmul.f32 %v4264, %v4283
        %v4304 = vmul.f32 %v4265, %v4279
        %v4305 = vmul.f32 %v4266, %v4283
        %v4306 = vmul.f32 %v4267, %v4279
        %v4307 = vmul.f32 %v4268, %v4283
        %v4308 = vmul.f32 %v4269, %v4279
        %v4309 = vmul.f32 %v4270, %v4283
        %v4310 = vmul.f32 %v4271, %v4279
        %v4311 = vmul.f32 %v4272, %v4283
        %s4312 = scalar_lea.vmem [#allocation16], 4
        %v4313 = vld [vmem:[%s4312] sm:$0x3]
        %v4315 = vlaneseq
        %v4316 = vshrl.u32 %v4315, 7
        %v4317 = vsub.s32 0, %v4316
        %v4318 = vrot.slane %v4313, %v4317
        %v4319 = vlaneseq
        %v4320 = vshrl.u32 %v4319, 7
        %v4321 = vsub.s32 1, %v4320
        %v4322 = vrot.slane %v4313, %v4321
        %v4325 = vadd.f32 %v4286, %v4318
        %v4326 = vadd.f32 %v4287, %v4322
        %v4327 = vadd.f32 %v4288, %v4318
        %v4328 = vadd.f32 %v4289, %v4322
        %v4329 = vadd.f32 %v4290, %v4318
        %v4330 = vadd.f32 %v4291, %v4322
        %v4331 = vadd.f32 %v4292, %v4318
        %v4332 = vadd.f32 %v4293, %v4322
        %v4333 = vadd.f32 %v4294, %v4318
        %v4334 = vadd.f32 %v4295, %v4322
        %v4335 = vadd.f32 %v4296, %v4318
        %v4336 = vadd.f32 %v4297, %v4322
        %v4337 = vadd.f32 %v4298, %v4318
        %v4338 = vadd.f32 %v4299, %v4322
        %v4339 = vadd.f32 %v4300, %v4318
        %v4340 = vadd.f32 %v4301, %v4322
        %v4341 = vadd.f32 %v4302, %v4318
        %v4342 = vadd.f32 %v4303, %v4322
        %v4343 = vadd.f32 %v4304, %v4318
        %v4344 = vadd.f32 %v4305, %v4322
        %v4345 = vadd.f32 %v4306, %v4318
        %v4346 = vadd.f32 %v4307, %v4322
        %v4347 = vadd.f32 %v4308, %v4318
        %v4348 = vadd.f32 %v4309, %v4322
        %v4349 = vadd.f32 %v4310, %v4318
        %v4350 = vadd.f32 %v4311, %v4322
        %v4351 = vxor.u32 %v4325, 2147483648
        %v4352 = vxor.u32 %v4326, 2147483648
        %v4353 = vxor.u32 %v4327, 2147483648
        %v4354 = vxor.u32 %v4328, 2147483648
        %v4355 = vxor.u32 %v4329, 2147483648
        %v4356 = vxor.u32 %v4330, 2147483648
        %v4357 = vxor.u32 %v4331, 2147483648
        %v4358 = vxor.u32 %v4332, 2147483648
        %v4359 = vxor.u32 %v4333, 2147483648
        %v4360 = vxor.u32 %v4334, 2147483648
        %v4361 = vxor.u32 %v4335, 2147483648
        %v4362 = vxor.u32 %v4336, 2147483648
        %v4363 = vxor.u32 %v4337, 2147483648
        %v4364 = vxor.u32 %v4338, 2147483648
        %v4365 = vxor.u32 %v4339, 2147483648
        %v4366 = vxor.u32 %v4340, 2147483648
        %v4367 = vxor.u32 %v4341, 2147483648
        %v4368 = vxor.u32 %v4342, 2147483648
        %v4369 = vxor.u32 %v4343, 2147483648
        %v4370 = vxor.u32 %v4344, 2147483648
        %v4371 = vxor.u32 %v4345, 2147483648
        %v4372 = vxor.u32 %v4346, 2147483648
        %v4373 = vxor.u32 %v4347, 2147483648
        %v4374 = vxor.u32 %v4348, 2147483648
        %v4375 = vxor.u32 %v4349, 2147483648
        %v4376 = vxor.u32 %v4350, 2147483648
        %v4377 = vmul.f32 %v4351, 1.442695
        %v4378 = vpow.pop %v4377
        %v4379 = vmul.f32 %v4352, 1.442695
        %v4380 = vpow.pop %v4379
        %v4381 = vmul.f32 %v4353, 1.442695
        %v4382 = vpow.pop %v4381
        %v4383 = vmul.f32 %v4354, 1.442695
        %v4384 = vpow.pop %v4383
        %v4385 = vmul.f32 %v4355, 1.442695
        %v4386 = vpow.pop %v4385
        %v4387 = vmul.f32 %v4356, 1.442695
        %v4388 = vpow.pop %v4387
        %v4389 = vmul.f32 %v4357, 1.442695
        %v4390 = vpow.pop %v4389
        %v4391 = vmul.f32 %v4358, 1.442695
        %v4392 = vpow.pop %v4391
        %v4393 = vmul.f32 %v4359, 1.442695
        %v4394 = vpow.pop %v4393
        %v4395 = vmul.f32 %v4360, 1.442695
        %v4396 = vpow.pop %v4395
        %v4397 = vmul.f32 %v4361, 1.442695
        %v4398 = vpow.pop %v4397
        %v4399 = vmul.f32 %v4362, 1.442695
        %v4400 = vpow.pop %v4399
        %v4401 = vmul.f32 %v4363, 1.442695
        %v4402 = vpow.pop %v4401
        %v4403 = vmul.f32 %v4364, 1.442695
        %v4404 = vpow.pop %v4403
        %v4405 = vmul.f32 %v4365, 1.442695
        %v4406 = vpow.pop %v4405
        %v4407 = vmul.f32 %v4366, 1.442695
        %v4408 = vpow.pop %v4407
        %v4409 = vmul.f32 %v4367, 1.442695
        %v4410 = vpow.pop %v4409
        %v4411 = vmul.f32 %v4368, 1.442695
        %v4412 = vpow.pop %v4411
        %v4413 = vmul.f32 %v4369, 1.442695
        %v4414 = vpow.pop %v4413
        %v4415 = vmul.f32 %v4370, 1.442695
        %v4416 = vpow.pop %v4415
        %v4417 = vmul.f32 %v4371, 1.442695
        %v4418 = vpow.pop %v4417
        %v4419 = vmul.f32 %v4372, 1.442695
        %v4420 = vpow.pop %v4419
        %v4421 = vmul.f32 %v4373, 1.442695
        %v4422 = vpow.pop %v4421
        %v4423 = vmul.f32 %v4374, 1.442695
        %v4424 = vpow.pop %v4423
        %v4425 = vmul.f32 %v4375, 1.442695
        %v4426 = vpow.pop %v4425
        %v4427 = vmul.f32 %v4376, 1.442695
        %v4428 = vpow.pop %v4427
        %v4429 = vadd.f32 %v4378, 1.0
        %v4430 = vadd.f32 %v4380, 1.0
        %v4431 = vadd.f32 %v4382, 1.0
        %v4432 = vadd.f32 %v4384, 1.0
        %v4433 = vadd.f32 %v4386, 1.0
        %v4434 = vadd.f32 %v4388, 1.0
        %v4435 = vadd.f32 %v4390, 1.0
        %v4436 = vadd.f32 %v4392, 1.0
        %v4437 = vadd.f32 %v4394, 1.0
        %v4438 = vadd.f32 %v4396, 1.0
        %v4439 = vadd.f32 %v4398, 1.0
        %v4440 = vadd.f32 %v4400, 1.0
        %v4441 = vadd.f32 %v4402, 1.0
        %v4442 = vadd.f32 %v4404, 1.0
        %v4443 = vadd.f32 %v4406, 1.0
        %v4444 = vadd.f32 %v4408, 1.0
        %v4445 = vadd.f32 %v4410, 1.0
        %v4446 = vadd.f32 %v4412, 1.0
        %v4447 = vadd.f32 %v4414, 1.0
        %v4448 = vadd.f32 %v4416, 1.0
        %v4449 = vadd.f32 %v4418, 1.0
        %v4450 = vadd.f32 %v4420, 1.0
        %v4451 = vadd.f32 %v4422, 1.0
        %v4452 = vadd.f32 %v4424, 1.0
        %v4453 = vadd.f32 %v4426, 1.0
        %v4454 = vadd.f32 %v4428, 1.0
        %v4455 = vrcp.pop %v4429
        %v4456 = vmul.f32 1.0, %v4455
        %v4457 = vrcp.pop %v4430
        %v4458 = vmul.f32 1.0, %v4457
        %v4459 = vrcp.pop %v4431
        %v4460 = vmul.f32 1.0, %v4459
        %v4461 = vrcp.pop %v4432
        %v4462 = vmul.f32 1.0, %v4461
        %v4463 = vrcp.pop %v4433
        %v4464 = vmul.f32 1.0, %v4463
        %v4465 = vrcp.pop %v4434
        %v4466 = vmul.f32 1.0, %v4465
        %v4467 = vrcp.pop %v4435
        %v4468 = vmul.f32 1.0, %v4467
        %v4469 = vrcp.pop %v4436
        %v4470 = vmul.f32 1.0, %v4469
        %v4471 = vrcp.pop %v4437
        %v4472 = vmul.f32 1.0, %v4471
        %v4473 = vrcp.pop %v4438
        %v4474 = vmul.f32 1.0, %v4473
        %v4475 = vrcp.pop %v4439
        %v4476 = vmul.f32 1.0, %v4475
        %v4477 = vrcp.pop %v4440
        %v4478 = vmul.f32 1.0, %v4477
        %v4479 = vrcp.pop %v4441
        %v4480 = vmul.f32 1.0, %v4479
        %v4481 = vrcp.pop %v4442
        %v4482 = vmul.f32 1.0, %v4481
        %v4483 = vrcp.pop %v4443
        %v4484 = vmul.f32 1.0, %v4483
        %v4485 = vrcp.pop %v4444
        %v4486 = vmul.f32 1.0, %v4485
        %v4487 = vrcp.pop %v4445
        %v4488 = vmul.f32 1.0, %v4487
        %v4489 = vrcp.pop %v4446
        %v4490 = vmul.f32 1.0, %v4489
        %v4491 = vrcp.pop %v4447
        %v4492 = vmul.f32 1.0, %v4491
        %v4493 = vrcp.pop %v4448
        %v4494 = vmul.f32 1.0, %v4493
        %v4495 = vrcp.pop %v4449
        %v4496 = vmul.f32 1.0, %v4495
        %v4497 = vrcp.pop %v4450
        %v4498 = vmul.f32 1.0, %v4497
        %v4499 = vrcp.pop %v4451
        %v4500 = vmul.f32 1.0, %v4499
        %v4501 = vrcp.pop %v4452
        %v4502 = vmul.f32 1.0, %v4501
        %v4503 = vrcp.pop %v4453
        %v4504 = vmul.f32 1.0, %v4503
        %v4505 = vrcp.pop %v4454
        %v4506 = vmul.f32 1.0, %v4505
        %v4507 = vmul.f32 %v4456, 2.0
        %v4508 = vmul.f32 %v4458, 2.0
        %v4509 = vmul.f32 %v4460, 2.0
        %v4510 = vmul.f32 %v4462, 2.0
        %v4511 = vmul.f32 %v4464, 2.0
        %v4512 = vmul.f32 %v4466, 2.0
        %v4513 = vmul.f32 %v4468, 2.0
        %v4514 = vmul.f32 %v4470, 2.0
        %v4515 = vmul.f32 %v4472, 2.0
        %v4516 = vmul.f32 %v4474, 2.0
        %v4517 = vmul.f32 %v4476, 2.0
        %v4518 = vmul.f32 %v4478, 2.0
        %v4519 = vmul.f32 %v4480, 2.0
        %v4520 = vmul.f32 %v4482, 2.0
        %v4521 = vmul.f32 %v4484, 2.0
        %v4522 = vmul.f32 %v4486, 2.0
        %v4523 = vmul.f32 %v4488, 2.0
        %v4524 = vmul.f32 %v4490, 2.0
        %v4525 = vmul.f32 %v4492, 2.0
        %v4526 = vmul.f32 %v4494, 2.0
        %v4527 = vmul.f32 %v4496, 2.0
        %v4528 = vmul.f32 %v4498, 2.0
        %v4529 = vmul.f32 %v4500, 2.0
        %v4530 = vmul.f32 %v4502, 2.0
        %v4531 = vmul.f32 %v4504, 2.0
        %v4532 = vmul.f32 %v4506, 2.0
        %s4533 = scalar_lea.vmem [#allocation10], 512
        %v4534 = vld [vmem:[%s4533] sm:$0xff]
        %v4535 = vld [vmem:[%s4533 + $0x8] sm:$0xff]
        %v4536 = vld [vmem:[%s4533 + $0x10] sm:$0xff]
        %v4537 = vld [vmem:[%s4533 + $0x18] sm:$0xff]
        %v4538 = vld [vmem:[%s4533 + $0x20] sm:$0xff]
        %v4539 = vld [vmem:[%s4533 + $0x28] sm:$0xff]
        %v4540 = vld [vmem:[%s4533 + $0x30] sm:$0xff]
        %v4541 = vld [vmem:[%s4533 + $0x38] sm:$0xff]
        %v4542 = vld [vmem:[%s4533 + $0x40] sm:$0xff]
        %v4543 = vld [vmem:[%s4533 + $0x48] sm:$0xff]
        %v4544 = vld [vmem:[%s4533 + $0x50] sm:$0xff]
        %v4545 = vld [vmem:[%s4533 + $0x58] sm:$0xff]
        %v4546 = vld [vmem:[%s4533 + $0x60] sm:$0xff]
        %v4547 = vld [vmem:[%s4533 + $0x68] sm:$0xff]
        %v4548 = vld [vmem:[%s4533 + $0x70] sm:$0xff]
        %v4549 = vld [vmem:[%s4533 + $0x78] sm:$0xff]
        %v4550 = vld [vmem:[%s4533 + $0x80] sm:$0xff]
        %v4551 = vld [vmem:[%s4533 + $0x88] sm:$0xff]
        %v4552 = vld [vmem:[%s4533 + $0x90] sm:$0xff]
        %v4553 = vld [vmem:[%s4533 + $0x98] sm:$0xff]
        %v4554 = vld [vmem:[%s4533 + $0xa0] sm:$0xff]
        %v4555 = vld [vmem:[%s4533 + $0xa8] sm:$0xff]
        %v4556 = vld [vmem:[%s4533 + $0xb0] sm:$0xff]
        %v4557 = vld [vmem:[%s4533 + $0xb8] sm:$0xff]
        %v4558 = vld [vmem:[%s4533 + $0xc0] sm:$0xff]
        %v4559 = vld [vmem:[%s4533 + $0xc8] sm:$0xff]
        %v4560 = vld [vmem:[%s4533 + $0xd0] sm:$0xff]
        %v4561 = vld [vmem:[%s4533 + $0xd8] sm:$0xff]
        %v4562 = vld [vmem:[%s4533 + $0xe0] sm:$0xff]
        %v4563 = vld [vmem:[%s4533 + $0xe8] sm:$0xff]
        %v4564 = vld [vmem:[%s4533 + $0xf0] sm:$0xff]
        %v4565 = vld [vmem:[%s4533 + $0xf8] sm:$0xff]
        %4566 = vmatprep.subr.mxu0 %v4535
        %4567 = vmatpush1.msra.mxu0 %v4534
        %4568 = vmatprep.subr.mxu0 %v4537
        %4569 = vmatpush1.msra.mxu0 %v4536
        %4570 = vmatprep.subr.mxu0 %v4539
        %4571 = vmatpush1.msra.mxu0 %v4538
        %4572 = vmatprep.subr.mxu0 %v4541
        %4573 = vmatpush1.msra.mxu0 %v4540
        %4574 = vmatprep.subr.mxu0 %v4543
        %4575 = vmatpush1.msra.mxu0 %v4542
        %4576 = vmatprep.subr.mxu0 %v4545
        %4577 = vmatpush1.msra.mxu0 %v4544
        %4578 = vmatprep.subr.mxu0 %v4547
        %4579 = vmatpush1.msra.mxu0 %v4546
        %4580 = vmatprep.subr.mxu0 %v4549
        %4581 = vmatpush1.msra.mxu0 %v4548
        %4582 = vmatprep.subr.mxu0 %v4551
        %4583 = vmatpush1.msra.mxu0 %v4550
        %4584 = vmatprep.subr.mxu0 %v4553
        %4585 = vmatpush1.msra.mxu0 %v4552
        %4586 = vmatprep.subr.mxu0 %v4555
        %4587 = vmatpush1.msra.mxu0 %v4554
        %4588 = vmatprep.subr.mxu0 %v4557
        %4589 = vmatpush1.msra.mxu0 %v4556
        %4590 = vmatprep.subr.mxu0 %v4559
        %4591 = vmatpush1.msra.mxu0 %v4558
        %4592 = vmatprep.subr.mxu0 %v4561
        %4593 = vmatpush1.msra.mxu0 %v4560
        %4594 = vmatprep.subr.mxu0 %v4563
        %4595 = vmatpush1.msra.mxu0 %v4562
        %4596 = vmatprep.subr.mxu0 %v4565
        %4597 = vmatpush1.msra.mxu0 %v4564
        %4598 = vmatprep.subr.mxu0 0.0
        %4599 = vmatpush1.msra.mxu0 0.0
        %4600 = vmatprep.subr.mxu0 0.0
        %4601 = vmatpush1.msra.mxu0 0.0
        %4602 = vmatprep.subr.mxu0 0.0
        %4603 = vmatpush1.msra.mxu0 0.0
        %4604 = vmatprep.subr.mxu0 0.0
        %4605 = vmatpush1.msra.mxu0 0.0
        %4606 = vmatprep.subr.mxu0 0.0
        %4607 = vmatpush1.msra.mxu0 0.0
        %4608 = vmatprep.subr.mxu0 0.0
        %4609 = vmatpush1.msra.mxu0 0.0
        %4610 = vmatprep.subr.mxu0 0.0
        %4611 = vmatpush1.msra.mxu0 0.0
        %4612 = vmatprep.subr.mxu0 0.0
        %4613 = vmatpush1.msra.mxu0 0.0
        %4614 = vmatprep.subr.mxu0 0.0
        %4615 = vmatpush1.msra.mxu0 0.0
        %4616 = vmatprep.subr.mxu0 0.0
        %4617 = vmatpush1.msra.mxu0 0.0
        %4618 = vmatprep.subr.mxu0 0.0
        %4619 = vmatpush1.msra.mxu0 0.0
        %4620 = vmatprep.subr.mxu0 0.0
        %4621 = vmatpush1.msra.mxu0 0.0
        %4622 = vmatprep.subr.mxu0 0.0
        %4623 = vmatpush1.msra.mxu0 0.0
        %4624 = vmatprep.subr.mxu0 0.0
        %4625 = vmatpush1.msra.mxu0 0.0
        %4626 = vmatprep.subr.mxu0 0.0
        %4627 = vmatpush1.msra.mxu0 0.0
        %4628 = vmatprep.subr.mxu0 0.0
        %4629 = vmatpush1.msra.mxu0 0.0
        %4630 = vmatprep.mubr.f32.mxu0 0.0
        %4631 = vmatmul.mubr.f32.gmra.mrb[0].mxu0 %v494
        %v4632 = vpop.f32.mrb[0].mxu0
        %v4633 = vadd.f32 %v622, %v4632
        %v4634 = vpop.f32.mrb[0].mxu0
        %v4635 = vadd.f32 %v626, %v4634
        %4636 = vmatprep.mubr.f32.mxu0 0.0
        %4637 = vmatmul.mubr.f32.gmra.mrb[0].mxu0 %v495
        %v4638 = vpop.f32.mrb[0].mxu0
        %v4639 = vadd.f32 %v622, %v4638
        %v4640 = vpop.f32.mrb[0].mxu0
        %v4641 = vadd.f32 %v626, %v4640
        %4642 = vmatprep.mubr.f32.mxu0 0.0
        %4643 = vmatmul.mubr.f32.gmra.mrb[0].mxu0 %v496
        %v4644 = vpop.f32.mrb[0].mxu0
        %v4645 = vadd.f32 %v622, %v4644
        %v4646 = vpop.f32.mrb[0].mxu0
        %v4647 = vadd.f32 %v626, %v4646
        %4648 = vmatprep.mubr.f32.mxu0 0.0
        %4649 = vmatmul.mubr.f32.gmra.mrb[0].mxu0 %v497
        %v4650 = vpop.f32.mrb[0].mxu0
        %v4651 = vadd.f32 %v622, %v4650
        %v4652 = vpop.f32.mrb[0].mxu0
        %v4653 = vadd.f32 %v626, %v4652
        %4654 = vmatprep.mubr.f32.mxu0 0.0
        %4655 = vmatmul.mubr.f32.gmra.mrb[0].mxu0 %v498
        %v4656 = vpop.f32.mrb[0].mxu0
        %v4657 = vadd.f32 %v622, %v4656
        %v4658 = vpop.f32.mrb[0].mxu0
        %v4659 = vadd.f32 %v626, %v4658
        %4660 = vmatprep.mubr.f32.mxu0 0.0
        %4661 = vmatmul.mubr.f32.gmra.mrb[0].mxu0 %v499
        %v4662 = vpop.f32.mrb[0].mxu0
        %v4663 = vadd.f32 %v622, %v4662
        %v4664 = vpop.f32.mrb[0].mxu0
        %v4665 = vadd.f32 %v626, %v4664
        %4666 = vmatprep.mubr.f32.mxu0 0.0
        %4667 = vmatmul.mubr.f32.gmra.mrb[0].mxu0 %v500
        %v4668 = vpop.f32.mrb[0].mxu0
        %v4669 = vadd.f32 %v622, %v4668
        %v4670 = vpop.f32.mrb[0].mxu0
        %v4671 = vadd.f32 %v626, %v4670
        %4672 = vmatprep.mubr.f32.mxu0 0.0
        %4673 = vmatmul.mubr.f32.gmra.mrb[0].mxu0 %v501
        %v4674 = vpop.f32.mrb[0].mxu0
        %v4675 = vadd.f32 %v622, %v4674
        %v4676 = vpop.f32.mrb[0].mxu0
        %v4677 = vadd.f32 %v626, %v4676
        %4678 = vmatprep.mubr.f32.mxu0 0.0
        %4679 = vmatmul.mubr.f32.gmra.mrb[0].mxu0 %v502
        %v4680 = vpop.f32.mrb[0].mxu0
        %v4681 = vadd.f32 %v622, %v4680
        %v4682 = vpop.f32.mrb[0].mxu0
        %v4683 = vadd.f32 %v626, %v4682
        %4684 = vmatprep.mubr.f32.mxu0 0.0
        %4685 = vmatmul.mubr.f32.gmra.mrb[0].mxu0 %v503
        %v4686 = vpop.f32.mrb[0].mxu0
        %v4687 = vadd.f32 %v622, %v4686
        %v4688 = vpop.f32.mrb[0].mxu0
        %v4689 = vadd.f32 %v626, %v4688
        %4690 = vmatprep.mubr.f32.mxu0 0.0
        %4691 = vmatmul.mubr.f32.gmra.mrb[0].mxu0 %v504
        %v4692 = vpop.f32.mrb[0].mxu0
        %v4693 = vadd.f32 %v622, %v4692
        %v4694 = vpop.f32.mrb[0].mxu0
        %v4695 = vadd.f32 %v626, %v4694
        %4696 = vmatprep.mubr.f32.mxu0 0.0
        %4697 = vmatmul.mubr.f32.gmra.mrb[0].mxu0 %v505
        %v4698 = vpop.f32.mrb[0].mxu0
        %v4699 = vadd.f32 %v622, %v4698
        %v4700 = vpop.f32.mrb[0].mxu0
        %v4701 = vadd.f32 %v626, %v4700
        %4702 = vmatprep.mubr.f32.mxu0 0.0
        %4703 = vmatmul.mubr.f32.gmra.mrb[0].mxu0 %v506
        %v4704 = vpop.f32.mrb[0].mxu0
        %v4705 = vadd.f32 %v622, %v4704
        %v4706 = vpop.f32.mrb[0].mxu0
        %v4707 = vadd.f32 %v626, %v4706
        %4708 = vdwg.mxu0
        %v4709 = vmul.f32 %v4507, %v4633
        %v4710 = vmul.f32 %v4508, %v4635
        %v4711 = vmul.f32 %v4509, %v4639
        %v4712 = vmul.f32 %v4510, %v4641
        %v4713 = vmul.f32 %v4511, %v4645
        %v4714 = vmul.f32 %v4512, %v4647
        %v4715 = vmul.f32 %v4513, %v4651
        %v4716 = vmul.f32 %v4514, %v4653
        %v4717 = vmul.f32 %v4515, %v4657
        %v4718 = vmul.f32 %v4516, %v4659
        %v4719 = vmul.f32 %v4517, %v4663
        %v4720 = vmul.f32 %v4518, %v4665
        %v4721 = vmul.f32 %v4519, %v4669
        %v4722 = vmul.f32 %v4520, %v4671
        %v4723 = vmul.f32 %v4521, %v4675
        %v4724 = vmul.f32 %v4522, %v4677
        %v4725 = vmul.f32 %v4523, %v4681
        %v4726 = vmul.f32 %v4524, %v4683
        %v4727 = vmul.f32 %v4525, %v4687
        %v4728 = vmul.f32 %v4526, %v4689
        %v4729 = vmul.f32 %v4527, %v4693
        %v4730 = vmul.f32 %v4528, %v4695
        %v4731 = vmul.f32 %v4529, %v4699
        %v4732 = vmul.f32 %v4530, %v4701
        %v4733 = vmul.f32 %v4531, %v4705
        %v4734 = vmul.f32 %v4532, %v4707
        %v4735 = vadd.f32 %v3404, %v4709
        %v4736 = vadd.f32 %v3405, %v4710
        %v4737 = vadd.f32 %v3406, %v4711
        %v4738 = vadd.f32 %v3407, %v4712
        %v4739 = vadd.f32 %v3408, %v4713
        %v4740 = vadd.f32 %v3409, %v4714
        %v4741 = vadd.f32 %v3410, %v4715
        %v4742 = vadd.f32 %v3411, %v4716
        %v4743 = vadd.f32 %v3412, %v4717
        %v4744 = vadd.f32 %v3413, %v4718
        %v4745 = vadd.f32 %v3414, %v4719
        %v4746 = vadd.f32 %v3415, %v4720
        %v4747 = vadd.f32 %v3416, %v4721
        %v4748 = vadd.f32 %v3417, %v4722
        %v4749 = vadd.f32 %v3418, %v4723
        %v4750 = vadd.f32 %v3419, %v4724
        %v4751 = vadd.f32 %v3420, %v4725
        %v4752 = vadd.f32 %v3421, %v4726
        %v4753 = vadd.f32 %v3422, %v4727
        %v4754 = vadd.f32 %v3423, %v4728
        %v4755 = vadd.f32 %v3424, %v4729
        %v4756 = vadd.f32 %v3425, %v4730
        %v4757 = vadd.f32 %v3426, %v4731
        %v4758 = vadd.f32 %v3427, %v4732
        %v4759 = vadd.f32 %v3428, %v4733
        %v4760 = vadd.f32 %v3429, %v4734
        %4761 = vst [vmem:[%s490] sm:$0xff] %v4735
        %4762 = vst [vmem:[%s490 + $0x8] sm:$0xff] %v4736
        %4763 = vst [vmem:[%s490 + $0x10] sm:$0xff] %v4737
        %4764 = vst [vmem:[%s490 + $0x18] sm:$0xff] %v4738
        %4765 = vst [vmem:[%s490 + $0x20] sm:$0xff] %v4739
        %4766 = vst [vmem:[%s490 + $0x28] sm:$0xff] %v4740
        %4767 = vst [vmem:[%s490 + $0x30] sm:$0xff] %v4741
        %4768 = vst [vmem:[%s490 + $0x38] sm:$0xff] %v4742
        %4769 = vst [vmem:[%s490 + $0x40] sm:$0xff] %v4743
        %4770 = vst [vmem:[%s490 + $0x48] sm:$0xff] %v4744
        %4771 = vst [vmem:[%s490 + $0x50] sm:$0xff] %v4745
        %4772 = vst [vmem:[%s490 + $0x58] sm:$0xff] %v4746
        %4773 = vst [vmem:[%s490 + $0x60] sm:$0xff] %v4747
        %4774 = vst [vmem:[%s490 + $0x68] sm:$0xff] %v4748
        %4775 = vst [vmem:[%s490 + $0x70] sm:$0xff] %v4749
        %4776 = vst [vmem:[%s490 + $0x78] sm:$0xff] %v4750
        %4777 = vst [vmem:[%s490 + $0x80] sm:$0xff] %v4751
        %4778 = vst [vmem:[%s490 + $0x88] sm:$0xff] %v4752
        %4779 = vst [vmem:[%s490 + $0x90] sm:$0xff] %v4753
        %4780 = vst [vmem:[%s490 + $0x98] sm:$0xff] %v4754
        %4781 = vst [vmem:[%s490 + $0xa0] sm:$0xff] %v4755
        %4782 = vst [vmem:[%s490 + $0xa8] sm:$0xff] %v4756
        %4783 = vst [vmem:[%s490 + $0xb0] sm:$0xff] %v4757
        %4784 = vst [vmem:[%s490 + $0xb8] sm:$0xff] %v4758
        %4785 = vst [vmem:[%s490 + $0xc0] sm:$0xff] %v4759
        %4786 = vst [vmem:[%s490 + $0xc8] sm:$0xff] %v4760
        %s4787 = sand.u32 %s239, 1
        %s4788 = scalar_lea.sflag [#allocation4], %s4787
        %s4789 = sand.u32 %s239, 1
        %s4790 = smul.addr %s4789, 208
        %s4791 = scalar_lea.vmem [#allocation17], %s4790
        // Predicated region
        $region93: #{tpu_custom_call.1} parent=55 // pred_check
          %p4792 = pneg %p249
        $region94: #{tpu_custom_call.1} parent=55 // pred_check_branch
          %4794 = sbr.rel (%p4792) target = $region96
        $region95: #{tpu_custom_call.1} parent=55 // pred_region
          %s4795 = smul.u32 13, %s32
          %s4797 = ssub.s32 3328, 3328
          %4798 = vsyncadd %s4788, %s4797
          %s4799 = smul.addr %s4795, 2
          %s4800 = smul.addr %s4799, 128
          %s4801 = scalar_lea.hbm %s9, %s4800
          %s4802 = sshll.u32 %s4791, 4
          %s4803 = int_to_ptr.vmem [resolvable:$true] %s4802
          %4808 = dma.vmem_to_hbm [thread:$0]  %s4803, 3328, %s4801, %s4788, 256, 256, 16
        $region96: #{tpu_custom_call.1} parent=55 // pred_fallthru
          _
      $region56: #{tpu_custom_call.1} parent=5 // pred_fallthru
        _
      %p4809 = scmp.le.s32.totalorder 2, %s27
      // Predicated region
      $region97: #{tpu_custom_call.1} parent=5 // pred_check
        %p4810 = pneg %p4809
      $region98: #{tpu_custom_call.1} parent=5 // pred_check_branch
        %4812 = sbr.rel (%p4810) target = $region100
      $region99: #{tpu_custom_call.1} parent=5 // pred_region
        %s4813 = ssub.s32 %s27, 2
        // Predicated region
        $region101: #{tpu_custom_call.1} parent=99 // pred_check
          %p4814 = pneg %p255
        $region102: #{tpu_custom_call.1} parent=99 // pred_check_branch
          %4816 = sbr.rel (%p4814) target = $region104
        $region103: #{tpu_custom_call.1} parent=99 // pred_region
          %s4817 = sand.u32 %s240, 1
          %s4818 = scalar_lea.sflag [#allocation4], %s4817
          %s4819 = sand.u32 %s240, 1
          %s4820 = smul.addr %s4819, 208
          %s4821 = scalar_lea.vmem [#allocation17], %s4820
          %4822 = dma.done %s4818, 3328
        $region104: #{tpu_custom_call.1} parent=99 // pred_fallthru
          _
      $region100: #{tpu_custom_call.1} parent=5 // pred_fallthru
        _
    $region6: #{tpu_custom_call.1} parent=1 // loop_footer
      %s31 = sadd.s32 1, %s27
    $region7: #{tpu_custom_call.1} parent=1 // loop_footer_branch
      %26 = sbr.rel target = $region3
    $region8: #{tpu_custom_call.1} parent=1 // loop_exit
      _
    %4823 = vsyncpa [#allocation3], 1
    %s4824 = scalar_lea.sflag [#allocation3], 1
    %4825 = vsyncpa %s4824, 1
    %4826 = vsyncpa [#allocation6], 1
    %s4827 = scalar_lea.sflag [#allocation6], 1
    %4828 = vsyncpa %s4827, 1
    %4829 = vsyncpa [#allocation9], 1
    %4830 = vsyncpa [#allocation12], 1
    %4831 = vsyncpa [#allocation15], 1
    %4832 = vsyncpa [#allocation4], 1
    %s4833 = scalar_lea.sflag [#allocation4], 1
    %4834 = vsyncpa %s4833, 1

</llo_original>
